<compile_context>
chip_gen: v6e
topology: v6e:2x2x1
jax: 0.10.0
libtpu: 0.0.40
codegen_flags: <defaults>
</compile_context>

<pallas_src>
import jax
import jax.numpy as jnp
from jax import lax
from jax.experimental import pallas as pl
from jax.experimental.pallas import tpu as pltpu

# ---------------- small, module-consistent config ----------------
BATCH = 2
SEN_NUM = 8
SEN_LEN = 12
EMBED_DIM = 16
CNN_DIM = 16
QUE_DIM = 8
KEY_DIM = 8
DEEP = 16
NUM_CLASS = 4
RNN_DIM = 16            # must equal CNN_DIM (residual add in the reference forward)
RNN_LAYERS = 2
HID2 = RNN_DIM * 2      # 32 = bidirectional width = cnn_dim * 2
G8 = 8 * RNN_DIM        # 128 = fused both-direction gate width (one full vreg row)
EPS_LN = 1e-5

VMEM = pltpu.MemorySpace.VMEM

# ---------------- packed weight slab layout (rows x 128 lanes, f32) ----------------
# Every tensor starts on an 8-row (sublane-tile) boundary and at lane 0.
OFF_WIH   = 0                                     # (layers*2H, 8H)   rows   0:64
OFF_WHH   = OFF_WIH + RNN_LAYERS * HID2           # (layers*2H, 8H)   rows  64:128
OFF_LB    = OFF_WHH + RNN_LAYERS * HID2           # 1 row per layer   rows 128,136
OFF_CNN_W = OFF_LB + RNN_LAYERS * 8               # (L*E, 2C)         rows 144:336
OFF_CNN_B = OFF_CNN_W + SEN_LEN * EMBED_DIM       # (1, 2C)           row  336
OFF_WQ    = OFF_CNN_B + 8                         # (QUE_DIM, DEEP)   rows 344:352
OFF_BQ    = OFF_WQ + 8                            # (1, DEEP)         row  352
OFF_WK    = OFF_BQ + 8                            # (KEY_DIM, DEEP)   rows 360:368
OFF_BK    = OFF_WK + 8                            # (1, DEEP)         row  368
OFF_WV    = OFF_BK + 8                            # (2H, 2H)          rows 376:408
OFF_BV    = OFF_WV + HID2                         # (1, 2H)           row  408
OFF_WMA   = OFF_BV + 8                            # (2H, 2H)          rows 416:448
OFF_WMB   = OFF_WMA + HID2                        # (KEY_DIM, 2H)     rows 448:456
OFF_BM    = OFF_WMB + 8                           # (1, 2H)           row  456
OFF_WO    = OFF_BM + 8                            # (2H, NUM_CLASS)   rows 464:496
OFF_BO    = OFF_WO + HID2                         # (1, NUM_CLASS)    row  496
SLAB_ROWS = OFF_BO + 8                            # 504 rows total (~252 KiB)


# ---------------- the single fused kernel ----------------
def fused_forward_kernel(x_ref, w_ref, sm_ref, sms_ref, mask_ref, out_ref):
    f32 = jnp.float32
    bf16 = jnp.bfloat16
    N = BATCH * SEN_NUM

    def wslice(row, nrows, ncols):
        # static slice of the packed weight slab (8-aligned rows, lane-0-aligned cols)
        return w_ref[row:row + nrows, 0:ncols]

    # ===== Stage 1: Conv1d(k=2) + the two AvgPools, fully folded into one matmul =====
    # Pooling and the conv taps are linear in x, so the whole stage is x2d @ cnn_M + [b|b]
    # with cnn_M precomputed in init_params.  x2d is lane-dense (N, L*E): no padded x.
    x2d = x_ref[...]                                                       # (N, L*E)
    cnn_m = wslice(OFF_CNN_W, SEN_LEN * EMBED_DIM, HID2).astype(bf16)      # (L*E, 2C)
    cnn_b = wslice(OFF_CNN_B, 1, HID2)                                     # (1, 2C) f32
    cnn_feat = jnp.dot(x2d.astype(bf16), cnn_m,
                       preferred_element_type=f32) + cnn_b                 # (N, 2H)
    cnn_bm = cnn_feat.reshape(BATCH, SEN_NUM, HID2)                        # (B, S, 2H)

    # ===== Stage 2: 2-layer bidirectional LSTM (fully unrolled, fused directions) =====
    lane_g = lax.broadcasted_iota(jnp.int32, (BATCH, G8), 1)
    fwd_gate_mask = (lane_g % HID2) < RNN_DIM         # per-gate layout [gate_fwd(16)|gate_rev(16)]
    lane_h = lax.broadcasted_iota(jnp.int32, (BATCH, SEN_NUM, HID2), 2)
    fwd_half_mask = lane_h < RNN_DIM

    layer_in = cnn_bm
    for layer in range(RNN_LAYERS):                   # static unroll (sequential dependency)
        wih = wslice(OFF_WIH + layer * HID2, HID2, G8).astype(bf16)   # (2H, 8H) bf16
        whh = wslice(OFF_WHH + layer * HID2, HID2, G8).astype(bf16)   # (2H, 8H) bf16, block-diag
        bias = wslice(OFF_LB + 8 * layer, 1, G8)                      # (1, 8H)  f32 (b_ih+b_hh)

        # Hoisted x-projection: one (S*B,2H)@(2H,8H) bf16 matmul per layer, off the recurrence.
        gx = jnp.dot(layer_in.reshape(N, HID2).astype(bf16), wih,
                     preferred_element_type=f32) + bias
        gx = gx.reshape(BATCH, SEN_NUM, G8)

        h = jnp.zeros((BATCH, HID2), f32)             # [h_fwd | h_rev]
        c = jnp.zeros((BATCH, HID2), f32)             # [c_fwd | c_rev]
        hist = []
        for t in range(SEN_NUM):                      # static unroll of the S=8 time loop
            # fwd half consumes time t, rev half consumes time S-1-t (static slices + VPU select)
            gxt = jnp.where(fwd_gate_mask, gx[:, t, :], gx[:, SEN_NUM - 1 - t, :])
            # single-pass bf16 MXU push; f32 accumulate; gate math stays f32 (v5e-safe)
            gates = gxt + jnp.dot(h.astype(bf16), whh, preferred_element_type=f32)   # (B,128)
            sg = jax.nn.sigmoid(gates)                # one full-vreg EUP pass
            tg = jnp.tanh(gates)                      # one full-vreg EUP pass
            i_g = sg[:, 0 * HID2:1 * HID2]            # PyTorch gate order i,f,g,o
            f_g = sg[:, 1 * HID2:2 * HID2]
            g_g = tg[:, 2 * HID2:3 * HID2]
            o_g = sg[:, 3 * HID2:4 * HID2]
            c = f_g * c + i_g * g_g
            h = o_g * jnp.tanh(c)                     # third (and last) EUP op of the step
            hist.append(h)
        # Assemble the bidirectional output once per layer (position p: fwd from step p,
        # rev from step S-1-p); no per-step dynamic / masked stores.
        fwd_hist = jnp.stack(hist, axis=1)            # (B, S, 2H)
        rev_hist = jnp.stack(hist[::-1], axis=1)      # (B, S, 2H)
        layer_in = jnp.where(fwd_half_mask, fwd_hist, rev_hist)
        # inter-layer dropout is identity in eval mode

    # Residual with CNN features, then torch.layer_norm over (batch, 2H) per time step
    # (no affine, eps=1e-5, biased variance) — all in f32.
    y = layer_in + cnn_bm                             # (B, S, 2H)
    mean = jnp.mean(y, axis=(0, 2), keepdims=True)    # (1, S, 1)
    var = jnp.mean((y - mean) ** 2, axis=(0, 2), keepdims=True)
    temp = (y - mean) * lax.rsqrt(var + EPS_LN)

    # ===== Stage 3: query/key/value projections + attention + classifier =====
    wq = wslice(OFF_WQ, QUE_DIM, DEEP).astype(bf16);   bq = wslice(OFF_BQ, 1, DEEP)
    wk = wslice(OFF_WK, KEY_DIM, DEEP).astype(bf16);   bk = wslice(OFF_BK, 1, DEEP)
    wv = wslice(OFF_WV, HID2, HID2).astype(bf16);      bv = wslice(OFF_BV, 1, HID2)
    wma = wslice(OFF_WMA, HID2, HID2).astype(bf16)
    wmb = wslice(OFF_WMB, KEY_DIM, HID2).astype(bf16); bm = wslice(OFF_BM, 1, HID2)
    wo = wslice(OFF_WO, HID2, NUM_CLASS).astype(bf16); bo = wslice(OFF_BO, 1, NUM_CLASS)

    sms_flat = sms_ref[...].reshape(N, KEY_DIM).astype(bf16)
    temp_flat = temp.reshape(N, HID2)

    q = jnp.tanh(jnp.dot(sm_ref[...].astype(bf16), wq,
                         preferred_element_type=f32) + bq)                       # (B, D)
    k = jnp.tanh(jnp.dot(sms_flat, wk, preferred_element_type=f32) + bk)         # (N, D)
    k = k.reshape(BATCH, SEN_NUM, DEEP)
    v_pre = jnp.dot(temp_flat.astype(bf16), wv, preferred_element_type=f32) + bv  # (N, 2H)
    # rnn_mlp(cat([v_pre, sms])) without the 40-lane concat: weight split into two matmuls
    v = (jnp.dot(v_pre.astype(bf16), wma, preferred_element_type=f32)
         + jnp.dot(sms_flat, wmb, preferred_element_type=f32) + bm)              # (N, 2H)
    v = v.reshape(BATCH, SEN_NUM, HID2)

    logits = jnp.sum(q[:, None, :] * k, axis=-1) + mask_ref[...]                 # (B, S)
    m = jnp.max(logits, axis=-1, keepdims=True)
    e = jnp.exp(logits - m)
    w = e * pl.reciprocal(jnp.sum(e, axis=-1, keepdims=True), approx=True)
    result = jnp.sum(w[:, :, None] * v, axis=1)                                  # (B, 2H)

    out = jnp.dot(result.astype(bf16), wo, preferred_element_type=f32) + bo      # (B, C)
    mo = jnp.max(out, axis=-1, keepdims=True)
    lse = jnp.log(jnp.sum(jnp.exp(out - mo), axis=-1, keepdims=True))
    out_ref[...] = out - mo - lse                                                # log_softmax


# ---------------- parameter init: PyTorch-style bounds, everything pre-fused into one slab ----------------
def init_params(key):
    ks = jax.random.split(key, 16)
    f32 = jnp.float32

    def u(k, shape, bound):
        return jax.random.uniform(k, shape, f32, -bound, bound)

    def lin(k, in_dim, out_dim):
        bound = 1.0 / (in_dim ** 0.5)
        kw, kb = jax.random.split(k)
        return u(kw, (out_dim, in_dim), bound), u(kb, (out_dim,), bound)

    # Conv1d(E, C, k=2) + AvgPool(L-1) / AvgPool(L-2 on cnn_re1) folded into one (L*E, 2C) weight.
    bound_c = 1.0 / ((EMBED_DIM * 2) ** 0.5)
    conv_w = u(ks[0], (CNN_DIM, EMBED_DIM, 2), bound_c)     # (C, E, 2)
    conv_b = u(ks[1], (CNN_DIM,), bound_c)
    W0t, W1t = conv_w[:, :, 0].T, conv_w[:, :, 1].T         # (E, C)
    idx = jnp.arange(SEN_LEN)
    a1 = jnp.where(idx <= SEN_LEN - 2, 1.0 / (SEN_LEN - 1), 0.0).astype(f32)   # tap-0, pool L-1
    c1 = jnp.where(idx >= 1, 1.0 / (SEN_LEN - 1), 0.0).astype(f32)             # tap-1, pool L-1
    a2 = jnp.where(idx <= SEN_LEN - 3, 1.0 / (SEN_LEN - 2), 0.0).astype(f32)   # tap-0, pool L-2 quirk
    c2 = jnp.where((idx >= 1) & (idx <= SEN_LEN - 2), 1.0 / (SEN_LEN - 2), 0.0).astype(f32)
    M1 = a1[:, None, None] * W0t[None] + c1[:, None, None] * W1t[None]         # (L, E, C)
    M2 = a2[:, None, None] * W0t[None] + c2[:, None, None] * W1t[None]         # (L, E, C)
    cnn_M = jnp.concatenate([M1, M2], axis=-1).reshape(SEN_LEN * EMBED_DIM, HID2)   # (L*E, 2C)
    cnn_B = jnp.concatenate([conv_b, conv_b])[None, :]                               # (1, 2C)
    # cnn2 is a dead branch in the reference forward (its output never reaches the result).

    wq, bq = lin(ks[2], QUE_DIM, DEEP)
    wk, bk = lin(ks[3], KEY_DIM, DEEP)
    wv, bv = lin(ks[4], HID2, HID2)
    wm, bm = lin(ks[5], HID2 + KEY_DIM, HID2)
    wo, bo = lin(ks[6], HID2, NUM_CLASS)

    # LSTM: per-layer fused weights, gate-interleaved columns [i_f,i_r,f_f,f_r,g_f,g_r,o_f,o_r] (16 each)
    H = RNN_DIM
    bound_l = 1.0 / (H ** 0.5)
    wih_layers, whh_layers, b_layers = [], [], []
    kidx = 7
    for _layer in range(RNN_LAYERS):
        w_ih_d, w_hh_d, b_d = [], [], []
        for _d in range(2):
            k1, k2, k3, k4 = jax.random.split(ks[kidx], 4)
            kidx += 1
            w_ih_d.append(u(k1, (4 * H, HID2), bound_l))
            w_hh_d.append(u(k2, (4 * H, H), bound_l))
            b_d.append(u(k3, (4 * H,), bound_l) + u(k4, (4 * H,), bound_l))   # b_ih + b_hh
        wf = w_ih_d[0].T.reshape(HID2, 4, H)
        wr = w_ih_d[1].T.reshape(HID2, 4, H)
        wih_layers.append(jnp.stack([wf, wr], axis=2).reshape(HID2, G8))      # (2H, 8H)
        blk = jnp.zeros((HID2, 4, 2, H), f32)                                 # block-diagonal W_hh
        blk = blk.at[0:H, :, 0, :].set(w_hh_d[0].T.reshape(H, 4, H))
        blk = blk.at[H:HID2, :, 1, :].set(w_hh_d[1].T.reshape(H, 4, H))
        whh_layers.append(blk.reshape(HID2, G8))
        bf_ = b_d[0].reshape(4, H)
        br_ = b_d[1].reshape(4, H)
        b_layers.append(jnp.stack([bf_, br_], axis=1).reshape(1, G8))         # (1, 8H)

    # Pack everything into ONE 128-lane f32 slab: one prologue DMA instead of ~20.
    slab = jnp.zeros((SLAB_ROWS, 128), f32)

    def place(s, row, arr):
        arr = jnp.asarray(arr, f32)
        return s.at[row:row + arr.shape[0], 0:arr.shape[1]].set(arr)

    for l in range(RNN_LAYERS):
        slab = place(slab, OFF_WIH + l * HID2, wih_layers[l])
        slab = place(slab, OFF_WHH + l * HID2, whh_layers[l])
        slab = place(slab, OFF_LB + l * 8, b_layers[l])
    slab = place(slab, OFF_CNN_W, cnn_M)
    slab = place(slab, OFF_CNN_B, cnn_B)
    slab = place(slab, OFF_WQ, wq.T);  slab = place(slab, OFF_BQ, bq[None, :])
    slab = place(slab, OFF_WK, wk.T);  slab = place(slab, OFF_BK, bk[None, :])
    slab = place(slab, OFF_WV, wv.T);  slab = place(slab, OFF_BV, bv[None, :])
    slab = place(slab, OFF_WMA, wm[:, :HID2].T)                 # rnn_mlp split (value half)
    slab = place(slab, OFF_WMB, wm[:, HID2:].T)                 # rnn_mlp split (sentence_ms half)
    slab = place(slab, OFF_BM, bm[None, :])
    slab = place(slab, OFF_WO, wo.T);  slab = place(slab, OFF_BO, bo[None, :])
    return {'slab': slab}


# ---------------- forward wrapper: one pallas_call, 5 inputs, everything resident in VMEM ----------------
def forward(params, inputs, sample_m, sentence_ms, sen_mask):
    B, S, L, E = inputs.shape
    x2d = inputs.astype(jnp.float32).reshape(B * S, L * E)   # lane-dense 2D layout (free reshape)
    args = (x2d, params['slab'],
            sample_m.astype(jnp.float32),
            sentence_ms.astype(jnp.float32),
            sen_mask.astype(jnp.float32))
    return pl.pallas_call(
        fused_forward_kernel,
        out_shape=jax.ShapeDtypeStruct((B, NUM_CLASS), jnp.float32),
        in_specs=[pl.BlockSpec(memory_space=VMEM)] * len(args),
        out_specs=pl.BlockSpec(memory_space=VMEM),
    )(*args)


if __name__ == "__main__":
    key = jax.random.PRNGKey(0)
    k_in, k_sm, k_sms = jax.random.split(key, 3)
    inputs = jax.random.normal(k_in, (BATCH, SEN_NUM, SEN_LEN, EMBED_DIM), jnp.float32)
    sample_m = jax.random.normal(k_sm, (BATCH, QUE_DIM), jnp.float32)
    sentence_ms = jax.random.normal(k_sms, (BATCH, SEN_NUM, KEY_DIM), jnp.float32)
    # additive mask: 0 for valid sentences, -1e9 for padded ones (batch 1 has 2 padded)
    valid = jnp.array([SEN_NUM, SEN_NUM - 2])
    sen_mask = jnp.where(jnp.arange(SEN_NUM)[None, :] < valid[:, None], 0.0, -1e9).astype(jnp.float32)

    params = init_params(jax.random.PRNGKey(42))
    out = jax.jit(forward)(params, inputs, sample_m, sentence_ms, sen_mask)
    out = jax.block_until_ready(out)
    assert out.shape == (BATCH, NUM_CLASS)
    assert bool(jnp.all(jnp.isfinite(out)))
    print("KERNEL_OK")
</pallas_src>

<mosaic_0001>
module attributes {stable_mosaic.version = 11 : i64} {
  func.func @fused_forward_kernel(%arg0: memref<16x192xf32, #tpu.memory_space<vmem>>, %arg1: memref<504x128xf32, #tpu.memory_space<vmem>>, %arg2: memref<2x8xf32, #tpu.memory_space<vmem>>, %arg3: memref<2x8x8xf32, #tpu.memory_space<vmem>>, %arg4: memref<2x8xf32, #tpu.memory_space<vmem>>, %arg5: memref<2x4xf32, #tpu.memory_space<vmem>>) attributes {dimension_semantics = [], scalar_prefetch = 0 : i64, scratch_operands = 0 : i64, tpu.core_type = #tpu.core_type<tc>} {
    %c0 = arith.constant 0 : index
    %c0_0 = arith.constant 0 : index
    %0 = vector.load %arg0[%c0, %c0_0] : memref<16x192xf32, #tpu.memory_space<vmem>>, vector<16x192xf32>
    %c144 = arith.constant 144 : index
    %c0_1 = arith.constant 0 : index
    %1 = vector.load %arg1[%c144, %c0_1] : memref<504x128xf32, #tpu.memory_space<vmem>>, vector<192x32xf32>
    %2 = arith.truncf %1 : vector<192x32xf32> to vector<192x32xbf16>
    %c336 = arith.constant 336 : index
    %c0_2 = arith.constant 0 : index
    %3 = vector.load %arg1[%c336, %c0_2] : memref<504x128xf32, #tpu.memory_space<vmem>>, vector<1x32xf32>
    %4 = arith.truncf %0 : vector<16x192xf32> to vector<16x192xbf16>
    %cst = arith.constant dense<0.000000e+00> : vector<16x32xf32>
    %5 = tpu.matmul %4, %2, %cst {dimension_numbers = #tpu.dot_dimension_numbers<[1], [0], [0], [1], [0, 0, 1, 1], [], []>} : vector<16x192xbf16>, vector<192x32xbf16>, vector<16x32xf32> -> vector<16x32xf32>
    %6 = vector.broadcast %3 : vector<1x32xf32> to vector<16x32xf32>
    %7 = arith.addf %5, %6 : vector<16x32xf32>
    %8 = vector.shape_cast %7 : vector<16x32xf32> to vector<2x8x32xf32>
    %9 = tpu.iota {dimensions = array<i32: 1>} : vector<2x128xi32>
    %c32_i32 = arith.constant 32 : i32
    %c0_i32 = arith.constant 0 : i32
    %10 = arith.cmpi eq, %c32_i32, %c0_i32 : i32
    %c1_i32 = arith.constant 1 : i32
    %11 = arith.select %10, %c1_i32, %c32_i32 : i32
    %12 = vector.broadcast %11 : i32 to vector<2x128xi32>
    %13 = arith.remsi %9, %12 : vector<2x128xi32>
    %c0_i32_3 = arith.constant 0 : i32
    %14 = vector.broadcast %c0_i32_3 : i32 to vector<2x128xi32>
    %15 = arith.cmpi ne, %13, %14 : vector<2x128xi32>
    %c0_i32_4 = arith.constant 0 : i32
    %16 = vector.broadcast %c0_i32_4 : i32 to vector<2x128xi32>
    %17 = arith.cmpi slt, %13, %16 : vector<2x128xi32>
    %c0_i32_5 = arith.constant 0 : i32
    %18 = arith.cmpi slt, %11, %c0_i32_5 : i32
    %19 = vector.broadcast %18 : i1 to vector<2x128xi1>
    %20 = vector.broadcast %19 : vector<2x128xi1> to vector<2x128xi1>
    %21 = arith.xori %17, %20 : vector<2x128xi1>
    %22 = arith.andi %21, %15 : vector<2x128xi1>
    %23 = vector.broadcast %11 : i32 to vector<2x128xi32>
    %24 = arith.addi %13, %23 : vector<2x128xi32>
    %25 = arith.select %22, %24, %13 : vector<2x128xi1>, vector<2x128xi32>
    %c16_i32 = arith.constant 16 : i32
    %26 = vector.broadcast %c16_i32 : i32 to vector<2x128xi32>
    %27 = arith.cmpi slt, %25, %26 : vector<2x128xi32>
    %28 = tpu.iota {dimensions = array<i32: 2>} : vector<2x8x32xi32>
    %c16_i32_6 = arith.constant 16 : i32
    %29 = vector.broadcast %c16_i32_6 : i32 to vector<2x8x32xi32>
    %30 = arith.cmpi slt, %28, %29 : vector<2x8x32xi32>
    %c0_7 = arith.constant 0 : index
    %c0_8 = arith.constant 0 : index
    %31 = vector.load %arg1[%c0_7, %c0_8] : memref<504x128xf32, #tpu.memory_space<vmem>>, vector<32x128xf32>
    %32 = arith.truncf %31 : vector<32x128xf32> to vector<32x128xbf16>
    %c64 = arith.constant 64 : index
    %c0_9 = arith.constant 0 : index
    %33 = vector.load %arg1[%c64, %c0_9] : memref<504x128xf32, #tpu.memory_space<vmem>>, vector<32x128xf32>
    %34 = arith.truncf %33 : vector<32x128xf32> to vector<32x128xbf16>
    %c128 = arith.constant 128 : index
    %c0_10 = arith.constant 0 : index
    %35 = vector.load %arg1[%c128, %c0_10] : memref<504x128xf32, #tpu.memory_space<vmem>>, vector<1x128xf32>
    %36 = vector.shape_cast %8 : vector<2x8x32xf32> to vector<16x32xf32>
    %37 = arith.truncf %36 : vector<16x32xf32> to vector<16x32xbf16>
    %cst_11 = arith.constant dense<0.000000e+00> : vector<16x128xf32>
    %38 = tpu.matmul %37, %32, %cst_11 {dimension_numbers = #tpu.dot_dimension_numbers<[1], [0], [0], [1], [0, 0, 1, 1], [], []>} : vector<16x32xbf16>, vector<32x128xbf16>, vector<16x128xf32> -> vector<16x128xf32>
    %39 = vector.broadcast %35 : vector<1x128xf32> to vector<16x128xf32>
    %40 = arith.addf %38, %39 : vector<16x128xf32>
    %41 = vector.shape_cast %40 : vector<16x128xf32> to vector<2x8x128xf32>
    %cst_12 = arith.constant 0.000000e+00 : f32
    %42 = vector.broadcast %cst_12 : f32 to vector<2x32xf32>
    %cst_13 = arith.constant 0.000000e+00 : f32
    %43 = vector.broadcast %cst_13 : f32 to vector<2x32xf32>
    %44 = vector.extract_strided_slice %41 {offsets = [0, 0, 0], sizes = [2, 1, 128], strides = [1, 1, 1]} : vector<2x8x128xf32> to vector<2x1x128xf32>
    %45 = vector.shape_cast %44 : vector<2x1x128xf32> to vector<2x128xf32>
    %46 = vector.extract_strided_slice %41 {offsets = [0, 7, 0], sizes = [2, 1, 128], strides = [1, 1, 1]} : vector<2x8x128xf32> to vector<2x1x128xf32>
    %47 = vector.shape_cast %46 : vector<2x1x128xf32> to vector<2x128xf32>
    %48 = arith.select %27, %45, %47 : vector<2x128xi1>, vector<2x128xf32>
    %49 = arith.truncf %42 : vector<2x32xf32> to vector<2x32xbf16>
    %cst_14 = arith.constant dense<0.000000e+00> : vector<2x128xf32>
    %50 = tpu.matmul %49, %34, %cst_14 {dimension_numbers = #tpu.dot_dimension_numbers<[1], [0], [0], [1], [0, 0, 1, 1], [], []>} : vector<2x32xbf16>, vector<32x128xbf16>, vector<2x128xf32> -> vector<2x128xf32>
    %51 = arith.addf %48, %50 : vector<2x128xf32>
    %52 = arith.negf %51 : vector<2x128xf32>
    %53 = math.exp %52 : vector<2x128xf32>
    %cst_15 = arith.constant 1.000000e+00 : f32
    %54 = vector.broadcast %cst_15 : f32 to vector<2x128xf32>
    %55 = arith.addf %54, %53 : vector<2x128xf32>
    %56 = arith.divf %54, %55 : vector<2x128xf32>
    %57 = math.tanh %51 : vector<2x128xf32>
    %58 = vector.extract_strided_slice %56 {offsets = [0, 0], sizes = [2, 32], strides = [1, 1]} : vector<2x128xf32> to vector<2x32xf32>
    %59 = vector.extract_strided_slice %56 {offsets = [0, 32], sizes = [2, 32], strides = [1, 1]} : vector<2x128xf32> to vector<2x32xf32>
    %60 = vector.extract_strided_slice %57 {offsets = [0, 64], sizes = [2, 32], strides = [1, 1]} : vector<2x128xf32> to vector<2x32xf32>
    %61 = vector.extract_strided_slice %56 {offsets = [0, 96], sizes = [2, 32], strides = [1, 1]} : vector<2x128xf32> to vector<2x32xf32>
    %62 = arith.mulf %59, %43 : vector<2x32xf32>
    %63 = arith.mulf %58, %60 : vector<2x32xf32>
    %64 = arith.addf %62, %63 : vector<2x32xf32>
    %65 = math.tanh %64 : vector<2x32xf32>
    %66 = arith.mulf %61, %65 : vector<2x32xf32>
    %67 = vector.extract_strided_slice %41 {offsets = [0, 1, 0], sizes = [2, 1, 128], strides = [1, 1, 1]} : vector<2x8x128xf32> to vector<2x1x128xf32>
    %68 = vector.shape_cast %67 : vector<2x1x128xf32> to vector<2x128xf32>
    %69 = vector.extract_strided_slice %41 {offsets = [0, 6, 0], sizes = [2, 1, 128], strides = [1, 1, 1]} : vector<2x8x128xf32> to vector<2x1x128xf32>
    %70 = vector.shape_cast %69 : vector<2x1x128xf32> to vector<2x128xf32>
    %71 = arith.select %27, %68, %70 : vector<2x128xi1>, vector<2x128xf32>
    %72 = arith.truncf %66 : vector<2x32xf32> to vector<2x32xbf16>
    %cst_16 = arith.constant dense<0.000000e+00> : vector<2x128xf32>
    %73 = tpu.matmul %72, %34, %cst_16 {dimension_numbers = #tpu.dot_dimension_numbers<[1], [0], [0], [1], [0, 0, 1, 1], [], []>} : vector<2x32xbf16>, vector<32x128xbf16>, vector<2x128xf32> -> vector<2x128xf32>
    %74 = arith.addf %71, %73 : vector<2x128xf32>
    %75 = arith.negf %74 : vector<2x128xf32>
    %76 = math.exp %75 : vector<2x128xf32>
    %cst_17 = arith.constant 1.000000e+00 : f32
    %77 = vector.broadcast %cst_17 : f32 to vector<2x128xf32>
    %78 = arith.addf %77, %76 : vector<2x128xf32>
    %79 = arith.divf %77, %78 : vector<2x128xf32>
    %80 = math.tanh %74 : vector<2x128xf32>
    %81 = vector.extract_strided_slice %79 {offsets = [0, 0], sizes = [2, 32], strides = [1, 1]} : vector<2x128xf32> to vector<2x32xf32>
    %82 = vector.extract_strided_slice %79 {offsets = [0, 32], sizes = [2, 32], strides = [1, 1]} : vector<2x128xf32> to vector<2x32xf32>
    %83 = vector.extract_strided_slice %80 {offsets = [0, 64], sizes = [2, 32], strides = [1, 1]} : vector<2x128xf32> to vector<2x32xf32>
    %84 = vector.extract_strided_slice %79 {offsets = [0, 96], sizes = [2, 32], strides = [1, 1]} : vector<2x128xf32> to vector<2x32xf32>
    %85 = arith.mulf %82, %64 : vector<2x32xf32>
    %86 = arith.mulf %81, %83 : vector<2x32xf32>
    %87 = arith.addf %85, %86 : vector<2x32xf32>
    %88 = math.tanh %87 : vector<2x32xf32>
    %89 = arith.mulf %84, %88 : vector<2x32xf32>
    %90 = vector.extract_strided_slice %41 {offsets = [0, 2, 0], sizes = [2, 1, 128], strides = [1, 1, 1]} : vector<2x8x128xf32> to vector<2x1x128xf32>
    %91 = vector.shape_cast %90 : vector<2x1x128xf32> to vector<2x128xf32>
    %92 = vector.extract_strided_slice %41 {offsets = [0, 5, 0], sizes = [2, 1, 128], strides = [1, 1, 1]} : vector<2x8x128xf32> to vector<2x1x128xf32>
    %93 = vector.shape_cast %92 : vector<2x1x128xf32> to vector<2x128xf32>
    %94 = arith.select %27, %91, %93 : vector<2x128xi1>, vector<2x128xf32>
    %95 = arith.truncf %89 : vector<2x32xf32> to vector<2x32xbf16>
    %cst_18 = arith.constant dense<0.000000e+00> : vector<2x128xf32>
    %96 = tpu.matmul %95, %34, %cst_18 {dimension_numbers = #tpu.dot_dimension_numbers<[1], [0], [0], [1], [0, 0, 1, 1], [], []>} : vector<2x32xbf16>, vector<32x128xbf16>, vector<2x128xf32> -> vector<2x128xf32>
    %97 = arith.addf %94, %96 : vector<2x128xf32>
    %98 = arith.negf %97 : vector<2x128xf32>
    %99 = math.exp %98 : vector<2x128xf32>
    %cst_19 = arith.constant 1.000000e+00 : f32
    %100 = vector.broadcast %cst_19 : f32 to vector<2x128xf32>
    %101 = arith.addf %100, %99 : vector<2x128xf32>
    %102 = arith.divf %100, %101 : vector<2x128xf32>
    %103 = math.tanh %97 : vector<2x128xf32>
    %104 = vector.extract_strided_slice %102 {offsets = [0, 0], sizes = [2, 32], strides = [1, 1]} : vector<2x128xf32> to vector<2x32xf32>
    %105 = vector.extract_strided_slice %102 {offsets = [0, 32], sizes = [2, 32], strides = [1, 1]} : vector<2x128xf32> to vector<2x32xf32>
    %106 = vector.extract_strided_slice %103 {offsets = [0, 64], sizes = [2, 32], strides = [1, 1]} : vector<2x128xf32> to vector<2x32xf32>
    %107 = vector.extract_strided_slice %102 {offsets = [0, 96], sizes = [2, 32], strides = [1, 1]} : vector<2x128xf32> to vector<2x32xf32>
    %108 = arith.mulf %105, %87 : vector<2x32xf32>
    %109 = arith.mulf %104, %106 : vector<2x32xf32>
    %110 = arith.addf %108, %109 : vector<2x32xf32>
    %111 = math.tanh %110 : vector<2x32xf32>
    %112 = arith.mulf %107, %111 : vector<2x32xf32>
    %113 = vector.extract_strided_slice %41 {offsets = [0, 3, 0], sizes = [2, 1, 128], strides = [1, 1, 1]} : vector<2x8x128xf32> to vector<2x1x128xf32>
    %114 = vector.shape_cast %113 : vector<2x1x128xf32> to vector<2x128xf32>
    %115 = vector.extract_strided_slice %41 {offsets = [0, 4, 0], sizes = [2, 1, 128], strides = [1, 1, 1]} : vector<2x8x128xf32> to vector<2x1x128xf32>
    %116 = vector.shape_cast %115 : vector<2x1x128xf32> to vector<2x128xf32>
    %117 = arith.select %27, %114, %116 : vector<2x128xi1>, vector<2x128xf32>
    %118 = arith.truncf %112 : vector<2x32xf32> to vector<2x32xbf16>
    %cst_20 = arith.constant dense<0.000000e+00> : vector<2x128xf32>
    %119 = tpu.matmul %118, %34, %cst_20 {dimension_numbers = #tpu.dot_dimension_numbers<[1], [0], [0], [1], [0, 0, 1, 1], [], []>} : vector<2x32xbf16>, vector<32x128xbf16>, vector<2x128xf32> -> vector<2x128xf32>
    %120 = arith.addf %117, %119 : vector<2x128xf32>
    %121 = arith.negf %120 : vector<2x128xf32>
    %122 = math.exp %121 : vector<2x128xf32>
    %cst_21 = arith.constant 1.000000e+00 : f32
    %123 = vector.broadcast %cst_21 : f32 to vector<2x128xf32>
    %124 = arith.addf %123, %122 : vector<2x128xf32>
    %125 = arith.divf %123, %124 : vector<2x128xf32>
    %126 = math.tanh %120 : vector<2x128xf32>
    %127 = vector.extract_strided_slice %125 {offsets = [0, 0], sizes = [2, 32], strides = [1, 1]} : vector<2x128xf32> to vector<2x32xf32>
    %128 = vector.extract_strided_slice %125 {offsets = [0, 32], sizes = [2, 32], strides = [1, 1]} : vector<2x128xf32> to vector<2x32xf32>
    %129 = vector.extract_strided_slice %126 {offsets = [0, 64], sizes = [2, 32], strides = [1, 1]} : vector<2x128xf32> to vector<2x32xf32>
    %130 = vector.extract_strided_slice %125 {offsets = [0, 96], sizes = [2, 32], strides = [1, 1]} : vector<2x128xf32> to vector<2x32xf32>
    %131 = arith.mulf %128, %110 : vector<2x32xf32>
    %132 = arith.mulf %127, %129 : vector<2x32xf32>
    %133 = arith.addf %131, %132 : vector<2x32xf32>
    %134 = math.tanh %133 : vector<2x32xf32>
    %135 = arith.mulf %130, %134 : vector<2x32xf32>
    %136 = vector.extract_strided_slice %41 {offsets = [0, 4, 0], sizes = [2, 1, 128], strides = [1, 1, 1]} : vector<2x8x128xf32> to vector<2x1x128xf32>
    %137 = vector.shape_cast %136 : vector<2x1x128xf32> to vector<2x128xf32>
    %138 = vector.extract_strided_slice %41 {offsets = [0, 3, 0], sizes = [2, 1, 128], strides = [1, 1, 1]} : vector<2x8x128xf32> to vector<2x1x128xf32>
    %139 = vector.shape_cast %138 : vector<2x1x128xf32> to vector<2x128xf32>
    %140 = arith.select %27, %137, %139 : vector<2x128xi1>, vector<2x128xf32>
    %141 = arith.truncf %135 : vector<2x32xf32> to vector<2x32xbf16>
    %cst_22 = arith.constant dense<0.000000e+00> : vector<2x128xf32>
    %142 = tpu.matmul %141, %34, %cst_22 {dimension_numbers = #tpu.dot_dimension_numbers<[1], [0], [0], [1], [0, 0, 1, 1], [], []>} : vector<2x32xbf16>, vector<32x128xbf16>, vector<2x128xf32> -> vector<2x128xf32>
    %143 = arith.addf %140, %142 : vector<2x128xf32>
    %144 = arith.negf %143 : vector<2x128xf32>
    %145 = math.exp %144 : vector<2x128xf32>
    %cst_23 = arith.constant 1.000000e+00 : f32
    %146 = vector.broadcast %cst_23 : f32 to vector<2x128xf32>
    %147 = arith.addf %146, %145 : vector<2x128xf32>
    %148 = arith.divf %146, %147 : vector<2x128xf32>
    %149 = math.tanh %143 : vector<2x128xf32>
    %150 = vector.extract_strided_slice %148 {offsets = [0, 0], sizes = [2, 32], strides = [1, 1]} : vector<2x128xf32> to vector<2x32xf32>
    %151 = vector.extract_strided_slice %148 {offsets = [0, 32], sizes = [2, 32], strides = [1, 1]} : vector<2x128xf32> to vector<2x32xf32>
    %152 = vector.extract_strided_slice %149 {offsets = [0, 64], sizes = [2, 32], strides = [1, 1]} : vector<2x128xf32> to vector<2x32xf32>
    %153 = vector.extract_strided_slice %148 {offsets = [0, 96], sizes = [2, 32], strides = [1, 1]} : vector<2x128xf32> to vector<2x32xf32>
    %154 = arith.mulf %151, %133 : vector<2x32xf32>
    %155 = arith.mulf %150, %152 : vector<2x32xf32>
    %156 = arith.addf %154, %155 : vector<2x32xf32>
    %157 = math.tanh %156 : vector<2x32xf32>
    %158 = arith.mulf %153, %157 : vector<2x32xf32>
    %159 = vector.extract_strided_slice %41 {offsets = [0, 5, 0], sizes = [2, 1, 128], strides = [1, 1, 1]} : vector<2x8x128xf32> to vector<2x1x128xf32>
    %160 = vector.shape_cast %159 : vector<2x1x128xf32> to vector<2x128xf32>
    %161 = vector.extract_strided_slice %41 {offsets = [0, 2, 0], sizes = [2, 1, 128], strides = [1, 1, 1]} : vector<2x8x128xf32> to vector<2x1x128xf32>
    %162 = vector.shape_cast %161 : vector<2x1x128xf32> to vector<2x128xf32>
    %163 = arith.select %27, %160, %162 : vector<2x128xi1>, vector<2x128xf32>
    %164 = arith.truncf %158 : vector<2x32xf32> to vector<2x32xbf16>
    %cst_24 = arith.constant dense<0.000000e+00> : vector<2x128xf32>
    %165 = tpu.matmul %164, %34, %cst_24 {dimension_numbers = #tpu.dot_dimension_numbers<[1], [0], [0], [1], [0, 0, 1, 1], [], []>} : vector<2x32xbf16>, vector<32x128xbf16>, vector<2x128xf32> -> vector<2x128xf32>
    %166 = arith.addf %163, %165 : vector<2x128xf32>
    %167 = arith.negf %166 : vector<2x128xf32>
    %168 = math.exp %167 : vector<2x128xf32>
    %cst_25 = arith.constant 1.000000e+00 : f32
    %169 = vector.broadcast %cst_25 : f32 to vector<2x128xf32>
    %170 = arith.addf %169, %168 : vector<2x128xf32>
    %171 = arith.divf %169, %170 : vector<2x128xf32>
    %172 = math.tanh %166 : vector<2x128xf32>
    %173 = vector.extract_strided_slice %171 {offsets = [0, 0], sizes = [2, 32], strides = [1, 1]} : vector<2x128xf32> to vector<2x32xf32>
    %174 = vector.extract_strided_slice %171 {offsets = [0, 32], sizes = [2, 32], strides = [1, 1]} : vector<2x128xf32> to vector<2x32xf32>
    %175 = vector.extract_strided_slice %172 {offsets = [0, 64], sizes = [2, 32], strides = [1, 1]} : vector<2x128xf32> to vector<2x32xf32>
    %176 = vector.extract_strided_slice %171 {offsets = [0, 96], sizes = [2, 32], strides = [1, 1]} : vector<2x128xf32> to vector<2x32xf32>
    %177 = arith.mulf %174, %156 : vector<2x32xf32>
    %178 = arith.mulf %173, %175 : vector<2x32xf32>
    %179 = arith.addf %177, %178 : vector<2x32xf32>
    %180 = math.tanh %179 : vector<2x32xf32>
    %181 = arith.mulf %176, %180 : vector<2x32xf32>
    %182 = vector.extract_strided_slice %41 {offsets = [0, 6, 0], sizes = [2, 1, 128], strides = [1, 1, 1]} : vector<2x8x128xf32> to vector<2x1x128xf32>
    %183 = vector.shape_cast %182 : vector<2x1x128xf32> to vector<2x128xf32>
    %184 = vector.extract_strided_slice %41 {offsets = [0, 1, 0], sizes = [2, 1, 128], strides = [1, 1, 1]} : vector<2x8x128xf32> to vector<2x1x128xf32>
    %185 = vector.shape_cast %184 : vector<2x1x128xf32> to vector<2x128xf32>
    %186 = arith.select %27, %183, %185 : vector<2x128xi1>, vector<2x128xf32>
    %187 = arith.truncf %181 : vector<2x32xf32> to vector<2x32xbf16>
    %cst_26 = arith.constant dense<0.000000e+00> : vector<2x128xf32>
    %188 = tpu.matmul %187, %34, %cst_26 {dimension_numbers = #tpu.dot_dimension_numbers<[1], [0], [0], [1], [0, 0, 1, 1], [], []>} : vector<2x32xbf16>, vector<32x128xbf16>, vector<2x128xf32> -> vector<2x128xf32>
    %189 = arith.addf %186, %188 : vector<2x128xf32>
    %190 = arith.negf %189 : vector<2x128xf32>
    %191 = math.exp %190 : vector<2x128xf32>
    %cst_27 = arith.constant 1.000000e+00 : f32
    %192 = vector.broadcast %cst_27 : f32 to vector<2x128xf32>
    %193 = arith.addf %192, %191 : vector<2x128xf32>
    %194 = arith.divf %192, %193 : vector<2x128xf32>
    %195 = math.tanh %189 : vector<2x128xf32>
    %196 = vector.extract_strided_slice %194 {offsets = [0, 0], sizes = [2, 32], strides = [1, 1]} : vector<2x128xf32> to vector<2x32xf32>
    %197 = vector.extract_strided_slice %194 {offsets = [0, 32], sizes = [2, 32], strides = [1, 1]} : vector<2x128xf32> to vector<2x32xf32>
    %198 = vector.extract_strided_slice %195 {offsets = [0, 64], sizes = [2, 32], strides = [1, 1]} : vector<2x128xf32> to vector<2x32xf32>
    %199 = vector.extract_strided_slice %194 {offsets = [0, 96], sizes = [2, 32], strides = [1, 1]} : vector<2x128xf32> to vector<2x32xf32>
    %200 = arith.mulf %197, %179 : vector<2x32xf32>
    %201 = arith.mulf %196, %198 : vector<2x32xf32>
    %202 = arith.addf %200, %201 : vector<2x32xf32>
    %203 = math.tanh %202 : vector<2x32xf32>
    %204 = arith.mulf %199, %203 : vector<2x32xf32>
    %205 = vector.extract_strided_slice %41 {offsets = [0, 7, 0], sizes = [2, 1, 128], strides = [1, 1, 1]} : vector<2x8x128xf32> to vector<2x1x128xf32>
    %206 = vector.shape_cast %205 : vector<2x1x128xf32> to vector<2x128xf32>
    %207 = vector.extract_strided_slice %41 {offsets = [0, 0, 0], sizes = [2, 1, 128], strides = [1, 1, 1]} : vector<2x8x128xf32> to vector<2x1x128xf32>
    %208 = vector.shape_cast %207 : vector<2x1x128xf32> to vector<2x128xf32>
    %209 = arith.select %27, %206, %208 : vector<2x128xi1>, vector<2x128xf32>
    %210 = arith.truncf %204 : vector<2x32xf32> to vector<2x32xbf16>
    %cst_28 = arith.constant dense<0.000000e+00> : vector<2x128xf32>
    %211 = tpu.matmul %210, %34, %cst_28 {dimension_numbers = #tpu.dot_dimension_numbers<[1], [0], [0], [1], [0, 0, 1, 1], [], []>} : vector<2x32xbf16>, vector<32x128xbf16>, vector<2x128xf32> -> vector<2x128xf32>
    %212 = arith.addf %209, %211 : vector<2x128xf32>
    %213 = arith.negf %212 : vector<2x128xf32>
    %214 = math.exp %213 : vector<2x128xf32>
    %cst_29 = arith.constant 1.000000e+00 : f32
    %215 = vector.broadcast %cst_29 : f32 to vector<2x128xf32>
    %216 = arith.addf %215, %214 : vector<2x128xf32>
    %217 = arith.divf %215, %216 : vector<2x128xf32>
    %218 = math.tanh %212 : vector<2x128xf32>
    %219 = vector.extract_strided_slice %217 {offsets = [0, 0], sizes = [2, 32], strides = [1, 1]} : vector<2x128xf32> to vector<2x32xf32>
    %220 = vector.extract_strided_slice %217 {offsets = [0, 32], sizes = [2, 32], strides = [1, 1]} : vector<2x128xf32> to vector<2x32xf32>
    %221 = vector.extract_strided_slice %218 {offsets = [0, 64], sizes = [2, 32], strides = [1, 1]} : vector<2x128xf32> to vector<2x32xf32>
    %222 = vector.extract_strided_slice %217 {offsets = [0, 96], sizes = [2, 32], strides = [1, 1]} : vector<2x128xf32> to vector<2x32xf32>
    %223 = arith.mulf %220, %202 : vector<2x32xf32>
    %224 = arith.mulf %219, %221 : vector<2x32xf32>
    %225 = arith.addf %223, %224 : vector<2x32xf32>
    %226 = math.tanh %225 : vector<2x32xf32>
    %227 = arith.mulf %222, %226 : vector<2x32xf32>
    %228 = vector.shape_cast %66 : vector<2x32xf32> to vector<2x1x32xf32>
    %229 = vector.shape_cast %89 : vector<2x32xf32> to vector<2x1x32xf32>
    %230 = vector.shape_cast %112 : vector<2x32xf32> to vector<2x1x32xf32>
    %231 = vector.shape_cast %135 : vector<2x32xf32> to vector<2x1x32xf32>
    %232 = vector.shape_cast %158 : vector<2x32xf32> to vector<2x1x32xf32>
    %233 = vector.shape_cast %181 : vector<2x32xf32> to vector<2x1x32xf32>
    %234 = vector.shape_cast %204 : vector<2x32xf32> to vector<2x1x32xf32>
    %235 = vector.shape_cast %227 : vector<2x32xf32> to vector<2x1x32xf32>
    %236 = tpu.concatenate %228, %229, %230, %231, %232, %233, %234, %235 in 1 : vector<2x1x32xf32>, vector<2x1x32xf32>, vector<2x1x32xf32>, vector<2x1x32xf32>, vector<2x1x32xf32>, vector<2x1x32xf32>, vector<2x1x32xf32>, vector<2x1x32xf32> -> vector<2x8x32xf32>
    %237 = vector.shape_cast %227 : vector<2x32xf32> to vector<2x1x32xf32>
    %238 = vector.shape_cast %204 : vector<2x32xf32> to vector<2x1x32xf32>
    %239 = vector.shape_cast %181 : vector<2x32xf32> to vector<2x1x32xf32>
    %240 = vector.shape_cast %158 : vector<2x32xf32> to vector<2x1x32xf32>
    %241 = vector.shape_cast %135 : vector<2x32xf32> to vector<2x1x32xf32>
    %242 = vector.shape_cast %112 : vector<2x32xf32> to vector<2x1x32xf32>
    %243 = vector.shape_cast %89 : vector<2x32xf32> to vector<2x1x32xf32>
    %244 = vector.shape_cast %66 : vector<2x32xf32> to vector<2x1x32xf32>
    %245 = tpu.concatenate %237, %238, %239, %240, %241, %242, %243, %244 in 1 : vector<2x1x32xf32>, vector<2x1x32xf32>, vector<2x1x32xf32>, vector<2x1x32xf32>, vector<2x1x32xf32>, vector<2x1x32xf32>, vector<2x1x32xf32>, vector<2x1x32xf32> -> vector<2x8x32xf32>
    %246 = arith.select %30, %236, %245 : vector<2x8x32xi1>, vector<2x8x32xf32>
    %c32 = arith.constant 32 : index
    %c0_30 = arith.constant 0 : index
    %247 = vector.load %arg1[%c32, %c0_30] : memref<504x128xf32, #tpu.memory_space<vmem>>, vector<32x128xf32>
    %248 = arith.truncf %247 : vector<32x128xf32> to vector<32x128xbf16>
    %c96 = arith.constant 96 : index
    %c0_31 = arith.constant 0 : index
    %249 = vector.load %arg1[%c96, %c0_31] : memref<504x128xf32, #tpu.memory_space<vmem>>, vector<32x128xf32>
    %250 = arith.truncf %249 : vector<32x128xf32> to vector<32x128xbf16>
    %c136 = arith.constant 136 : index
    %c0_32 = arith.constant 0 : index
    %251 = vector.load %arg1[%c136, %c0_32] : memref<504x128xf32, #tpu.memory_space<vmem>>, vector<1x128xf32>
    %252 = vector.shape_cast %246 : vector<2x8x32xf32> to vector<16x32xf32>
    %253 = arith.truncf %252 : vector<16x32xf32> to vector<16x32xbf16>
    %cst_33 = arith.constant dense<0.000000e+00> : vector<16x128xf32>
    %254 = tpu.matmul %253, %248, %cst_33 {dimension_numbers = #tpu.dot_dimension_numbers<[1], [0], [0], [1], [0, 0, 1, 1], [], []>} : vector<16x32xbf16>, vector<32x128xbf16>, vector<16x128xf32> -> vector<16x128xf32>
    %255 = vector.broadcast %251 : vector<1x128xf32> to vector<16x128xf32>
    %256 = arith.addf %254, %255 : vector<16x128xf32>
    %257 = vector.shape_cast %256 : vector<16x128xf32> to vector<2x8x128xf32>
    %cst_34 = arith.constant 0.000000e+00 : f32
    %258 = vector.broadcast %cst_34 : f32 to vector<2x32xf32>
    %cst_35 = arith.constant 0.000000e+00 : f32
    %259 = vector.broadcast %cst_35 : f32 to vector<2x32xf32>
    %260 = vector.extract_strided_slice %257 {offsets = [0, 0, 0], sizes = [2, 1, 128], strides = [1, 1, 1]} : vector<2x8x128xf32> to vector<2x1x128xf32>
    %261 = vector.shape_cast %260 : vector<2x1x128xf32> to vector<2x128xf32>
    %262 = vector.extract_strided_slice %257 {offsets = [0, 7, 0], sizes = [2, 1, 128], strides = [1, 1, 1]} : vector<2x8x128xf32> to vector<2x1x128xf32>
    %263 = vector.shape_cast %262 : vector<2x1x128xf32> to vector<2x128xf32>
    %264 = arith.select %27, %261, %263 : vector<2x128xi1>, vector<2x128xf32>
    %265 = arith.truncf %258 : vector<2x32xf32> to vector<2x32xbf16>
    %cst_36 = arith.constant dense<0.000000e+00> : vector<2x128xf32>
    %266 = tpu.matmul %265, %250, %cst_36 {dimension_numbers = #tpu.dot_dimension_numbers<[1], [0], [0], [1], [0, 0, 1, 1], [], []>} : vector<2x32xbf16>, vector<32x128xbf16>, vector<2x128xf32> -> vector<2x128xf32>
    %267 = arith.addf %264, %266 : vector<2x128xf32>
    %268 = arith.negf %267 : vector<2x128xf32>
    %269 = math.exp %268 : vector<2x128xf32>
    %cst_37 = arith.constant 1.000000e+00 : f32
    %270 = vector.broadcast %cst_37 : f32 to vector<2x128xf32>
    %271 = arith.addf %270, %269 : vector<2x128xf32>
    %272 = arith.divf %270, %271 : vector<2x128xf32>
    %273 = math.tanh %267 : vector<2x128xf32>
    %274 = vector.extract_strided_slice %272 {offsets = [0, 0], sizes = [2, 32], strides = [1, 1]} : vector<2x128xf32> to vector<2x32xf32>
    %275 = vector.extract_strided_slice %272 {offsets = [0, 32], sizes = [2, 32], strides = [1, 1]} : vector<2x128xf32> to vector<2x32xf32>
    %276 = vector.extract_strided_slice %273 {offsets = [0, 64], sizes = [2, 32], strides = [1, 1]} : vector<2x128xf32> to vector<2x32xf32>
    %277 = vector.extract_strided_slice %272 {offsets = [0, 96], sizes = [2, 32], strides = [1, 1]} : vector<2x128xf32> to vector<2x32xf32>
    %278 = arith.mulf %275, %259 : vector<2x32xf32>
    %279 = arith.mulf %274, %276 : vector<2x32xf32>
    %280 = arith.addf %278, %279 : vector<2x32xf32>
    %281 = math.tanh %280 : vector<2x32xf32>
    %282 = arith.mulf %277, %281 : vector<2x32xf32>
    %283 = vector.extract_strided_slice %257 {offsets = [0, 1, 0], sizes = [2, 1, 128], strides = [1, 1, 1]} : vector<2x8x128xf32> to vector<2x1x128xf32>
    %284 = vector.shape_cast %283 : vector<2x1x128xf32> to vector<2x128xf32>
    %285 = vector.extract_strided_slice %257 {offsets = [0, 6, 0], sizes = [2, 1, 128], strides = [1, 1, 1]} : vector<2x8x128xf32> to vector<2x1x128xf32>
    %286 = vector.shape_cast %285 : vector<2x1x128xf32> to vector<2x128xf32>
    %287 = arith.select %27, %284, %286 : vector<2x128xi1>, vector<2x128xf32>
    %288 = arith.truncf %282 : vector<2x32xf32> to vector<2x32xbf16>
    %cst_38 = arith.constant dense<0.000000e+00> : vector<2x128xf32>
    %289 = tpu.matmul %288, %250, %cst_38 {dimension_numbers = #tpu.dot_dimension_numbers<[1], [0], [0], [1], [0, 0, 1, 1], [], []>} : vector<2x32xbf16>, vector<32x128xbf16>, vector<2x128xf32> -> vector<2x128xf32>
    %290 = arith.addf %287, %289 : vector<2x128xf32>
    %291 = arith.negf %290 : vector<2x128xf32>
    %292 = math.exp %291 : vector<2x128xf32>
    %cst_39 = arith.constant 1.000000e+00 : f32
    %293 = vector.broadcast %cst_39 : f32 to vector<2x128xf32>
    %294 = arith.addf %293, %292 : vector<2x128xf32>
    %295 = arith.divf %293, %294 : vector<2x128xf32>
    %296 = math.tanh %290 : vector<2x128xf32>
    %297 = vector.extract_strided_slice %295 {offsets = [0, 0], sizes = [2, 32], strides = [1, 1]} : vector<2x128xf32> to vector<2x32xf32>
    %298 = vector.extract_strided_slice %295 {offsets = [0, 32], sizes = [2, 32], strides = [1, 1]} : vector<2x128xf32> to vector<2x32xf32>
    %299 = vector.extract_strided_slice %296 {offsets = [0, 64], sizes = [2, 32], strides = [1, 1]} : vector<2x128xf32> to vector<2x32xf32>
    %300 = vector.extract_strided_slice %295 {offsets = [0, 96], sizes = [2, 32], strides = [1, 1]} : vector<2x128xf32> to vector<2x32xf32>
    %301 = arith.mulf %298, %280 : vector<2x32xf32>
    %302 = arith.mulf %297, %299 : vector<2x32xf32>
    %303 = arith.addf %301, %302 : vector<2x32xf32>
    %304 = math.tanh %303 : vector<2x32xf32>
    %305 = arith.mulf %300, %304 : vector<2x32xf32>
    %306 = vector.extract_strided_slice %257 {offsets = [0, 2, 0], sizes = [2, 1, 128], strides = [1, 1, 1]} : vector<2x8x128xf32> to vector<2x1x128xf32>
    %307 = vector.shape_cast %306 : vector<2x1x128xf32> to vector<2x128xf32>
    %308 = vector.extract_strided_slice %257 {offsets = [0, 5, 0], sizes = [2, 1, 128], strides = [1, 1, 1]} : vector<2x8x128xf32> to vector<2x1x128xf32>
    %309 = vector.shape_cast %308 : vector<2x1x128xf32> to vector<2x128xf32>
    %310 = arith.select %27, %307, %309 : vector<2x128xi1>, vector<2x128xf32>
    %311 = arith.truncf %305 : vector<2x32xf32> to vector<2x32xbf16>
    %cst_40 = arith.constant dense<0.000000e+00> : vector<2x128xf32>
    %312 = tpu.matmul %311, %250, %cst_40 {dimension_numbers = #tpu.dot_dimension_numbers<[1], [0], [0], [1], [0, 0, 1, 1], [], []>} : vector<2x32xbf16>, vector<32x128xbf16>, vector<2x128xf32> -> vector<2x128xf32>
    %313 = arith.addf %310, %312 : vector<2x128xf32>
    %314 = arith.negf %313 : vector<2x128xf32>
    %315 = math.exp %314 : vector<2x128xf32>
    %cst_41 = arith.constant 1.000000e+00 : f32
    %316 = vector.broadcast %cst_41 : f32 to vector<2x128xf32>
    %317 = arith.addf %316, %315 : vector<2x128xf32>
    %318 = arith.divf %316, %317 : vector<2x128xf32>
    %319 = math.tanh %313 : vector<2x128xf32>
    %320 = vector.extract_strided_slice %318 {offsets = [0, 0], sizes = [2, 32], strides = [1, 1]} : vector<2x128xf32> to vector<2x32xf32>
    %321 = vector.extract_strided_slice %318 {offsets = [0, 32], sizes = [2, 32], strides = [1, 1]} : vector<2x128xf32> to vector<2x32xf32>
    %322 = vector.extract_strided_slice %319 {offsets = [0, 64], sizes = [2, 32], strides = [1, 1]} : vector<2x128xf32> to vector<2x32xf32>
    %323 = vector.extract_strided_slice %318 {offsets = [0, 96], sizes = [2, 32], strides = [1, 1]} : vector<2x128xf32> to vector<2x32xf32>
    %324 = arith.mulf %321, %303 : vector<2x32xf32>
    %325 = arith.mulf %320, %322 : vector<2x32xf32>
    %326 = arith.addf %324, %325 : vector<2x32xf32>
    %327 = math.tanh %326 : vector<2x32xf32>
    %328 = arith.mulf %323, %327 : vector<2x32xf32>
    %329 = vector.extract_strided_slice %257 {offsets = [0, 3, 0], sizes = [2, 1, 128], strides = [1, 1, 1]} : vector<2x8x128xf32> to vector<2x1x128xf32>
    %330 = vector.shape_cast %329 : vector<2x1x128xf32> to vector<2x128xf32>
    %331 = vector.extract_strided_slice %257 {offsets = [0, 4, 0], sizes = [2, 1, 128], strides = [1, 1, 1]} : vector<2x8x128xf32> to vector<2x1x128xf32>
    %332 = vector.shape_cast %331 : vector<2x1x128xf32> to vector<2x128xf32>
    %333 = arith.select %27, %330, %332 : vector<2x128xi1>, vector<2x128xf32>
    %334 = arith.truncf %328 : vector<2x32xf32> to vector<2x32xbf16>
    %cst_42 = arith.constant dense<0.000000e+00> : vector<2x128xf32>
    %335 = tpu.matmul %334, %250, %cst_42 {dimension_numbers = #tpu.dot_dimension_numbers<[1], [0], [0], [1], [0, 0, 1, 1], [], []>} : vector<2x32xbf16>, vector<32x128xbf16>, vector<2x128xf32> -> vector<2x128xf32>
    %336 = arith.addf %333, %335 : vector<2x128xf32>
    %337 = arith.negf %336 : vector<2x128xf32>
    %338 = math.exp %337 : vector<2x128xf32>
    %cst_43 = arith.constant 1.000000e+00 : f32
    %339 = vector.broadcast %cst_43 : f32 to vector<2x128xf32>
    %340 = arith.addf %339, %338 : vector<2x128xf32>
    %341 = arith.divf %339, %340 : vector<2x128xf32>
    %342 = math.tanh %336 : vector<2x128xf32>
    %343 = vector.extract_strided_slice %341 {offsets = [0, 0], sizes = [2, 32], strides = [1, 1]} : vector<2x128xf32> to vector<2x32xf32>
    %344 = vector.extract_strided_slice %341 {offsets = [0, 32], sizes = [2, 32], strides = [1, 1]} : vector<2x128xf32> to vector<2x32xf32>
    %345 = vector.extract_strided_slice %342 {offsets = [0, 64], sizes = [2, 32], strides = [1, 1]} : vector<2x128xf32> to vector<2x32xf32>
    %346 = vector.extract_strided_slice %341 {offsets = [0, 96], sizes = [2, 32], strides = [1, 1]} : vector<2x128xf32> to vector<2x32xf32>
    %347 = arith.mulf %344, %326 : vector<2x32xf32>
    %348 = arith.mulf %343, %345 : vector<2x32xf32>
    %349 = arith.addf %347, %348 : vector<2x32xf32>
    %350 = math.tanh %349 : vector<2x32xf32>
    %351 = arith.mulf %346, %350 : vector<2x32xf32>
    %352 = vector.extract_strided_slice %257 {offsets = [0, 4, 0], sizes = [2, 1, 128], strides = [1, 1, 1]} : vector<2x8x128xf32> to vector<2x1x128xf32>
    %353 = vector.shape_cast %352 : vector<2x1x128xf32> to vector<2x128xf32>
    %354 = vector.extract_strided_slice %257 {offsets = [0, 3, 0], sizes = [2, 1, 128], strides = [1, 1, 1]} : vector<2x8x128xf32> to vector<2x1x128xf32>
    %355 = vector.shape_cast %354 : vector<2x1x128xf32> to vector<2x128xf32>
    %356 = arith.select %27, %353, %355 : vector<2x128xi1>, vector<2x128xf32>
    %357 = arith.truncf %351 : vector<2x32xf32> to vector<2x32xbf16>
    %cst_44 = arith.constant dense<0.000000e+00> : vector<2x128xf32>
    %358 = tpu.matmul %357, %250, %cst_44 {dimension_numbers = #tpu.dot_dimension_numbers<[1], [0], [0], [1], [0, 0, 1, 1], [], []>} : vector<2x32xbf16>, vector<32x128xbf16>, vector<2x128xf32> -> vector<2x128xf32>
    %359 = arith.addf %356, %358 : vector<2x128xf32>
    %360 = arith.negf %359 : vector<2x128xf32>
    %361 = math.exp %360 : vector<2x128xf32>
    %cst_45 = arith.constant 1.000000e+00 : f32
    %362 = vector.broadcast %cst_45 : f32 to vector<2x128xf32>
    %363 = arith.addf %362, %361 : vector<2x128xf32>
    %364 = arith.divf %362, %363 : vector<2x128xf32>
    %365 = math.tanh %359 : vector<2x128xf32>
    %366 = vector.extract_strided_slice %364 {offsets = [0, 0], sizes = [2, 32], strides = [1, 1]} : vector<2x128xf32> to vector<2x32xf32>
    %367 = vector.extract_strided_slice %364 {offsets = [0, 32], sizes = [2, 32], strides = [1, 1]} : vector<2x128xf32> to vector<2x32xf32>
    %368 = vector.extract_strided_slice %365 {offsets = [0, 64], sizes = [2, 32], strides = [1, 1]} : vector<2x128xf32> to vector<2x32xf32>
    %369 = vector.extract_strided_slice %364 {offsets = [0, 96], sizes = [2, 32], strides = [1, 1]} : vector<2x128xf32> to vector<2x32xf32>
    %370 = arith.mulf %367, %349 : vector<2x32xf32>
    %371 = arith.mulf %366, %368 : vector<2x32xf32>
    %372 = arith.addf %370, %371 : vector<2x32xf32>
    %373 = math.tanh %372 : vector<2x32xf32>
    %374 = arith.mulf %369, %373 : vector<2x32xf32>
    %375 = vector.extract_strided_slice %257 {offsets = [0, 5, 0], sizes = [2, 1, 128], strides = [1, 1, 1]} : vector<2x8x128xf32> to vector<2x1x128xf32>
    %376 = vector.shape_cast %375 : vector<2x1x128xf32> to vector<2x128xf32>
    %377 = vector.extract_strided_slice %257 {offsets = [0, 2, 0], sizes = [2, 1, 128], strides = [1, 1, 1]} : vector<2x8x128xf32> to vector<2x1x128xf32>
    %378 = vector.shape_cast %377 : vector<2x1x128xf32> to vector<2x128xf32>
    %379 = arith.select %27, %376, %378 : vector<2x128xi1>, vector<2x128xf32>
    %380 = arith.truncf %374 : vector<2x32xf32> to vector<2x32xbf16>
    %cst_46 = arith.constant dense<0.000000e+00> : vector<2x128xf32>
    %381 = tpu.matmul %380, %250, %cst_46 {dimension_numbers = #tpu.dot_dimension_numbers<[1], [0], [0], [1], [0, 0, 1, 1], [], []>} : vector<2x32xbf16>, vector<32x128xbf16>, vector<2x128xf32> -> vector<2x128xf32>
    %382 = arith.addf %379, %381 : vector<2x128xf32>
    %383 = arith.negf %382 : vector<2x128xf32>
    %384 = math.exp %383 : vector<2x128xf32>
    %cst_47 = arith.constant 1.000000e+00 : f32
    %385 = vector.broadcast %cst_47 : f32 to vector<2x128xf32>
    %386 = arith.addf %385, %384 : vector<2x128xf32>
    %387 = arith.divf %385, %386 : vector<2x128xf32>
    %388 = math.tanh %382 : vector<2x128xf32>
    %389 = vector.extract_strided_slice %387 {offsets = [0, 0], sizes = [2, 32], strides = [1, 1]} : vector<2x128xf32> to vector<2x32xf32>
    %390 = vector.extract_strided_slice %387 {offsets = [0, 32], sizes = [2, 32], strides = [1, 1]} : vector<2x128xf32> to vector<2x32xf32>
    %391 = vector.extract_strided_slice %388 {offsets = [0, 64], sizes = [2, 32], strides = [1, 1]} : vector<2x128xf32> to vector<2x32xf32>
    %392 = vector.extract_strided_slice %387 {offsets = [0, 96], sizes = [2, 32], strides = [1, 1]} : vector<2x128xf32> to vector<2x32xf32>
    %393 = arith.mulf %390, %372 : vector<2x32xf32>
    %394 = arith.mulf %389, %391 : vector<2x32xf32>
    %395 = arith.addf %393, %394 : vector<2x32xf32>
    %396 = math.tanh %395 : vector<2x32xf32>
    %397 = arith.mulf %392, %396 : vector<2x32xf32>
    %398 = vector.extract_strided_slice %257 {offsets = [0, 6, 0], sizes = [2, 1, 128], strides = [1, 1, 1]} : vector<2x8x128xf32> to vector<2x1x128xf32>
    %399 = vector.shape_cast %398 : vector<2x1x128xf32> to vector<2x128xf32>
    %400 = vector.extract_strided_slice %257 {offsets = [0, 1, 0], sizes = [2, 1, 128], strides = [1, 1, 1]} : vector<2x8x128xf32> to vector<2x1x128xf32>
    %401 = vector.shape_cast %400 : vector<2x1x128xf32> to vector<2x128xf32>
    %402 = arith.select %27, %399, %401 : vector<2x128xi1>, vector<2x128xf32>
    %403 = arith.truncf %397 : vector<2x32xf32> to vector<2x32xbf16>
    %cst_48 = arith.constant dense<0.000000e+00> : vector<2x128xf32>
    %404 = tpu.matmul %403, %250, %cst_48 {dimension_numbers = #tpu.dot_dimension_numbers<[1], [0], [0], [1], [0, 0, 1, 1], [], []>} : vector<2x32xbf16>, vector<32x128xbf16>, vector<2x128xf32> -> vector<2x128xf32>
    %405 = arith.addf %402, %404 : vector<2x128xf32>
    %406 = arith.negf %405 : vector<2x128xf32>
    %407 = math.exp %406 : vector<2x128xf32>
    %cst_49 = arith.constant 1.000000e+00 : f32
    %408 = vector.broadcast %cst_49 : f32 to vector<2x128xf32>
    %409 = arith.addf %408, %407 : vector<2x128xf32>
    %410 = arith.divf %408, %409 : vector<2x128xf32>
    %411 = math.tanh %405 : vector<2x128xf32>
    %412 = vector.extract_strided_slice %410 {offsets = [0, 0], sizes = [2, 32], strides = [1, 1]} : vector<2x128xf32> to vector<2x32xf32>
    %413 = vector.extract_strided_slice %410 {offsets = [0, 32], sizes = [2, 32], strides = [1, 1]} : vector<2x128xf32> to vector<2x32xf32>
    %414 = vector.extract_strided_slice %411 {offsets = [0, 64], sizes = [2, 32], strides = [1, 1]} : vector<2x128xf32> to vector<2x32xf32>
    %415 = vector.extract_strided_slice %410 {offsets = [0, 96], sizes = [2, 32], strides = [1, 1]} : vector<2x128xf32> to vector<2x32xf32>
    %416 = arith.mulf %413, %395 : vector<2x32xf32>
    %417 = arith.mulf %412, %414 : vector<2x32xf32>
    %418 = arith.addf %416, %417 : vector<2x32xf32>
    %419 = math.tanh %418 : vector<2x32xf32>
    %420 = arith.mulf %415, %419 : vector<2x32xf32>
    %421 = vector.extract_strided_slice %257 {offsets = [0, 7, 0], sizes = [2, 1, 128], strides = [1, 1, 1]} : vector<2x8x128xf32> to vector<2x1x128xf32>
    %422 = vector.shape_cast %421 : vector<2x1x128xf32> to vector<2x128xf32>
    %423 = vector.extract_strided_slice %257 {offsets = [0, 0, 0], sizes = [2, 1, 128], strides = [1, 1, 1]} : vector<2x8x128xf32> to vector<2x1x128xf32>
    %424 = vector.shape_cast %423 : vector<2x1x128xf32> to vector<2x128xf32>
    %425 = arith.select %27, %422, %424 : vector<2x128xi1>, vector<2x128xf32>
    %426 = arith.truncf %420 : vector<2x32xf32> to vector<2x32xbf16>
    %cst_50 = arith.constant dense<0.000000e+00> : vector<2x128xf32>
    %427 = tpu.matmul %426, %250, %cst_50 {dimension_numbers = #tpu.dot_dimension_numbers<[1], [0], [0], [1], [0, 0, 1, 1], [], []>} : vector<2x32xbf16>, vector<32x128xbf16>, vector<2x128xf32> -> vector<2x128xf32>
    %428 = arith.addf %425, %427 : vector<2x128xf32>
    %429 = arith.negf %428 : vector<2x128xf32>
    %430 = math.exp %429 : vector<2x128xf32>
    %cst_51 = arith.constant 1.000000e+00 : f32
    %431 = vector.broadcast %cst_51 : f32 to vector<2x128xf32>
    %432 = arith.addf %431, %430 : vector<2x128xf32>
    %433 = arith.divf %431, %432 : vector<2x128xf32>
    %434 = math.tanh %428 : vector<2x128xf32>
    %435 = vector.extract_strided_slice %433 {offsets = [0, 0], sizes = [2, 32], strides = [1, 1]} : vector<2x128xf32> to vector<2x32xf32>
    %436 = vector.extract_strided_slice %433 {offsets = [0, 32], sizes = [2, 32], strides = [1, 1]} : vector<2x128xf32> to vector<2x32xf32>
    %437 = vector.extract_strided_slice %434 {offsets = [0, 64], sizes = [2, 32], strides = [1, 1]} : vector<2x128xf32> to vector<2x32xf32>
    %438 = vector.extract_strided_slice %433 {offsets = [0, 96], sizes = [2, 32], strides = [1, 1]} : vector<2x128xf32> to vector<2x32xf32>
    %439 = arith.mulf %436, %418 : vector<2x32xf32>
    %440 = arith.mulf %435, %437 : vector<2x32xf32>
    %441 = arith.addf %439, %440 : vector<2x32xf32>
    %442 = math.tanh %441 : vector<2x32xf32>
    %443 = arith.mulf %438, %442 : vector<2x32xf32>
    %444 = vector.shape_cast %282 : vector<2x32xf32> to vector<2x1x32xf32>
    %445 = vector.shape_cast %305 : vector<2x32xf32> to vector<2x1x32xf32>
    %446 = vector.shape_cast %328 : vector<2x32xf32> to vector<2x1x32xf32>
    %447 = vector.shape_cast %351 : vector<2x32xf32> to vector<2x1x32xf32>
    %448 = vector.shape_cast %374 : vector<2x32xf32> to vector<2x1x32xf32>
    %449 = vector.shape_cast %397 : vector<2x32xf32> to vector<2x1x32xf32>
    %450 = vector.shape_cast %420 : vector<2x32xf32> to vector<2x1x32xf32>
    %451 = vector.shape_cast %443 : vector<2x32xf32> to vector<2x1x32xf32>
    %452 = tpu.concatenate %444, %445, %446, %447, %448, %449, %450, %451 in 1 : vector<2x1x32xf32>, vector<2x1x32xf32>, vector<2x1x32xf32>, vector<2x1x32xf32>, vector<2x1x32xf32>, vector<2x1x32xf32>, vector<2x1x32xf32>, vector<2x1x32xf32> -> vector<2x8x32xf32>
    %453 = vector.shape_cast %443 : vector<2x32xf32> to vector<2x1x32xf32>
    %454 = vector.shape_cast %420 : vector<2x32xf32> to vector<2x1x32xf32>
    %455 = vector.shape_cast %397 : vector<2x32xf32> to vector<2x1x32xf32>
    %456 = vector.shape_cast %374 : vector<2x32xf32> to vector<2x1x32xf32>
    %457 = vector.shape_cast %351 : vector<2x32xf32> to vector<2x1x32xf32>
    %458 = vector.shape_cast %328 : vector<2x32xf32> to vector<2x1x32xf32>
    %459 = vector.shape_cast %305 : vector<2x32xf32> to vector<2x1x32xf32>
    %460 = vector.shape_cast %282 : vector<2x32xf32> to vector<2x1x32xf32>
    %461 = tpu.concatenate %453, %454, %455, %456, %457, %458, %459, %460 in 1 : vector<2x1x32xf32>, vector<2x1x32xf32>, vector<2x1x32xf32>, vector<2x1x32xf32>, vector<2x1x32xf32>, vector<2x1x32xf32>, vector<2x1x32xf32>, vector<2x1x32xf32> -> vector<2x8x32xf32>
    %462 = arith.select %30, %452, %461 : vector<2x8x32xi1>, vector<2x8x32xf32>
    %463 = arith.addf %462, %8 : vector<2x8x32xf32>
    %cst_52 = arith.constant dense<0.000000e+00> : vector<8xf32>
    %464 = vector.multi_reduction <add>, %463, %cst_52 [0, 2] : vector<2x8x32xf32> to vector<8xf32>
    %465 = vector.shape_cast %464 : vector<8xf32> to vector<1x8x1xf32>
    %cst_53 = arith.constant 6.400000e+01 : f32
    %466 = vector.broadcast %cst_53 : f32 to vector<1x8x1xf32>
    %467 = arith.divf %465, %466 : vector<1x8x1xf32>
    %468 = vector.broadcast %467 : vector<1x8x1xf32> to vector<2x8x32xf32>
    %469 = arith.subf %463, %468 : vector<2x8x32xf32>
    %470 = arith.mulf %469, %469 : vector<2x8x32xf32>
    %cst_54 = arith.constant dense<0.000000e+00> : vector<8xf32>
    %471 = vector.multi_reduction <add>, %470, %cst_54 [0, 2] : vector<2x8x32xf32> to vector<8xf32>
    %472 = vector.shape_cast %471 : vector<8xf32> to vector<1x8x1xf32>
    %cst_55 = arith.constant 6.400000e+01 : f32
    %473 = vector.broadcast %cst_55 : f32 to vector<1x8x1xf32>
    %474 = arith.divf %472, %473 : vector<1x8x1xf32>
    %475 = vector.broadcast %467 : vector<1x8x1xf32> to vector<2x8x32xf32>
    %476 = arith.subf %463, %475 : vector<2x8x32xf32>
    %cst_56 = arith.constant 9.99999974E-6 : f32
    %477 = vector.broadcast %cst_56 : f32 to vector<1x8x1xf32>
    %478 = arith.addf %474, %477 : vector<1x8x1xf32>
    %479 = math.rsqrt %478 : vector<1x8x1xf32>
    %480 = vector.broadcast %479 : vector<1x8x1xf32> to vector<2x8x32xf32>
    %481 = arith.mulf %476, %480 : vector<2x8x32xf32>
    %c344 = arith.constant 344 : index
    %c0_57 = arith.constant 0 : index
    %482 = vector.load %arg1[%c344, %c0_57] : memref<504x128xf32, #tpu.memory_space<vmem>>, vector<8x16xf32>
    %483 = arith.truncf %482 : vector<8x16xf32> to vector<8x16xbf16>
    %c352 = arith.constant 352 : index
    %c0_58 = arith.constant 0 : index
    %484 = vector.load %arg1[%c352, %c0_58] : memref<504x128xf32, #tpu.memory_space<vmem>>, vector<1x16xf32>
    %c360 = arith.constant 360 : index
    %c0_59 = arith.constant 0 : index
    %485 = vector.load %arg1[%c360, %c0_59] : memref<504x128xf32, #tpu.memory_space<vmem>>, vector<8x16xf32>
    %486 = arith.truncf %485 : vector<8x16xf32> to vector<8x16xbf16>
    %c368 = arith.constant 368 : index
    %c0_60 = arith.constant 0 : index
    %487 = vector.load %arg1[%c368, %c0_60] : memref<504x128xf32, #tpu.memory_space<vmem>>, vector<1x16xf32>
    %c376 = arith.constant 376 : index
    %c0_61 = arith.constant 0 : index
    %488 = vector.load %arg1[%c376, %c0_61] : memref<504x128xf32, #tpu.memory_space<vmem>>, vector<32x32xf32>
    %489 = arith.truncf %488 : vector<32x32xf32> to vector<32x32xbf16>
    %c408 = arith.constant 408 : index
    %c0_62 = arith.constant 0 : index
    %490 = vector.load %arg1[%c408, %c0_62] : memref<504x128xf32, #tpu.memory_space<vmem>>, vector<1x32xf32>
    %c416 = arith.constant 416 : index
    %c0_63 = arith.constant 0 : index
    %491 = vector.load %arg1[%c416, %c0_63] : memref<504x128xf32, #tpu.memory_space<vmem>>, vector<32x32xf32>
    %492 = arith.truncf %491 : vector<32x32xf32> to vector<32x32xbf16>
    %c448 = arith.constant 448 : index
    %c0_64 = arith.constant 0 : index
    %493 = vector.load %arg1[%c448, %c0_64] : memref<504x128xf32, #tpu.memory_space<vmem>>, vector<8x32xf32>
    %494 = arith.truncf %493 : vector<8x32xf32> to vector<8x32xbf16>
    %c456 = arith.constant 456 : index
    %c0_65 = arith.constant 0 : index
    %495 = vector.load %arg1[%c456, %c0_65] : memref<504x128xf32, #tpu.memory_space<vmem>>, vector<1x32xf32>
    %c464 = arith.constant 464 : index
    %c0_66 = arith.constant 0 : index
    %496 = vector.load %arg1[%c464, %c0_66] : memref<504x128xf32, #tpu.memory_space<vmem>>, vector<32x4xf32>
    %497 = arith.truncf %496 : vector<32x4xf32> to vector<32x4xbf16>
    %c496 = arith.constant 496 : index
    %c0_67 = arith.constant 0 : index
    %498 = vector.load %arg1[%c496, %c0_67] : memref<504x128xf32, #tpu.memory_space<vmem>>, vector<1x4xf32>
    %c0_68 = arith.constant 0 : index
    %c0_69 = arith.constant 0 : index
    %c0_70 = arith.constant 0 : index
    %499 = vector.load %arg3[%c0_68, %c0_69, %c0_70] : memref<2x8x8xf32, #tpu.memory_space<vmem>>, vector<2x8x8xf32>
    %500 = vector.shape_cast %499 : vector<2x8x8xf32> to vector<16x8xf32>
    %501 = arith.truncf %500 : vector<16x8xf32> to vector<16x8xbf16>
    %502 = vector.shape_cast %481 : vector<2x8x32xf32> to vector<16x32xf32>
    %c0_71 = arith.constant 0 : index
    %c0_72 = arith.constant 0 : index
    %503 = vector.load %arg2[%c0_71, %c0_72] : memref<2x8xf32, #tpu.memory_space<vmem>>, vector<2x8xf32>
    %504 = arith.truncf %503 : vector<2x8xf32> to vector<2x8xbf16>
    %cst_73 = arith.constant dense<0.000000e+00> : vector<2x16xf32>
    %505 = tpu.matmul %504, %483, %cst_73 {dimension_numbers = #tpu.dot_dimension_numbers<[1], [0], [0], [1], [0, 0, 1, 1], [], []>} : vector<2x8xbf16>, vector<8x16xbf16>, vector<2x16xf32> -> vector<2x16xf32>
    %506 = vector.broadcast %484 : vector<1x16xf32> to vector<2x16xf32>
    %507 = arith.addf %505, %506 : vector<2x16xf32>
    %508 = math.tanh %507 : vector<2x16xf32>
    %cst_74 = arith.constant dense<0.000000e+00> : vector<16x16xf32>
    %509 = tpu.matmul %501, %486, %cst_74 {dimension_numbers = #tpu.dot_dimension_numbers<[1], [0], [0], [1], [0, 0, 1, 1], [], []>} : vector<16x8xbf16>, vector<8x16xbf16>, vector<16x16xf32> -> vector<16x16xf32>
    %510 = vector.broadcast %487 : vector<1x16xf32> to vector<16x16xf32>
    %511 = arith.addf %509, %510 : vector<16x16xf32>
    %512 = math.tanh %511 : vector<16x16xf32>
    %513 = vector.shape_cast %512 : vector<16x16xf32> to vector<2x8x16xf32>
    %514 = arith.truncf %502 : vector<16x32xf32> to vector<16x32xbf16>
    %cst_75 = arith.constant dense<0.000000e+00> : vector<16x32xf32>
    %515 = tpu.matmul %514, %489, %cst_75 {dimension_numbers = #tpu.dot_dimension_numbers<[1], [0], [0], [1], [0, 0, 1, 1], [], []>} : vector<16x32xbf16>, vector<32x32xbf16>, vector<16x32xf32> -> vector<16x32xf32>
    %516 = vector.broadcast %490 : vector<1x32xf32> to vector<16x32xf32>
    %517 = arith.addf %515, %516 : vector<16x32xf32>
    %518 = arith.truncf %517 : vector<16x32xf32> to vector<16x32xbf16>
    %cst_76 = arith.constant dense<0.000000e+00> : vector<16x32xf32>
    %519 = tpu.matmul %518, %492, %cst_76 {dimension_numbers = #tpu.dot_dimension_numbers<[1], [0], [0], [1], [0, 0, 1, 1], [], []>} : vector<16x32xbf16>, vector<32x32xbf16>, vector<16x32xf32> -> vector<16x32xf32>
    %cst_77 = arith.constant dense<0.000000e+00> : vector<16x32xf32>
    %520 = tpu.matmul %501, %494, %cst_77 {dimension_numbers = #tpu.dot_dimension_numbers<[1], [0], [0], [1], [0, 0, 1, 1], [], []>} : vector<16x8xbf16>, vector<8x32xbf16>, vector<16x32xf32> -> vector<16x32xf32>
    %521 = arith.addf %519, %520 : vector<16x32xf32>
    %522 = vector.broadcast %495 : vector<1x32xf32> to vector<16x32xf32>
    %523 = arith.addf %521, %522 : vector<16x32xf32>
    %524 = vector.shape_cast %523 : vector<16x32xf32> to vector<2x8x32xf32>
    %525 = vector.shape_cast %508 : vector<2x16xf32> to vector<2x1x16xf32>
    %526 = vector.broadcast %525 : vector<2x1x16xf32> to vector<2x8x16xf32>
    %527 = arith.mulf %526, %513 : vector<2x8x16xf32>
    %cst_78 = arith.constant dense<0.000000e+00> : vector<2x8xf32>
    %528 = vector.multi_reduction <add>, %527, %cst_78 [2] : vector<2x8x16xf32> to vector<2x8xf32>
    %c0_79 = arith.constant 0 : index
    %c0_80 = arith.constant 0 : index
    %529 = vector.load %arg4[%c0_79, %c0_80] : memref<2x8xf32, #tpu.memory_space<vmem>>, vector<2x8xf32>
    %530 = arith.addf %528, %529 : vector<2x8xf32>
    %cst_81 = arith.constant dense<0xFF800000> : vector<2xf32>
    %531 = vector.multi_reduction <maximumf>, %530, %cst_81 [1] : vector<2x8xf32> to vector<2xf32>
    %532 = vector.shape_cast %531 : vector<2xf32> to vector<2x1xf32>
    %533 = vector.broadcast %532 : vector<2x1xf32> to vector<2x8xf32>
    %534 = arith.subf %530, %533 : vector<2x8xf32>
    %535 = math.exp %534 : vector<2x8xf32>
    %cst_82 = arith.constant dense<0.000000e+00> : vector<2xf32>
    %536 = vector.multi_reduction <add>, %535, %cst_82 [1] : vector<2x8xf32> to vector<2xf32>
    %537 = vector.shape_cast %536 : vector<2xf32> to vector<2x1xf32>
    %538 = tpu.reciprocal %537 {approx = true} : vector<2x1xf32> -> vector<2x1xf32>
    %539 = vector.broadcast %538 : vector<2x1xf32> to vector<2x8xf32>
    %540 = arith.mulf %535, %539 : vector<2x8xf32>
    %541 = vector.shape_cast %540 : vector<2x8xf32> to vector<2x8x1xf32>
    %542 = vector.broadcast %541 : vector<2x8x1xf32> to vector<2x8x32xf32>
    %543 = arith.mulf %542, %524 : vector<2x8x32xf32>
    %cst_83 = arith.constant dense<0.000000e+00> : vector<2x32xf32>
    %544 = vector.multi_reduction <add>, %543, %cst_83 [1] : vector<2x8x32xf32> to vector<2x32xf32>
    %545 = arith.truncf %544 : vector<2x32xf32> to vector<2x32xbf16>
    %cst_84 = arith.constant dense<0.000000e+00> : vector<2x4xf32>
    %546 = tpu.matmul %545, %497, %cst_84 {dimension_numbers = #tpu.dot_dimension_numbers<[1], [0], [0], [1], [0, 0, 1, 1], [], []>} : vector<2x32xbf16>, vector<32x4xbf16>, vector<2x4xf32> -> vector<2x4xf32>
    %547 = vector.broadcast %498 : vector<1x4xf32> to vector<2x4xf32>
    %548 = arith.addf %546, %547 : vector<2x4xf32>
    %cst_85 = arith.constant dense<0xFF800000> : vector<2xf32>
    %549 = vector.multi_reduction <maximumf>, %548, %cst_85 [1] : vector<2x4xf32> to vector<2xf32>
    %550 = vector.shape_cast %549 : vector<2xf32> to vector<2x1xf32>
    %551 = vector.broadcast %550 : vector<2x1xf32> to vector<2x4xf32>
    %552 = arith.subf %548, %551 : vector<2x4xf32>
    %553 = math.exp %552 : vector<2x4xf32>
    %cst_86 = arith.constant dense<0.000000e+00> : vector<2xf32>
    %554 = vector.multi_reduction <add>, %553, %cst_86 [1] : vector<2x4xf32> to vector<2xf32>
    %555 = vector.shape_cast %554 : vector<2xf32> to vector<2x1xf32>
    %556 = math.log %555 : vector<2x1xf32>
    %557 = vector.broadcast %550 : vector<2x1xf32> to vector<2x4xf32>
    %558 = arith.subf %548, %557 : vector<2x4xf32>
    %559 = vector.broadcast %556 : vector<2x1xf32> to vector<2x4xf32>
    %560 = arith.subf %558, %559 : vector<2x4xf32>
    %c0_87 = arith.constant 0 : index
    %c0_88 = arith.constant 0 : index
    %561 = vector.load %arg5[%c0_87, %c0_88] : memref<2x4xf32, #tpu.memory_space<vmem>>, vector<2x4xf32>
    tpu.vector_store %arg5[%c0_87, %c0_88], %560 {strides = array<i32>} : memref<2x4xf32, #tpu.memory_space<vmem>>, vector<2x4xf32>,
    return
  }
}

</mosaic_0001>

<llo_original>
// kernel: forward.1
$region0: #{forward.1}
  #allocation0 [shape = 'u32[]', space=smem, size = 0x4, offset = 0x4, fixed_abs, tag = 'smem constant byte address 0x4 - core index']
  #allocation1 [shape = 'u32[144,128]{1,0:T(1,128)}', space=vmem, size = 0x12000, scoped, tag = 'internal scratch']
  %s0 = inlined_call_operand.vmem [shape: f32[16,192], index: 0, kind: input, shape index: {}]
  %s1 = inlined_call_operand.vmem [shape: f32[504,128], index: 1, kind: input, shape index: {}]
  %s2 = inlined_call_operand.vmem [shape: f32[2,8], index: 2, kind: input, shape index: {}]
  %s3 = inlined_call_operand.vmem [shape: f32[2,8,8], index: 3, kind: input, shape index: {}]
  %s4 = inlined_call_operand.vmem [shape: f32[2,8], index: 4, kind: input, shape index: {}]
  %s5 = inlined_call_operand.hbm [shape: f32[2,4], index: 5, kind: output, shape index: {}]
  %s6 = sld [smem:[#allocation0]]
  $region30: #{forward.1} parent=0
    _
  %s8 = ssub.s32 1, %s6
  %s9 = scalar_select 0, %s8, %s6
  $region1: #{forward.1} parent=0
    #allocation2 [shape = 'u8[1024]{0}', space=vmem, size = 0x400, scoped, tag = 'output window, operand 0, single buffered']
    #allocation3 [shape = 's32[1]{0}', space=sflag, size = 0x4, scoped, tag = 'scoped memory for forward.1']
    %10 = vsyncpa [#allocation3], 0
    // Predicated region
    $region2: #{forward.1} parent=1 // pred_check
      _
    $region3: #{forward.1} parent=1 // pred_check_branch
      %12 = sbr.rel (0) target = $region5
    $region4: #{forward.1} parent=1 // pred_region
      _
    $region5: #{forward.1} parent=1 // pred_fallthru
      _
    // Predicated region
    $region6: #{forward.1} parent=1 // pred_check
      _
    $region7: #{forward.1} parent=1 // pred_check_branch
      %14 = sbr.rel (0) target = $region9
    $region8: #{forward.1} parent=1 // pred_region
      _
    $region9: #{forward.1} parent=1 // pred_fallthru
      _
    // Predicated region
    $region10: #{forward.1} parent=1 // pred_check
      _
    $region11: #{forward.1} parent=1 // pred_check_branch
      %16 = sbr.rel (0) target = $region13
    $region12: #{forward.1} parent=1 // pred_region
      _
    $region13: #{forward.1} parent=1 // pred_fallthru
      _
    // Predicated region
    $region14: #{forward.1} parent=1 // pred_check
      _
    $region15: #{forward.1} parent=1 // pred_check_branch
      %18 = sbr.rel (0) target = $region17
    $region16: #{forward.1} parent=1 // pred_region
      _
    $region17: #{forward.1} parent=1 // pred_fallthru
      _
    // Predicated region
    $region18: #{forward.1} parent=1 // pred_check
      _
    $region19: #{forward.1} parent=1 // pred_check_branch
      %20 = sbr.rel (0) target = $region21
    $region20: #{forward.1} parent=1 // pred_region
      _
    $region21: #{forward.1} parent=1 // pred_fallthru
      _
    %v22 = vld [vmem:[%s0] sm:$0xff]
    %v23 = vld [vmem:[%s0 + $0x8] sm:$0xff]
    %v24 = vld [vmem:[%s0 + $0x10] sm:$0xff]
    %v25 = vld [vmem:[%s0 + $0x18] sm:$0xff]
    %v26 = vld [vmem:[%s1 + $0x90] sm:$0xff]
    %v27 = vld [vmem:[%s1 + $0x98] sm:$0xff]
    %v28 = vld [vmem:[%s1 + $0xa0] sm:$0xff]
    %v29 = vld [vmem:[%s1 + $0xa8] sm:$0xff]
    %v30 = vld [vmem:[%s1 + $0xb0] sm:$0xff]
    %v31 = vld [vmem:[%s1 + $0xb8] sm:$0xff]
    %v32 = vld [vmem:[%s1 + $0xc0] sm:$0xff]
    %v33 = vld [vmem:[%s1 + $0xc8] sm:$0xff]
    %v34 = vld [vmem:[%s1 + $0xd0] sm:$0xff]
    %v35 = vld [vmem:[%s1 + $0xd8] sm:$0xff]
    %v36 = vld [vmem:[%s1 + $0xe0] sm:$0xff]
    %v37 = vld [vmem:[%s1 + $0xe8] sm:$0xff]
    %v38 = vld [vmem:[%s1 + $0xf0] sm:$0xff]
    %v39 = vld [vmem:[%s1 + $0xf8] sm:$0xff]
    %v40 = vld [vmem:[%s1 + $0x100] sm:$0xff]
    %v41 = vld [vmem:[%s1 + $0x108] sm:$0xff]
    %v42 = vld [vmem:[%s1 + $0x110] sm:$0xff]
    %v43 = vld [vmem:[%s1 + $0x118] sm:$0xff]
    %v44 = vld [vmem:[%s1 + $0x120] sm:$0xff]
    %v45 = vld [vmem:[%s1 + $0x128] sm:$0xff]
    %v46 = vld [vmem:[%s1 + $0x130] sm:$0xff]
    %v47 = vld [vmem:[%s1 + $0x138] sm:$0xff]
    %v48 = vld [vmem:[%s1 + $0x140] sm:$0xff]
    %v49 = vld [vmem:[%s1 + $0x148] sm:$0xff]
    %v50 = vpack.c.bf16 %v27, %v26
    %v51 = vpack.c.bf16 %v29, %v28
    %v52 = vpack.c.bf16 %v31, %v30
    %v53 = vpack.c.bf16 %v33, %v32
    %v54 = vpack.c.bf16 %v35, %v34
    %v55 = vpack.c.bf16 %v37, %v36
    %v56 = vpack.c.bf16 %v39, %v38
    %v57 = vpack.c.bf16 %v41, %v40
    %v58 = vpack.c.bf16 %v43, %v42
    %v59 = vpack.c.bf16 %v45, %v44
    %v60 = vpack.c.bf16 %v47, %v46
    %v61 = vpack.c.bf16 %v49, %v48
    %v62 = vld [vmem:[%s1 + $0x150] sm:$0x1]
    %v63 = vpack.c.bf16 %v24, %v22
    %v64 = vpack.c.bf16 %v25, %v23
    %v65 = vlaneseq
    %v66 = vshrl.u32 %v65, 7
    %v67 = vsub.s32 0, %v66
    %v68 = vrot.slane %v62, %v67
    %vm69 = vcmask 523264
    %v71 = vsel %vm69, %v64, 0
    %73 = vmatprep.subr.bf16.mxu0 0
    %74 = vmatpush1.bf16.msra.mxu0 %v57
    %75 = vmatprep.subr.bf16.mxu0 0
    %76 = vmatpush1.bf16.msra.mxu0 %v56
    %77 = vmatprep.subr.bf16.mxu0 0
    %78 = vmatpush1.bf16.msra.mxu0 %v55
    %79 = vmatprep.subr.bf16.mxu0 0
    %80 = vmatpush1.bf16.msra.mxu0 %v54
    %81 = vmatprep.subr.bf16.mxu0 0
    %82 = vmatpush1.bf16.msra.mxu0 %v53
    %83 = vmatprep.subr.bf16.mxu0 0
    %84 = vmatpush1.bf16.msra.mxu0 %v52
    %85 = vmatprep.subr.bf16.mxu0 0
    %86 = vmatpush1.bf16.msra.mxu0 %v51
    %87 = vmatprep.subr.bf16.mxu0 0
    %88 = vmatpush1.bf16.msra.mxu0 %v50
    %89 = vmatprep.subr.bf16.mxu0 0
    %90 = vmatpush2.bf16.msra.mxu0 0
    %91 = vmatprep.subr.bf16.mxu0 0
    %92 = vmatpush2.bf16.msra.mxu0 0
    %93 = vmatprep.subr.bf16.mxu0 0
    %94 = vmatpush2.bf16.msra.mxu0 0
    %95 = vmatprep.subr.bf16.mxu0 0
    %96 = vmatpush2.bf16.msra.mxu0 0
    %97 = vmatprep.subr.bf16.mxu0 0
    %98 = vmatpush2.bf16.msra.mxu0 %v61
    %99 = vmatprep.subr.bf16.mxu0 0
    %100 = vmatpush2.bf16.msra.mxu0 %v60
    %101 = vmatprep.subr.bf16.mxu0 0
    %102 = vmatpush2.bf16.msra.mxu0 %v59
    %103 = vmatprep.subr.bf16.mxu0 0
    %104 = vmatpush2.bf16.msra.mxu0 %v58
    %105 = vmatprep.mubr.bf16.mxu0 %v71
    %106 = vmatmul.mubr.bf16.gmra.mxu0 %v63
    %v107 = vpop.f32.mrf.mxu0
    %v108 = vadd.f32 %v68, %v107
    %v109 = vpop.f32.mrf.mxu0
    %v110 = vpop.f32.mrf.mxu0
    %v111 = vadd.f32 %v68, %v110
    %v112 = vpop.f32.mrf.mxu0
    %113 = vdwg.mxu0
    %v114 = vlaneseq
    %v115 = vand.u32 %v114, 127
    %vm116 = vcmp.lt.s32.totalorder %v115, 0
    %v117 = vsub.s32 0, %v115
    %v118 = vsel %vm116, %v117, %v115
    %v119 = vshrl.u32 %v118, 5
    %v120 = vand.u32 %v118, 31
    %v121 = vsub.s32 0, %v120
    %v122 = vsel %vm116, %v121, %v120
    %vm123 = vcmp.ne.s32.totalorder %v122, 0
    %vm124 = vcmp.lt.s32.totalorder %v122, 0
    %vm125 = vmand %vm124, %vm123
    %v126 = vadd.s32 %v122, 32
    %v127 = vsel %vm125, %v126, %v122
    %vm128 = vcmp.lt.s32.totalorder %v127, 16
    %vm129 = vcmp.lt.s32.totalorder %v115, 16
    %v130 = vld [vmem:[%s1] sm:$0xff]
    %v131 = vld [vmem:[%s1 + $0x8] sm:$0xff]
    %v132 = vld [vmem:[%s1 + $0x10] sm:$0xff]
    %v133 = vld [vmem:[%s1 + $0x18] sm:$0xff]
    %v134 = vpack.c.bf16 %v131, %v130
    %v135 = vpack.c.bf16 %v133, %v132
    %v136 = vld [vmem:[%s1 + $0x40] sm:$0xff]
    %v137 = vld [vmem:[%s1 + $0x48] sm:$0xff]
    %v138 = vld [vmem:[%s1 + $0x50] sm:$0xff]
    %v139 = vld [vmem:[%s1 + $0x58] sm:$0xff]
    %v140 = vpack.c.bf16 %v137, %v136
    %v141 = vpack.c.bf16 %v139, %v138
    %v142 = vld [vmem:[%s1 + $0x80] sm:$0x1]
    %v143 = vpack.c.bf16 %v111, %v108
    %v144 = vlaneseq
    %v145 = vshrl.u32 %v144, 7
    %v146 = vsub.s32 0, %v145
    %v147 = vrot.slane %v142, %v146
    %vm148 = vcmask 261120
    %v150 = vsel %vm148, %v143, 0
    %152 = vmatprep.subr.bf16.mxu0 0
    %153 = vmatpush1.bf16.msra.mxu0 0
    %154 = vmatprep.subr.bf16.mxu0 0
    %155 = vmatpush1.bf16.msra.mxu0 0
    %156 = vmatprep.subr.bf16.mxu0 0
    %157 = vmatpush1.bf16.msra.mxu0 0
    %158 = vmatprep.subr.bf16.mxu0 0
    %159 = vmatpush1.bf16.msra.mxu0 0
    %160 = vmatprep.subr.bf16.mxu0 0
    %161 = vmatpush1.bf16.msra.mxu0 0
    %162 = vmatprep.subr.bf16.mxu0 0
    %163 = vmatpush1.bf16.msra.mxu0 0
    %164 = vmatprep.subr.bf16.mxu0 0
    %165 = vmatpush1.bf16.msra.mxu0 %v135
    %166 = vmatprep.subr.bf16.mxu0 0
    %167 = vmatpush1.bf16.msra.mxu0 %v134
    %168 = vmatprep.subr.bf16.mxu0 0
    %169 = vmatpush2.bf16.msra.mxu0 0
    %170 = vmatprep.subr.bf16.mxu0 0
    %171 = vmatpush2.bf16.msra.mxu0 0
    %172 = vmatprep.subr.bf16.mxu0 0
    %173 = vmatpush2.bf16.msra.mxu0 0
    %174 = vmatprep.subr.bf16.mxu0 0
    %175 = vmatpush2.bf16.msra.mxu0 0
    %176 = vmatprep.subr.bf16.mxu0 0
    %177 = vmatpush2.bf16.msra.mxu0 0
    %178 = vmatprep.subr.bf16.mxu0 0
    %179 = vmatpush2.bf16.msra.mxu0 0
    %180 = vmatprep.subr.bf16.mxu0 0
    %181 = vmatpush2.bf16.msra.mxu0 0
    %182 = vmatprep.subr.bf16.mxu0 0
    %183 = vmatpush2.bf16.msra.mxu0 0
    %184 = vmatprep.mubr.bf16.mxu0 0
    %185 = vmatmul.mubr.bf16.gmra.mxu0 %v150
    %v186 = vpop.f32.mrf.mxu0
    %v187 = vadd.f32 %v147, %v186
    %v188 = vpop.f32.mrf.mxu0
    %v189 = vpop.f32.mrf.mxu0
    %v190 = vadd.f32 %v147, %v189
    %v191 = vpop.f32.mrf.mxu0
    %192 = vdwg.mxu0
    %v195 = vrot.slane %v190, 7
    %vm196 = vcmask 1041409
    %v197 = vsel %vm196, %v195, %v187
    %v199 = vrot.slane %v187, 7
    %v200 = vrot.slane %v190, 6
    %v201 = vsel %vm196, %v200, %v199
    %v203 = vsel %vm128, %v197, %v201
    %v205 = vsel %vm148, 0, 0
    %207 = vmatprep.subr.bf16.mxu0 0
    %208 = vmatpush1.bf16.msra.mxu0 0
    %209 = vmatprep.subr.bf16.mxu0 0
    %210 = vmatpush1.bf16.msra.mxu0 0
    %211 = vmatprep.subr.bf16.mxu0 0
    %212 = vmatpush1.bf16.msra.mxu0 0
    %213 = vmatprep.subr.bf16.mxu0 0
    %214 = vmatpush1.bf16.msra.mxu0 0
    %215 = vmatprep.subr.bf16.mxu0 0
    %216 = vmatpush1.bf16.msra.mxu0 0
    %217 = vmatprep.subr.bf16.mxu0 0
    %218 = vmatpush1.bf16.msra.mxu0 0
    %219 = vmatprep.subr.bf16.mxu0 0
    %220 = vmatpush1.bf16.msra.mxu0 %v141
    %221 = vmatprep.subr.bf16.mxu0 0
    %222 = vmatpush1.bf16.msra.mxu0 %v140
    %223 = vmatprep.subr.bf16.mxu0 0
    %224 = vmatpush2.bf16.msra.mxu0 0
    %225 = vmatprep.subr.bf16.mxu0 0
    %226 = vmatpush2.bf16.msra.mxu0 0
    %227 = vmatprep.subr.bf16.mxu0 0
    %228 = vmatpush2.bf16.msra.mxu0 0
    %229 = vmatprep.subr.bf16.mxu0 0
    %230 = vmatpush2.bf16.msra.mxu0 0
    %231 = vmatprep.subr.bf16.mxu0 0
    %232 = vmatpush2.bf16.msra.mxu0 0
    %233 = vmatprep.subr.bf16.mxu0 0
    %234 = vmatpush2.bf16.msra.mxu0 0
    %235 = vmatprep.subr.bf16.mxu0 0
    %236 = vmatpush2.bf16.msra.mxu0 0
    %237 = vmatprep.subr.bf16.mxu0 0
    %238 = vmatpush2.bf16.msra.mxu0 0
    %239 = vmatprep.mubr.bf16.mxu0 0
    %240 = vmatmul.mubr.bf16.gmra.mxu0 %v205
    %v241 = vpop.f32.mrf.mxu0
    %v242 = vadd.f32 0.0, %v241
    %v243 = vpop.f32.mrf.mxu0
    %v244 = vpop.f32.mrf.mxu0
    %v245 = vpop.f32.mrf.mxu0
    %246 = vdwg.mxu0
    %v247 = vadd.f32 %v203, %v242
    %v248 = vxor.u32 %v247, 2147483648
    %v249 = vmul.f32 %v248, 1.442695
    %v250 = vpow.pop %v249
    %v251 = vadd.f32 %v250, 1.0
    %v252 = vrcp.pop %v251
    %v253 = vmul.f32 1.0, %v252
    %v254 = vtanh.pop %v247
    %v255 = vmul.f32 %v253, 0.0
    %257 = vrot.lane.b32.xlu0 %v254, 64
    %v258 = vpop.permute.xlu0 %257
    %v260 = vmul.f32 %v253, %v258
    %262 = vrot.lane.b32.xlu0 %v260, 32
    %v263 = vpop.permute.xlu0 %262
    %v265 = vadd.f32 %v255, %v263
    %v266 = vtanh.pop %v265
    %268 = vrot.lane.b32.xlu0 %v266, 64
    %v269 = vpop.permute.xlu0 %268
    %v271 = vmul.f32 %v253, %v269
    %v272 = vrot.slane %v187, 1
    %v273 = vsel %vm196, %v190, %v272
    %v275 = vrot.slane %v187, 6
    %v276 = vrot.slane %v190, 5
    %v277 = vsel %vm196, %v276, %v275
    %v279 = vsel %vm128, %v273, %v277
    %v280 = vpack.c.bf16 %v271, %v271
    %282 = vrot.lane.b32.xlu0 %v280, 32
    %v283 = vpop.permute.xlu0 %282
    %v285 = vsel %vm148, %v283, 0
    %287 = vmatprep.subr.bf16.mxu0 0
    %288 = vmatpush1.bf16.msra.mxu0 0
    %289 = vmatprep.subr.bf16.mxu0 0
    %290 = vmatpush1.bf16.msra.mxu0 0
    %291 = vmatprep.subr.bf16.mxu0 0
    %292 = vmatpush1.bf16.msra.mxu0 0
    %293 = vmatprep.subr.bf16.mxu0 0
    %294 = vmatpush1.bf16.msra.mxu0 0
    %295 = vmatprep.subr.bf16.mxu0 0
    %296 = vmatpush1.bf16.msra.mxu0 0
    %297 = vmatprep.subr.bf16.mxu0 0
    %298 = vmatpush1.bf16.msra.mxu0 0
    %299 = vmatprep.subr.bf16.mxu0 0
    %300 = vmatpush1.bf16.msra.mxu0 %v141
    %301 = vmatprep.subr.bf16.mxu0 0
    %302 = vmatpush1.bf16.msra.mxu0 %v140
    %303 = vmatprep.subr.bf16.mxu0 0
    %304 = vmatpush2.bf16.msra.mxu0 0
    %305 = vmatprep.subr.bf16.mxu0 0
    %306 = vmatpush2.bf16.msra.mxu0 0
    %307 = vmatprep.subr.bf16.mxu0 0
    %308 = vmatpush2.bf16.msra.mxu0 0
    %309 = vmatprep.subr.bf16.mxu0 0
    %310 = vmatpush2.bf16.msra.mxu0 0
    %311 = vmatprep.subr.bf16.mxu0 0
    %312 = vmatpush2.bf16.msra.mxu0 0
    %313 = vmatprep.subr.bf16.mxu0 0
    %314 = vmatpush2.bf16.msra.mxu0 0
    %315 = vmatprep.subr.bf16.mxu0 0
    %316 = vmatpush2.bf16.msra.mxu0 0
    %317 = vmatprep.subr.bf16.mxu0 0
    %318 = vmatpush2.bf16.msra.mxu0 0
    %319 = vmatprep.mubr.bf16.mxu0 0
    %320 = vmatmul.mubr.bf16.gmra.mxu0 %v285
    %v321 = vpop.f32.mrf.mxu0
    %v322 = vadd.f32 0.0, %v321
    %v323 = vpop.f32.mrf.mxu0
    %v324 = vpop.f32.mrf.mxu0
    %v325 = vpop.f32.mrf.mxu0
    %326 = vdwg.mxu0
    %v327 = vadd.f32 %v279, %v322
    %v328 = vxor.u32 %v327, 2147483648
    %v329 = vmul.f32 %v328, 1.442695
    %v330 = vpow.pop %v329
    %v331 = vadd.f32 %v330, 1.0
    %v332 = vrcp.pop %v331
    %v333 = vmul.f32 1.0, %v332
    %v334 = vtanh.pop %v327
    %v335 = vmul.f32 %v333, %v265
    %337 = vrot.lane.b32.xlu0 %v334, 64
    %v338 = vpop.permute.xlu0 %337
    %v340 = vmul.f32 %v333, %v338
    %342 = vrot.lane.b32.xlu0 %v340, 32
    %v343 = vpop.permute.xlu0 %342
    %v345 = vadd.f32 %v335, %v343
    %v346 = vtanh.pop %v345
    %348 = vrot.lane.b32.xlu0 %v346, 64
    %v349 = vpop.permute.xlu0 %348
    %v351 = vmul.f32 %v333, %v349
    %v352 = vrot.slane %v187, 2
    %v353 = vrot.slane %v190, 1
    %v354 = vsel %vm196, %v353, %v352
    %v356 = vrot.slane %v187, 5
    %v357 = vrot.slane %v190, 4
    %v358 = vsel %vm196, %v357, %v356
    %v360 = vsel %vm128, %v354, %v358
    %v361 = vpack.c.bf16 %v351, %v351
    %363 = vrot.lane.b32.xlu0 %v361, 32
    %v364 = vpop.permute.xlu0 %363
    %v366 = vsel %vm148, %v364, 0
    %368 = vmatprep.subr.bf16.mxu0 0
    %369 = vmatpush1.bf16.msra.mxu0 0
    %370 = vmatprep.subr.bf16.mxu0 0
    %371 = vmatpush1.bf16.msra.mxu0 0
    %372 = vmatprep.subr.bf16.mxu0 0
    %373 = vmatpush1.bf16.msra.mxu0 0
    %374 = vmatprep.subr.bf16.mxu0 0
    %375 = vmatpush1.bf16.msra.mxu0 0
    %376 = vmatprep.subr.bf16.mxu0 0
    %377 = vmatpush1.bf16.msra.mxu0 0
    %378 = vmatprep.subr.bf16.mxu0 0
    %379 = vmatpush1.bf16.msra.mxu0 0
    %380 = vmatprep.subr.bf16.mxu0 0
    %381 = vmatpush1.bf16.msra.mxu0 %v141
    %382 = vmatprep.subr.bf16.mxu0 0
    %383 = vmatpush1.bf16.msra.mxu0 %v140
    %384 = vmatprep.subr.bf16.mxu0 0
    %385 = vmatpush2.bf16.msra.mxu0 0
    %386 = vmatprep.subr.bf16.mxu0 0
    %387 = vmatpush2.bf16.msra.mxu0 0
    %388 = vmatprep.subr.bf16.mxu0 0
    %389 = vmatpush2.bf16.msra.mxu0 0
    %390 = vmatprep.subr.bf16.mxu0 0
    %391 = vmatpush2.bf16.msra.mxu0 0
    %392 = vmatprep.subr.bf16.mxu0 0
    %393 = vmatpush2.bf16.msra.mxu0 0
    %394 = vmatprep.subr.bf16.mxu0 0
    %395 = vmatpush2.bf16.msra.mxu0 0
    %396 = vmatprep.subr.bf16.mxu0 0
    %397 = vmatpush2.bf16.msra.mxu0 0
    %398 = vmatprep.subr.bf16.mxu0 0
    %399 = vmatpush2.bf16.msra.mxu0 0
    %400 = vmatprep.mubr.bf16.mxu0 0
    %401 = vmatmul.mubr.bf16.gmra.mxu0 %v366
    %v402 = vpop.f32.mrf.mxu0
    %v403 = vadd.f32 0.0, %v402
    %v404 = vpop.f32.mrf.mxu0
    %v405 = vpop.f32.mrf.mxu0
    %v406 = vpop.f32.mrf.mxu0
    %407 = vdwg.mxu0
    %v408 = vadd.f32 %v360, %v403
    %v409 = vxor.u32 %v408, 2147483648
    %v410 = vmul.f32 %v409, 1.442695
    %v411 = vpow.pop %v410
    %v412 = vadd.f32 %v411, 1.0
    %v413 = vrcp.pop %v412
    %v414 = vmul.f32 1.0, %v413
    %v415 = vtanh.pop %v408
    %v416 = vmul.f32 %v414, %v345
    %418 = vrot.lane.b32.xlu0 %v415, 64
    %v419 = vpop.permute.xlu0 %418
    %v421 = vmul.f32 %v414, %v419
    %423 = vrot.lane.b32.xlu0 %v421, 32
    %v424 = vpop.permute.xlu0 %423
    %v426 = vadd.f32 %v416, %v424
    %v427 = vtanh.pop %v426
    %429 = vrot.lane.b32.xlu0 %v427, 64
    %v430 = vpop.permute.xlu0 %429
    %v432 = vmul.f32 %v414, %v430
    %v433 = vrot.slane %v187, 3
    %v434 = vrot.slane %v190, 2
    %v435 = vsel %vm196, %v434, %v433
    %v437 = vrot.slane %v187, 4
    %v438 = vrot.slane %v190, 3
    %v439 = vsel %vm196, %v438, %v437
    %v441 = vsel %vm128, %v435, %v439
    %v442 = vpack.c.bf16 %v432, %v432
    %444 = vrot.lane.b32.xlu0 %v442, 32
    %v445 = vpop.permute.xlu0 %444
    %v447 = vsel %vm148, %v445, 0
    %449 = vmatprep.subr.bf16.mxu0 0
    %450 = vmatpush1.bf16.msra.mxu0 0
    %451 = vmatprep.subr.bf16.mxu0 0
    %452 = vmatpush1.bf16.msra.mxu0 0
    %453 = vmatprep.subr.bf16.mxu0 0
    %454 = vmatpush1.bf16.msra.mxu0 0
    %455 = vmatprep.subr.bf16.mxu0 0
    %456 = vmatpush1.bf16.msra.mxu0 0
    %457 = vmatprep.subr.bf16.mxu0 0
    %458 = vmatpush1.bf16.msra.mxu0 0
    %459 = vmatprep.subr.bf16.mxu0 0
    %460 = vmatpush1.bf16.msra.mxu0 0
    %461 = vmatprep.subr.bf16.mxu0 0
    %462 = vmatpush1.bf16.msra.mxu0 %v141
    %463 = vmatprep.subr.bf16.mxu0 0
    %464 = vmatpush1.bf16.msra.mxu0 %v140
    %465 = vmatprep.subr.bf16.mxu0 0
    %466 = vmatpush2.bf16.msra.mxu0 0
    %467 = vmatprep.subr.bf16.mxu0 0
    %468 = vmatpush2.bf16.msra.mxu0 0
    %469 = vmatprep.subr.bf16.mxu0 0
    %470 = vmatpush2.bf16.msra.mxu0 0
    %471 = vmatprep.subr.bf16.mxu0 0
    %472 = vmatpush2.bf16.msra.mxu0 0
    %473 = vmatprep.subr.bf16.mxu0 0
    %474 = vmatpush2.bf16.msra.mxu0 0
    %475 = vmatprep.subr.bf16.mxu0 0
    %476 = vmatpush2.bf16.msra.mxu0 0
    %477 = vmatprep.subr.bf16.mxu0 0
    %478 = vmatpush2.bf16.msra.mxu0 0
    %479 = vmatprep.subr.bf16.mxu0 0
    %480 = vmatpush2.bf16.msra.mxu0 0
    %481 = vmatprep.mubr.bf16.mxu0 0
    %482 = vmatmul.mubr.bf16.gmra.mxu0 %v447
    %v483 = vpop.f32.mrf.mxu0
    %v484 = vadd.f32 0.0, %v483
    %v485 = vpop.f32.mrf.mxu0
    %v486 = vpop.f32.mrf.mxu0
    %v487 = vpop.f32.mrf.mxu0
    %488 = vdwg.mxu0
    %v489 = vadd.f32 %v441, %v484
    %v490 = vxor.u32 %v489, 2147483648
    %v491 = vmul.f32 %v490, 1.442695
    %v492 = vpow.pop %v491
    %v493 = vadd.f32 %v492, 1.0
    %v494 = vrcp.pop %v493
    %v495 = vmul.f32 1.0, %v494
    %v496 = vtanh.pop %v489
    %v497 = vmul.f32 %v495, %v426
    %499 = vrot.lane.b32.xlu0 %v496, 64
    %v500 = vpop.permute.xlu0 %499
    %v502 = vmul.f32 %v495, %v500
    %504 = vrot.lane.b32.xlu0 %v502, 32
    %v505 = vpop.permute.xlu0 %504
    %v507 = vadd.f32 %v497, %v505
    %v508 = vtanh.pop %v507
    %510 = vrot.lane.b32.xlu0 %v508, 64
    %v511 = vpop.permute.xlu0 %510
    %v513 = vmul.f32 %v495, %v511
    %v514 = vsel %vm128, %v439, %v435
    %v515 = vpack.c.bf16 %v513, %v513
    %517 = vrot.lane.b32.xlu0 %v515, 32
    %v518 = vpop.permute.xlu0 %517
    %v520 = vsel %vm148, %v518, 0
    %522 = vmatprep.subr.bf16.mxu0 0
    %523 = vmatpush1.bf16.msra.mxu0 0
    %524 = vmatprep.subr.bf16.mxu0 0
    %525 = vmatpush1.bf16.msra.mxu0 0
    %526 = vmatprep.subr.bf16.mxu0 0
    %527 = vmatpush1.bf16.msra.mxu0 0
    %528 = vmatprep.subr.bf16.mxu0 0
    %529 = vmatpush1.bf16.msra.mxu0 0
    %530 = vmatprep.subr.bf16.mxu0 0
    %531 = vmatpush1.bf16.msra.mxu0 0
    %532 = vmatprep.subr.bf16.mxu0 0
    %533 = vmatpush1.bf16.msra.mxu0 0
    %534 = vmatprep.subr.bf16.mxu0 0
    %535 = vmatpush1.bf16.msra.mxu0 %v141
    %536 = vmatprep.subr.bf16.mxu0 0
    %537 = vmatpush1.bf16.msra.mxu0 %v140
    %538 = vmatprep.subr.bf16.mxu0 0
    %539 = vmatpush2.bf16.msra.mxu0 0
    %540 = vmatprep.subr.bf16.mxu0 0
    %541 = vmatpush2.bf16.msra.mxu0 0
    %542 = vmatprep.subr.bf16.mxu0 0
    %543 = vmatpush2.bf16.msra.mxu0 0
    %544 = vmatprep.subr.bf16.mxu0 0
    %545 = vmatpush2.bf16.msra.mxu0 0
    %546 = vmatprep.subr.bf16.mxu0 0
    %547 = vmatpush2.bf16.msra.mxu0 0
    %548 = vmatprep.subr.bf16.mxu0 0
    %549 = vmatpush2.bf16.msra.mxu0 0
    %550 = vmatprep.subr.bf16.mxu0 0
    %551 = vmatpush2.bf16.msra.mxu0 0
    %552 = vmatprep.subr.bf16.mxu0 0
    %553 = vmatpush2.bf16.msra.mxu0 0
    %554 = vmatprep.mubr.bf16.mxu0 0
    %555 = vmatmul.mubr.bf16.gmra.mxu0 %v520
    %v556 = vpop.f32.mrf.mxu0
    %v557 = vadd.f32 0.0, %v556
    %v558 = vpop.f32.mrf.mxu0
    %v559 = vpop.f32.mrf.mxu0
    %v560 = vpop.f32.mrf.mxu0
    %561 = vdwg.mxu0
    %v562 = vadd.f32 %v514, %v557
    %v563 = vxor.u32 %v562, 2147483648
    %v564 = vmul.f32 %v563, 1.442695
    %v565 = vpow.pop %v564
    %v566 = vadd.f32 %v565, 1.0
    %v567 = vrcp.pop %v566
    %v568 = vmul.f32 1.0, %v567
    %v569 = vtanh.pop %v562
    %v570 = vmul.f32 %v568, %v507
    %572 = vrot.lane.b32.xlu0 %v569, 64
    %v573 = vpop.permute.xlu0 %572
    %v575 = vmul.f32 %v568, %v573
    %577 = vrot.lane.b32.xlu0 %v575, 32
    %v578 = vpop.permute.xlu0 %577
    %v580 = vadd.f32 %v570, %v578
    %v581 = vtanh.pop %v580
    %583 = vrot.lane.b32.xlu0 %v581, 64
    %v584 = vpop.permute.xlu0 %583
    %v586 = vmul.f32 %v568, %v584
    %v587 = vsel %vm128, %v358, %v354
    %v588 = vpack.c.bf16 %v586, %v586
    %590 = vrot.lane.b32.xlu0 %v588, 32
    %v591 = vpop.permute.xlu0 %590
    %v593 = vsel %vm148, %v591, 0
    %595 = vmatprep.subr.bf16.mxu0 0
    %596 = vmatpush1.bf16.msra.mxu0 0
    %597 = vmatprep.subr.bf16.mxu0 0
    %598 = vmatpush1.bf16.msra.mxu0 0
    %599 = vmatprep.subr.bf16.mxu0 0
    %600 = vmatpush1.bf16.msra.mxu0 0
    %601 = vmatprep.subr.bf16.mxu0 0
    %602 = vmatpush1.bf16.msra.mxu0 0
    %603 = vmatprep.subr.bf16.mxu0 0
    %604 = vmatpush1.bf16.msra.mxu0 0
    %605 = vmatprep.subr.bf16.mxu0 0
    %606 = vmatpush1.bf16.msra.mxu0 0
    %607 = vmatprep.subr.bf16.mxu0 0
    %608 = vmatpush1.bf16.msra.mxu0 %v141
    %609 = vmatprep.subr.bf16.mxu0 0
    %610 = vmatpush1.bf16.msra.mxu0 %v140
    %611 = vmatprep.subr.bf16.mxu0 0
    %612 = vmatpush2.bf16.msra.mxu0 0
    %613 = vmatprep.subr.bf16.mxu0 0
    %614 = vmatpush2.bf16.msra.mxu0 0
    %615 = vmatprep.subr.bf16.mxu0 0
    %616 = vmatpush2.bf16.msra.mxu0 0
    %617 = vmatprep.subr.bf16.mxu0 0
    %618 = vmatpush2.bf16.msra.mxu0 0
    %619 = vmatprep.subr.bf16.mxu0 0
    %620 = vmatpush2.bf16.msra.mxu0 0
    %621 = vmatprep.subr.bf16.mxu0 0
    %622 = vmatpush2.bf16.msra.mxu0 0
    %623 = vmatprep.subr.bf16.mxu0 0
    %624 = vmatpush2.bf16.msra.mxu0 0
    %625 = vmatprep.subr.bf16.mxu0 0
    %626 = vmatpush2.bf16.msra.mxu0 0
    %627 = vmatprep.mubr.bf16.mxu0 0
    %628 = vmatmul.mubr.bf16.gmra.mxu0 %v593
    %v629 = vpop.f32.mrf.mxu0
    %v630 = vadd.f32 0.0, %v629
    %v631 = vpop.f32.mrf.mxu0
    %v632 = vpop.f32.mrf.mxu0
    %v633 = vpop.f32.mrf.mxu0
    %634 = vdwg.mxu0
    %v635 = vadd.f32 %v587, %v630
    %v636 = vxor.u32 %v635, 2147483648
    %v637 = vmul.f32 %v636, 1.442695
    %v638 = vpow.pop %v637
    %v639 = vadd.f32 %v638, 1.0
    %v640 = vrcp.pop %v639
    %v641 = vmul.f32 1.0, %v640
    %v642 = vtanh.pop %v635
    %v643 = vmul.f32 %v641, %v580
    %645 = vrot.lane.b32.xlu0 %v642, 64
    %v646 = vpop.permute.xlu0 %645
    %v648 = vmul.f32 %v641, %v646
    %650 = vrot.lane.b32.xlu0 %v648, 32
    %v651 = vpop.permute.xlu0 %650
    %v653 = vadd.f32 %v643, %v651
    %v654 = vtanh.pop %v653
    %656 = vrot.lane.b32.xlu0 %v654, 64
    %v657 = vpop.permute.xlu0 %656
    %v659 = vmul.f32 %v641, %v657
    %v660 = vsel %vm128, %v277, %v273
    %v661 = vpack.c.bf16 %v659, %v659
    %663 = vrot.lane.b32.xlu0 %v661, 32
    %v664 = vpop.permute.xlu0 %663
    %v666 = vsel %vm148, %v664, 0
    %668 = vmatprep.subr.bf16.mxu0 0
    %669 = vmatpush1.bf16.msra.mxu0 0
    %670 = vmatprep.subr.bf16.mxu0 0
    %671 = vmatpush1.bf16.msra.mxu0 0
    %672 = vmatprep.subr.bf16.mxu0 0
    %673 = vmatpush1.bf16.msra.mxu0 0
    %674 = vmatprep.subr.bf16.mxu0 0
    %675 = vmatpush1.bf16.msra.mxu0 0
    %676 = vmatprep.subr.bf16.mxu0 0
    %677 = vmatpush1.bf16.msra.mxu0 0
    %678 = vmatprep.subr.bf16.mxu0 0
    %679 = vmatpush1.bf16.msra.mxu0 0
    %680 = vmatprep.subr.bf16.mxu0 0
    %681 = vmatpush1.bf16.msra.mxu0 %v141
    %682 = vmatprep.subr.bf16.mxu0 0
    %683 = vmatpush1.bf16.msra.mxu0 %v140
    %684 = vmatprep.subr.bf16.mxu0 0
    %685 = vmatpush2.bf16.msra.mxu0 0
    %686 = vmatprep.subr.bf16.mxu0 0
    %687 = vmatpush2.bf16.msra.mxu0 0
    %688 = vmatprep.subr.bf16.mxu0 0
    %689 = vmatpush2.bf16.msra.mxu0 0
    %690 = vmatprep.subr.bf16.mxu0 0
    %691 = vmatpush2.bf16.msra.mxu0 0
    %692 = vmatprep.subr.bf16.mxu0 0
    %693 = vmatpush2.bf16.msra.mxu0 0
    %694 = vmatprep.subr.bf16.mxu0 0
    %695 = vmatpush2.bf16.msra.mxu0 0
    %696 = vmatprep.subr.bf16.mxu0 0
    %697 = vmatpush2.bf16.msra.mxu0 0
    %698 = vmatprep.subr.bf16.mxu0 0
    %699 = vmatpush2.bf16.msra.mxu0 0
    %700 = vmatprep.mubr.bf16.mxu0 0
    %701 = vmatmul.mubr.bf16.gmra.mxu0 %v666
    %v702 = vpop.f32.mrf.mxu0
    %v703 = vadd.f32 0.0, %v702
    %v704 = vpop.f32.mrf.mxu0
    %v705 = vpop.f32.mrf.mxu0
    %v706 = vpop.f32.mrf.mxu0
    %707 = vdwg.mxu0
    %v708 = vadd.f32 %v660, %v703
    %v709 = vxor.u32 %v708, 2147483648
    %v710 = vmul.f32 %v709, 1.442695
    %v711 = vpow.pop %v710
    %v712 = vadd.f32 %v711, 1.0
    %v713 = vrcp.pop %v712
    %v714 = vmul.f32 1.0, %v713
    %v715 = vtanh.pop %v708
    %v716 = vmul.f32 %v714, %v653
    %718 = vrot.lane.b32.xlu0 %v715, 64
    %v719 = vpop.permute.xlu0 %718
    %v721 = vmul.f32 %v714, %v719
    %723 = vrot.lane.b32.xlu0 %v721, 32
    %v724 = vpop.permute.xlu0 %723
    %v726 = vadd.f32 %v716, %v724
    %v727 = vtanh.pop %v726
    %729 = vrot.lane.b32.xlu0 %v727, 64
    %v730 = vpop.permute.xlu0 %729
    %v732 = vmul.f32 %v714, %v730
    %v733 = vsel %vm128, %v201, %v197
    %v734 = vpack.c.bf16 %v732, %v732
    %736 = vrot.lane.b32.xlu0 %v734, 32
    %v737 = vpop.permute.xlu0 %736
    %v739 = vsel %vm148, %v737, 0
    %741 = vmatprep.subr.bf16.mxu0 0
    %742 = vmatpush1.bf16.msra.mxu0 0
    %743 = vmatprep.subr.bf16.mxu0 0
    %744 = vmatpush1.bf16.msra.mxu0 0
    %745 = vmatprep.subr.bf16.mxu0 0
    %746 = vmatpush1.bf16.msra.mxu0 0
    %747 = vmatprep.subr.bf16.mxu0 0
    %748 = vmatpush1.bf16.msra.mxu0 0
    %749 = vmatprep.subr.bf16.mxu0 0
    %750 = vmatpush1.bf16.msra.mxu0 0
    %751 = vmatprep.subr.bf16.mxu0 0
    %752 = vmatpush1.bf16.msra.mxu0 0
    %753 = vmatprep.subr.bf16.mxu0 0
    %754 = vmatpush1.bf16.msra.mxu0 %v141
    %755 = vmatprep.subr.bf16.mxu0 0
    %756 = vmatpush1.bf16.msra.mxu0 %v140
    %757 = vmatprep.subr.bf16.mxu0 0
    %758 = vmatpush2.bf16.msra.mxu0 0
    %759 = vmatprep.subr.bf16.mxu0 0
    %760 = vmatpush2.bf16.msra.mxu0 0
    %761 = vmatprep.subr.bf16.mxu0 0
    %762 = vmatpush2.bf16.msra.mxu0 0
    %763 = vmatprep.subr.bf16.mxu0 0
    %764 = vmatpush2.bf16.msra.mxu0 0
    %765 = vmatprep.subr.bf16.mxu0 0
    %766 = vmatpush2.bf16.msra.mxu0 0
    %767 = vmatprep.subr.bf16.mxu0 0
    %768 = vmatpush2.bf16.msra.mxu0 0
    %769 = vmatprep.subr.bf16.mxu0 0
    %770 = vmatpush2.bf16.msra.mxu0 0
    %771 = vmatprep.subr.bf16.mxu0 0
    %772 = vmatpush2.bf16.msra.mxu0 0
    %773 = vmatprep.mubr.bf16.mxu0 0
    %774 = vmatmul.mubr.bf16.gmra.mxu0 %v739
    %v775 = vpop.f32.mrf.mxu0
    %v776 = vadd.f32 0.0, %v775
    %v777 = vpop.f32.mrf.mxu0
    %v778 = vpop.f32.mrf.mxu0
    %v779 = vpop.f32.mrf.mxu0
    %780 = vdwg.mxu0
    %v781 = vadd.f32 %v733, %v776
    %v782 = vxor.u32 %v781, 2147483648
    %v783 = vmul.f32 %v782, 1.442695
    %v784 = vpow.pop %v783
    %v785 = vadd.f32 %v784, 1.0
    %v786 = vrcp.pop %v785
    %v787 = vmul.f32 1.0, %v786
    %v788 = vtanh.pop %v781
    %v789 = vmul.f32 %v787, %v726
    %791 = vrot.lane.b32.xlu0 %v788, 64
    %v792 = vpop.permute.xlu0 %791
    %v794 = vmul.f32 %v787, %v792
    %796 = vrot.lane.b32.xlu0 %v794, 32
    %v797 = vpop.permute.xlu0 %796
    %v799 = vadd.f32 %v789, %v797
    %v800 = vtanh.pop %v799
    %802 = vrot.lane.b32.xlu0 %v800, 64
    %v803 = vpop.permute.xlu0 %802
    %v805 = vmul.f32 %v787, %v803
    %v808 = vunpack.c.l.s4 1966171168
    %v809 = vunpack.c.0.s8 %v808
    %v810 = vlaneseq
    %v811 = vshrl.u32 %v810, 7
    %v812 = vsub.s32 %v809, %v811
    %v813 = vrot.slane %v271, %v812
    %v814 = vcombine.high %v813, %v813
    %v816 = vunpack.c.l.s4 1966171168
    %v817 = vunpack.c.0.s8 %v816
    %v818 = vlaneseq
    %v819 = vshrl.u32 %v818, 7
    %v820 = vsub.s32 %v817, %v819
    %v821 = vrot.slane %v813, %v820
    %v823 = vunpack.c.l.s4 1966171168
    %v824 = vunpack.c.0.s8 %v823
    %v825 = vlaneseq
    %v826 = vshrl.u32 %v825, 7
    %v827 = vsub.s32 %v824, %v826
    %v828 = vrot.slane %v814, %v827
    %v833 = vunpack.c.l.s4 1966171168
    %v834 = vunpack.c.0.s8 %v833
    %v835 = vlaneseq
    %v836 = vshrl.u32 %v835, 7
    %v837 = vsub.s32 %v834, %v836
    %v838 = vrot.slane %v351, %v837
    %v839 = vcombine.high %v838, %v838
    %v841 = vunpack.c.l.s4 1966171168
    %v842 = vunpack.c.0.s8 %v841
    %v843 = vlaneseq
    %v844 = vshrl.u32 %v843, 7
    %v845 = vsub.s32 %v842, %v844
    %v846 = vrot.slane %v838, %v845
    %v848 = vunpack.c.l.s4 1966171168
    %v849 = vunpack.c.0.s8 %v848
    %v850 = vlaneseq
    %v851 = vshrl.u32 %v850, 7
    %v852 = vsub.s32 %v849, %v851
    %v853 = vrot.slane %v839, %v852
    %v856 = vunpack.c.l.s4 1966171168
    %v857 = vunpack.c.0.s8 %v856
    %v858 = vlaneseq
    %v859 = vshrl.u32 %v858, 7
    %v860 = vsub.s32 %v857, %v859
    %v861 = vrot.slane %v432, %v860
    %v862 = vcombine.high %v861, %v861
    %v864 = vunpack.c.l.s4 1966171168
    %v865 = vunpack.c.0.s8 %v864
    %v866 = vlaneseq
    %v867 = vshrl.u32 %v866, 7
    %v868 = vsub.s32 %v865, %v867
    %v869 = vrot.slane %v861, %v868
    %v871 = vunpack.c.l.s4 1966171168
    %v872 = vunpack.c.0.s8 %v871
    %v873 = vlaneseq
    %v874 = vshrl.u32 %v873, 7
    %v875 = vsub.s32 %v872, %v874
    %v876 = vrot.slane %v862, %v875
    %v879 = vunpack.c.l.s4 1966171168
    %v880 = vunpack.c.0.s8 %v879
    %v881 = vlaneseq
    %v882 = vshrl.u32 %v881, 7
    %v883 = vsub.s32 %v880, %v882
    %v884 = vrot.slane %v513, %v883
    %v885 = vcombine.high %v884, %v884
    %v887 = vunpack.c.l.s4 1966171168
    %v888 = vunpack.c.0.s8 %v887
    %v889 = vlaneseq
    %v890 = vshrl.u32 %v889, 7
    %v891 = vsub.s32 %v888, %v890
    %v892 = vrot.slane %v884, %v891
    %v894 = vunpack.c.l.s4 1966171168
    %v895 = vunpack.c.0.s8 %v894
    %v896 = vlaneseq
    %v897 = vshrl.u32 %v896, 7
    %v898 = vsub.s32 %v895, %v897
    %v899 = vrot.slane %v885, %v898
    %v902 = vunpack.c.l.s4 1966171168
    %v903 = vunpack.c.0.s8 %v902
    %v904 = vlaneseq
    %v905 = vshrl.u32 %v904, 7
    %v906 = vsub.s32 %v903, %v905
    %v907 = vrot.slane %v586, %v906
    %v908 = vcombine.high %v907, %v907
    %v910 = vunpack.c.l.s4 1966171168
    %v911 = vunpack.c.0.s8 %v910
    %v912 = vlaneseq
    %v913 = vshrl.u32 %v912, 7
    %v914 = vsub.s32 %v911, %v913
    %v915 = vrot.slane %v907, %v914
    %v917 = vunpack.c.l.s4 1966171168
    %v918 = vunpack.c.0.s8 %v917
    %v919 = vlaneseq
    %v920 = vshrl.u32 %v919, 7
    %v921 = vsub.s32 %v918, %v920
    %v922 = vrot.slane %v908, %v921
    %v925 = vunpack.c.l.s4 1966171168
    %v926 = vunpack.c.0.s8 %v925
    %v927 = vlaneseq
    %v928 = vshrl.u32 %v927, 7
    %v929 = vsub.s32 %v926, %v928
    %v930 = vrot.slane %v659, %v929
    %v931 = vcombine.high %v930, %v930
    %v933 = vunpack.c.l.s4 1966171168
    %v934 = vunpack.c.0.s8 %v933
    %v935 = vlaneseq
    %v936 = vshrl.u32 %v935, 7
    %v937 = vsub.s32 %v934, %v936
    %v938 = vrot.slane %v930, %v937
    %v940 = vunpack.c.l.s4 1966171168
    %v941 = vunpack.c.0.s8 %v940
    %v942 = vlaneseq
    %v943 = vshrl.u32 %v942, 7
    %v944 = vsub.s32 %v941, %v943
    %v945 = vrot.slane %v931, %v944
    %v948 = vunpack.c.l.s4 1966171168
    %v949 = vunpack.c.0.s8 %v948
    %v950 = vlaneseq
    %v951 = vshrl.u32 %v950, 7
    %v952 = vsub.s32 %v949, %v951
    %v953 = vrot.slane %v732, %v952
    %v954 = vcombine.high %v953, %v953
    %v956 = vunpack.c.l.s4 1966171168
    %v957 = vunpack.c.0.s8 %v956
    %v958 = vlaneseq
    %v959 = vshrl.u32 %v958, 7
    %v960 = vsub.s32 %v957, %v959
    %v961 = vrot.slane %v953, %v960
    %v963 = vunpack.c.l.s4 1966171168
    %v964 = vunpack.c.0.s8 %v963
    %v965 = vlaneseq
    %v966 = vshrl.u32 %v965, 7
    %v967 = vsub.s32 %v964, %v966
    %v968 = vrot.slane %v954, %v967
    %v971 = vunpack.c.l.s4 1966171168
    %v972 = vunpack.c.0.s8 %v971
    %v973 = vlaneseq
    %v974 = vshrl.u32 %v973, 7
    %v975 = vsub.s32 %v972, %v974
    %v976 = vrot.slane %v805, %v975
    %v977 = vcombine.high %v976, %v976
    %v979 = vunpack.c.l.s4 1966171168
    %v980 = vunpack.c.0.s8 %v979
    %v981 = vlaneseq
    %v982 = vshrl.u32 %v981, 7
    %v983 = vsub.s32 %v980, %v982
    %v984 = vrot.slane %v976, %v983
    %v986 = vunpack.c.l.s4 1966171168
    %v987 = vunpack.c.0.s8 %v986
    %v988 = vlaneseq
    %v989 = vshrl.u32 %v988, 7
    %v990 = vsub.s32 %v987, %v989
    %v991 = vrot.slane %v977, %v990
    %v994 = vlaneseq
    %v995 = vshrl.u32 %v994, 7
    %v996 = vsub.s32 0, %v995
    %v997 = vrot.slane %v846, %v996
    %v998 = vlaneseq
    %v999 = vshrl.u32 %v998, 7
    %v1000 = vsub.s32 0, %v999
    %v1001 = vrot.slane %v853, %v1000
    %v1004 = vlaneseq
    %v1005 = vshrl.u32 %v1004, 7
    %v1006 = vsub.s32 0, %v1005
    %v1007 = vrot.slane %v869, %v1006
    %v1008 = vlaneseq
    %v1009 = vshrl.u32 %v1008, 7
    %v1010 = vsub.s32 0, %v1009
    %v1011 = vrot.slane %v876, %v1010
    %v1014 = vlaneseq
    %v1015 = vshrl.u32 %v1014, 7
    %v1016 = vsub.s32 0, %v1015
    %v1017 = vrot.slane %v892, %v1016
    %v1018 = vlaneseq
    %v1019 = vshrl.u32 %v1018, 7
    %v1020 = vsub.s32 0, %v1019
    %v1021 = vrot.slane %v899, %v1020
    %v1024 = vlaneseq
    %v1025 = vshrl.u32 %v1024, 7
    %v1026 = vsub.s32 0, %v1025
    %v1027 = vrot.slane %v915, %v1026
    %v1028 = vlaneseq
    %v1029 = vshrl.u32 %v1028, 7
    %v1030 = vsub.s32 0, %v1029
    %v1031 = vrot.slane %v922, %v1030
    %v1034 = vlaneseq
    %v1035 = vshrl.u32 %v1034, 7
    %v1036 = vsub.s32 0, %v1035
    %v1037 = vrot.slane %v938, %v1036
    %v1038 = vlaneseq
    %v1039 = vshrl.u32 %v1038, 7
    %v1040 = vsub.s32 0, %v1039
    %v1041 = vrot.slane %v945, %v1040
    %v1044 = vlaneseq
    %v1045 = vshrl.u32 %v1044, 7
    %v1046 = vsub.s32 0, %v1045
    %v1047 = vrot.slane %v961, %v1046
    %v1048 = vlaneseq
    %v1049 = vshrl.u32 %v1048, 7
    %v1050 = vsub.s32 0, %v1049
    %v1051 = vrot.slane %v968, %v1050
    %v1054 = vlaneseq
    %v1055 = vshrl.u32 %v1054, 7
    %v1056 = vsub.s32 0, %v1055
    %v1057 = vrot.slane %v984, %v1056
    %v1058 = vlaneseq
    %v1059 = vshrl.u32 %v1058, 7
    %v1060 = vsub.s32 0, %v1059
    %v1061 = vrot.slane %v991, %v1060
    %vm1064 = vcmask 1040384
    %v1065 = vsel %vm1064, %v821, %v997
    %v1066 = vsel %vm1064, %v828, %v1001
    %vm1067 = vcmask 1041408
    %v1068 = vsel %vm1067, %v1065, %v1007
    %v1069 = vsel %vm1067, %v1066, %v1011
    %vm1070 = vcmask 1042432
    %v1071 = vsel %vm1070, %v1068, %v1017
    %v1072 = vsel %vm1070, %v1069, %v1021
    %vm1073 = vcmask 1043456
    %v1074 = vsel %vm1073, %v1071, %v1027
    %v1075 = vsel %vm1073, %v1072, %v1031
    %vm1076 = vcmask 1044480
    %v1077 = vsel %vm1076, %v1074, %v1037
    %v1078 = vsel %vm1076, %v1075, %v1041
    %vm1079 = vcmask 1045504
    %v1080 = vsel %vm1079, %v1077, %v1047
    %v1081 = vsel %vm1079, %v1078, %v1051
    %vm1082 = vcmask 1046528
    %v1083 = vsel %vm1082, %v1080, %v1057
    %v1084 = vsel %vm1082, %v1081, %v1061
    %v1085 = vlaneseq
    %v1086 = vshrl.u32 %v1085, 7
    %v1087 = vsub.s32 0, %v1086
    %v1088 = vrot.slane %v821, %v1087
    %v1089 = vlaneseq
    %v1090 = vshrl.u32 %v1089, 7
    %v1091 = vsub.s32 0, %v1090
    %v1092 = vrot.slane %v828, %v1091
    %v1095 = vsel %vm1064, %v984, %v1047
    %v1096 = vsel %vm1064, %v991, %v1051
    %v1097 = vsel %vm1067, %v1095, %v1037
    %v1098 = vsel %vm1067, %v1096, %v1041
    %v1099 = vsel %vm1070, %v1097, %v1027
    %v1100 = vsel %vm1070, %v1098, %v1031
    %v1101 = vsel %vm1073, %v1099, %v1017
    %v1102 = vsel %vm1073, %v1100, %v1021
    %v1103 = vsel %vm1076, %v1101, %v1007
    %v1104 = vsel %vm1076, %v1102, %v1011
    %v1105 = vsel %vm1079, %v1103, %v997
    %v1106 = vsel %vm1079, %v1104, %v1001
    %v1107 = vsel %vm1082, %v1105, %v1088
    %v1108 = vsel %vm1082, %v1106, %v1092
    %1111 = vrot.lane.b32.xlu0 %v1083, 32
    %v1112 = vpop.permute.xlu0 %1111
    %1113 = vrot.lane.b32.xlu0 %v1084, 32
    %v1114 = vpop.permute.xlu0 %1113
    %1119 = vrot.lane.b32.xlu0 %v1107, 32
    %v1120 = vpop.permute.xlu0 %1119
    %1121 = vrot.lane.b32.xlu0 %v1108, 32
    %v1122 = vpop.permute.xlu0 %1121
    %v1125 = vsel %vm129, %v1112, %v1120
    %v1126 = vsel %vm129, %v1114, %v1122
    %v1127 = vld [vmem:[%s1 + $0x20] sm:$0xff]
    %v1128 = vld [vmem:[%s1 + $0x28] sm:$0xff]
    %v1129 = vld [vmem:[%s1 + $0x30] sm:$0xff]
    %v1130 = vld [vmem:[%s1 + $0x38] sm:$0xff]
    %v1131 = vpack.c.bf16 %v1128, %v1127
    %v1132 = vpack.c.bf16 %v1130, %v1129
    %v1133 = vld [vmem:[%s1 + $0x60] sm:$0xff]
    %v1134 = vld [vmem:[%s1 + $0x68] sm:$0xff]
    %v1135 = vld [vmem:[%s1 + $0x70] sm:$0xff]
    %v1136 = vld [vmem:[%s1 + $0x78] sm:$0xff]
    %v1137 = vpack.c.bf16 %v1134, %v1133
    %v1138 = vpack.c.bf16 %v1136, %v1135
    %v1139 = vld [vmem:[%s1 + $0x88] sm:$0x1]
    %v1140 = vpack.c.bf16 %v1126, %v1125
    %v1141 = vlaneseq
    %v1142 = vshrl.u32 %v1141, 7
    %v1143 = vsub.s32 0, %v1142
    %v1144 = vrot.slane %v1139, %v1143
    %v1146 = vsel %vm148, %v1140, 0
    %1148 = vmatprep.subr.bf16.mxu0 0
    %1149 = vmatpush1.bf16.msra.mxu0 0
    %1150 = vmatprep.subr.bf16.mxu0 0
    %1151 = vmatpush1.bf16.msra.mxu0 0
    %1152 = vmatprep.subr.bf16.mxu0 0
    %1153 = vmatpush1.bf16.msra.mxu0 0
    %1154 = vmatprep.subr.bf16.mxu0 0
    %1155 = vmatpush1.bf16.msra.mxu0 0
    %1156 = vmatprep.subr.bf16.mxu0 0
    %1157 = vmatpush1.bf16.msra.mxu0 0
    %1158 = vmatprep.subr.bf16.mxu0 0
    %1159 = vmatpush1.bf16.msra.mxu0 0
    %1160 = vmatprep.subr.bf16.mxu0 0
    %1161 = vmatpush1.bf16.msra.mxu0 %v1132
    %1162 = vmatprep.subr.bf16.mxu0 0
    %1163 = vmatpush1.bf16.msra.mxu0 %v1131
    %1164 = vmatprep.subr.bf16.mxu0 0
    %1165 = vmatpush2.bf16.msra.mxu0 0
    %1166 = vmatprep.subr.bf16.mxu0 0
    %1167 = vmatpush2.bf16.msra.mxu0 0
    %1168 = vmatprep.subr.bf16.mxu0 0
    %1169 = vmatpush2.bf16.msra.mxu0 0
    %1170 = vmatprep.subr.bf16.mxu0 0
    %1171 = vmatpush2.bf16.msra.mxu0 0
    %1172 = vmatprep.subr.bf16.mxu0 0
    %1173 = vmatpush2.bf16.msra.mxu0 0
    %1174 = vmatprep.subr.bf16.mxu0 0
    %1175 = vmatpush2.bf16.msra.mxu0 0
    %1176 = vmatprep.subr.bf16.mxu0 0
    %1177 = vmatpush2.bf16.msra.mxu0 0
    %1178 = vmatprep.subr.bf16.mxu0 0
    %1179 = vmatpush2.bf16.msra.mxu0 0
    %1180 = vmatprep.mubr.bf16.mxu0 0
    %1181 = vmatmul.mubr.bf16.gmra.mxu0 %v1146
    %v1182 = vpop.f32.mrf.mxu0
    %v1183 = vadd.f32 %v1144, %v1182
    %v1184 = vpop.f32.mrf.mxu0
    %v1185 = vpop.f32.mrf.mxu0
    %v1186 = vadd.f32 %v1144, %v1185
    %v1187 = vpop.f32.mrf.mxu0
    %1188 = vdwg.mxu0
    %v1191 = vrot.slane %v1186, 7
    %v1192 = vsel %vm196, %v1191, %v1183
    %v1194 = vrot.slane %v1183, 7
    %v1195 = vrot.slane %v1186, 6
    %v1196 = vsel %vm196, %v1195, %v1194
    %v1198 = vsel %vm128, %v1192, %v1196
    %1199 = vmatprep.subr.bf16.mxu0 0
    %1200 = vmatpush1.bf16.msra.mxu0 0
    %1201 = vmatprep.subr.bf16.mxu0 0
    %1202 = vmatpush1.bf16.msra.mxu0 0
    %1203 = vmatprep.subr.bf16.mxu0 0
    %1204 = vmatpush1.bf16.msra.mxu0 0
    %1205 = vmatprep.subr.bf16.mxu0 0
    %1206 = vmatpush1.bf16.msra.mxu0 0
    %1207 = vmatprep.subr.bf16.mxu0 0
    %1208 = vmatpush1.bf16.msra.mxu0 0
    %1209 = vmatprep.subr.bf16.mxu0 0
    %1210 = vmatpush1.bf16.msra.mxu0 0
    %1211 = vmatprep.subr.bf16.mxu0 0
    %1212 = vmatpush1.bf16.msra.mxu0 %v1138
    %1213 = vmatprep.subr.bf16.mxu0 0
    %1214 = vmatpush1.bf16.msra.mxu0 %v1137
    %1215 = vmatprep.subr.bf16.mxu0 0
    %1216 = vmatpush2.bf16.msra.mxu0 0
    %1217 = vmatprep.subr.bf16.mxu0 0
    %1218 = vmatpush2.bf16.msra.mxu0 0
    %1219 = vmatprep.subr.bf16.mxu0 0
    %1220 = vmatpush2.bf16.msra.mxu0 0
    %1221 = vmatprep.subr.bf16.mxu0 0
    %1222 = vmatpush2.bf16.msra.mxu0 0
    %1223 = vmatprep.subr.bf16.mxu0 0
    %1224 = vmatpush2.bf16.msra.mxu0 0
    %1225 = vmatprep.subr.bf16.mxu0 0
    %1226 = vmatpush2.bf16.msra.mxu0 0
    %1227 = vmatprep.subr.bf16.mxu0 0
    %1228 = vmatpush2.bf16.msra.mxu0 0
    %1229 = vmatprep.subr.bf16.mxu0 0
    %1230 = vmatpush2.bf16.msra.mxu0 0
    %1231 = vmatprep.mubr.bf16.mxu0 0
    %1232 = vmatmul.mubr.bf16.gmra.mxu0 %v205
    %v1233 = vpop.f32.mrf.mxu0
    %v1234 = vadd.f32 0.0, %v1233
    %v1235 = vpop.f32.mrf.mxu0
    %v1236 = vpop.f32.mrf.mxu0
    %v1237 = vpop.f32.mrf.mxu0
    %1238 = vdwg.mxu0
    %v1239 = vadd.f32 %v1198, %v1234
    %v1240 = vxor.u32 %v1239, 2147483648
    %v1241 = vmul.f32 %v1240, 1.442695
    %v1242 = vpow.pop %v1241
    %v1243 = vadd.f32 %v1242, 1.0
    %v1244 = vrcp.pop %v1243
    %v1245 = vmul.f32 1.0, %v1244
    %v1246 = vtanh.pop %v1239
    %v1247 = vmul.f32 %v1245, 0.0
    %1249 = vrot.lane.b32.xlu0 %v1246, 64
    %v1250 = vpop.permute.xlu0 %1249
    %v1252 = vmul.f32 %v1245, %v1250
    %1254 = vrot.lane.b32.xlu0 %v1252, 32
    %v1255 = vpop.permute.xlu0 %1254
    %v1257 = vadd.f32 %v1247, %v1255
    %v1258 = vtanh.pop %v1257
    %1260 = vrot.lane.b32.xlu0 %v1258, 64
    %v1261 = vpop.permute.xlu0 %1260
    %v1263 = vmul.f32 %v1245, %v1261
    %v1264 = vrot.slane %v1183, 1
    %v1265 = vsel %vm196, %v1186, %v1264
    %v1267 = vrot.slane %v1183, 6
    %v1268 = vrot.slane %v1186, 5
    %v1269 = vsel %vm196, %v1268, %v1267
    %v1271 = vsel %vm128, %v1265, %v1269
    %v1272 = vpack.c.bf16 %v1263, %v1263
    %1274 = vrot.lane.b32.xlu0 %v1272, 32
    %v1275 = vpop.permute.xlu0 %1274
    %v1277 = vsel %vm148, %v1275, 0
    %1279 = vmatprep.subr.bf16.mxu0 0
    %1280 = vmatpush1.bf16.msra.mxu0 0
    %1281 = vmatprep.subr.bf16.mxu0 0
    %1282 = vmatpush1.bf16.msra.mxu0 0
    %1283 = vmatprep.subr.bf16.mxu0 0
    %1284 = vmatpush1.bf16.msra.mxu0 0
    %1285 = vmatprep.subr.bf16.mxu0 0
    %1286 = vmatpush1.bf16.msra.mxu0 0
    %1287 = vmatprep.subr.bf16.mxu0 0
    %1288 = vmatpush1.bf16.msra.mxu0 0
    %1289 = vmatprep.subr.bf16.mxu0 0
    %1290 = vmatpush1.bf16.msra.mxu0 0
    %1291 = vmatprep.subr.bf16.mxu0 0
    %1292 = vmatpush1.bf16.msra.mxu0 %v1138
    %1293 = vmatprep.subr.bf16.mxu0 0
    %1294 = vmatpush1.bf16.msra.mxu0 %v1137
    %1295 = vmatprep.subr.bf16.mxu0 0
    %1296 = vmatpush2.bf16.msra.mxu0 0
    %1297 = vmatprep.subr.bf16.mxu0 0
    %1298 = vmatpush2.bf16.msra.mxu0 0
    %1299 = vmatprep.subr.bf16.mxu0 0
    %1300 = vmatpush2.bf16.msra.mxu0 0
    %1301 = vmatprep.subr.bf16.mxu0 0
    %1302 = vmatpush2.bf16.msra.mxu0 0
    %1303 = vmatprep.subr.bf16.mxu0 0
    %1304 = vmatpush2.bf16.msra.mxu0 0
    %1305 = vmatprep.subr.bf16.mxu0 0
    %1306 = vmatpush2.bf16.msra.mxu0 0
    %1307 = vmatprep.subr.bf16.mxu0 0
    %1308 = vmatpush2.bf16.msra.mxu0 0
    %1309 = vmatprep.subr.bf16.mxu0 0
    %1310 = vmatpush2.bf16.msra.mxu0 0
    %1311 = vmatprep.mubr.bf16.mxu0 0
    %1312 = vmatmul.mubr.bf16.gmra.mxu0 %v1277
    %v1313 = vpop.f32.mrf.mxu0
    %v1314 = vadd.f32 0.0, %v1313
    %v1315 = vpop.f32.mrf.mxu0
    %v1316 = vpop.f32.mrf.mxu0
    %v1317 = vpop.f32.mrf.mxu0
    %1318 = vdwg.mxu0
    %v1319 = vadd.f32 %v1271, %v1314
    %v1320 = vxor.u32 %v1319, 2147483648
    %v1321 = vmul.f32 %v1320, 1.442695
    %v1322 = vpow.pop %v1321
    %v1323 = vadd.f32 %v1322, 1.0
    %v1324 = vrcp.pop %v1323
    %v1325 = vmul.f32 1.0, %v1324
    %v1326 = vtanh.pop %v1319
    %v1327 = vmul.f32 %v1325, %v1257
    %1329 = vrot.lane.b32.xlu0 %v1326, 64
    %v1330 = vpop.permute.xlu0 %1329
    %v1332 = vmul.f32 %v1325, %v1330
    %1334 = vrot.lane.b32.xlu0 %v1332, 32
    %v1335 = vpop.permute.xlu0 %1334
    %v1337 = vadd.f32 %v1327, %v1335
    %v1338 = vtanh.pop %v1337
    %1340 = vrot.lane.b32.xlu0 %v1338, 64
    %v1341 = vpop.permute.xlu0 %1340
    %v1343 = vmul.f32 %v1325, %v1341
    %v1344 = vrot.slane %v1183, 2
    %v1345 = vrot.slane %v1186, 1
    %v1346 = vsel %vm196, %v1345, %v1344
    %v1348 = vrot.slane %v1183, 5
    %v1349 = vrot.slane %v1186, 4
    %v1350 = vsel %vm196, %v1349, %v1348
    %v1352 = vsel %vm128, %v1346, %v1350
    %v1353 = vpack.c.bf16 %v1343, %v1343
    %1355 = vrot.lane.b32.xlu0 %v1353, 32
    %v1356 = vpop.permute.xlu0 %1355
    %v1358 = vsel %vm148, %v1356, 0
    %1360 = vmatprep.subr.bf16.mxu0 0
    %1361 = vmatpush1.bf16.msra.mxu0 0
    %1362 = vmatprep.subr.bf16.mxu0 0
    %1363 = vmatpush1.bf16.msra.mxu0 0
    %1364 = vmatprep.subr.bf16.mxu0 0
    %1365 = vmatpush1.bf16.msra.mxu0 0
    %1366 = vmatprep.subr.bf16.mxu0 0
    %1367 = vmatpush1.bf16.msra.mxu0 0
    %1368 = vmatprep.subr.bf16.mxu0 0
    %1369 = vmatpush1.bf16.msra.mxu0 0
    %1370 = vmatprep.subr.bf16.mxu0 0
    %1371 = vmatpush1.bf16.msra.mxu0 0
    %1372 = vmatprep.subr.bf16.mxu0 0
    %1373 = vmatpush1.bf16.msra.mxu0 %v1138
    %1374 = vmatprep.subr.bf16.mxu0 0
    %1375 = vmatpush1.bf16.msra.mxu0 %v1137
    %1376 = vmatprep.subr.bf16.mxu0 0
    %1377 = vmatpush2.bf16.msra.mxu0 0
    %1378 = vmatprep.subr.bf16.mxu0 0
    %1379 = vmatpush2.bf16.msra.mxu0 0
    %1380 = vmatprep.subr.bf16.mxu0 0
    %1381 = vmatpush2.bf16.msra.mxu0 0
    %1382 = vmatprep.subr.bf16.mxu0 0
    %1383 = vmatpush2.bf16.msra.mxu0 0
    %1384 = vmatprep.subr.bf16.mxu0 0
    %1385 = vmatpush2.bf16.msra.mxu0 0
    %1386 = vmatprep.subr.bf16.mxu0 0
    %1387 = vmatpush2.bf16.msra.mxu0 0
    %1388 = vmatprep.subr.bf16.mxu0 0
    %1389 = vmatpush2.bf16.msra.mxu0 0
    %1390 = vmatprep.subr.bf16.mxu0 0
    %1391 = vmatpush2.bf16.msra.mxu0 0
    %1392 = vmatprep.mubr.bf16.mxu0 0
    %1393 = vmatmul.mubr.bf16.gmra.mxu0 %v1358
    %v1394 = vpop.f32.mrf.mxu0
    %v1395 = vadd.f32 0.0, %v1394
    %v1396 = vpop.f32.mrf.mxu0
    %v1397 = vpop.f32.mrf.mxu0
    %v1398 = vpop.f32.mrf.mxu0
    %1399 = vdwg.mxu0
    %v1400 = vadd.f32 %v1352, %v1395
    %v1401 = vxor.u32 %v1400, 2147483648
    %v1402 = vmul.f32 %v1401, 1.442695
    %v1403 = vpow.pop %v1402
    %v1404 = vadd.f32 %v1403, 1.0
    %v1405 = vrcp.pop %v1404
    %v1406 = vmul.f32 1.0, %v1405
    %v1407 = vtanh.pop %v1400
    %v1408 = vmul.f32 %v1406, %v1337
    %1410 = vrot.lane.b32.xlu0 %v1407, 64
    %v1411 = vpop.permute.xlu0 %1410
    %v1413 = vmul.f32 %v1406, %v1411
    %1415 = vrot.lane.b32.xlu0 %v1413, 32
    %v1416 = vpop.permute.xlu0 %1415
    %v1418 = vadd.f32 %v1408, %v1416
    %v1419 = vtanh.pop %v1418
    %1421 = vrot.lane.b32.xlu0 %v1419, 64
    %v1422 = vpop.permute.xlu0 %1421
    %v1424 = vmul.f32 %v1406, %v1422
    %v1425 = vrot.slane %v1183, 3
    %v1426 = vrot.slane %v1186, 2
    %v1427 = vsel %vm196, %v1426, %v1425
    %v1429 = vrot.slane %v1183, 4
    %v1430 = vrot.slane %v1186, 3
    %v1431 = vsel %vm196, %v1430, %v1429
    %v1433 = vsel %vm128, %v1427, %v1431
    %v1434 = vpack.c.bf16 %v1424, %v1424
    %1436 = vrot.lane.b32.xlu0 %v1434, 32
    %v1437 = vpop.permute.xlu0 %1436
    %v1439 = vsel %vm148, %v1437, 0
    %1441 = vmatprep.subr.bf16.mxu0 0
    %1442 = vmatpush1.bf16.msra.mxu0 0
    %1443 = vmatprep.subr.bf16.mxu0 0
    %1444 = vmatpush1.bf16.msra.mxu0 0
    %1445 = vmatprep.subr.bf16.mxu0 0
    %1446 = vmatpush1.bf16.msra.mxu0 0
    %1447 = vmatprep.subr.bf16.mxu0 0
    %1448 = vmatpush1.bf16.msra.mxu0 0
    %1449 = vmatprep.subr.bf16.mxu0 0
    %1450 = vmatpush1.bf16.msra.mxu0 0
    %1451 = vmatprep.subr.bf16.mxu0 0
    %1452 = vmatpush1.bf16.msra.mxu0 0
    %1453 = vmatprep.subr.bf16.mxu0 0
    %1454 = vmatpush1.bf16.msra.mxu0 %v1138
    %1455 = vmatprep.subr.bf16.mxu0 0
    %1456 = vmatpush1.bf16.msra.mxu0 %v1137
    %1457 = vmatprep.subr.bf16.mxu0 0
    %1458 = vmatpush2.bf16.msra.mxu0 0
    %1459 = vmatprep.subr.bf16.mxu0 0
    %1460 = vmatpush2.bf16.msra.mxu0 0
    %1461 = vmatprep.subr.bf16.mxu0 0
    %1462 = vmatpush2.bf16.msra.mxu0 0
    %1463 = vmatprep.subr.bf16.mxu0 0
    %1464 = vmatpush2.bf16.msra.mxu0 0
    %1465 = vmatprep.subr.bf16.mxu0 0
    %1466 = vmatpush2.bf16.msra.mxu0 0
    %1467 = vmatprep.subr.bf16.mxu0 0
    %1468 = vmatpush2.bf16.msra.mxu0 0
    %1469 = vmatprep.subr.bf16.mxu0 0
    %1470 = vmatpush2.bf16.msra.mxu0 0
    %1471 = vmatprep.subr.bf16.mxu0 0
    %1472 = vmatpush2.bf16.msra.mxu0 0
    %1473 = vmatprep.mubr.bf16.mxu0 0
    %1474 = vmatmul.mubr.bf16.gmra.mxu0 %v1439
    %v1475 = vpop.f32.mrf.mxu0
    %v1476 = vadd.f32 0.0, %v1475
    %v1477 = vpop.f32.mrf.mxu0
    %v1478 = vpop.f32.mrf.mxu0
    %v1479 = vpop.f32.mrf.mxu0
    %1480 = vdwg.mxu0
    %v1481 = vadd.f32 %v1433, %v1476
    %v1482 = vxor.u32 %v1481, 2147483648
    %v1483 = vmul.f32 %v1482, 1.442695
    %v1484 = vpow.pop %v1483
    %v1485 = vadd.f32 %v1484, 1.0
    %v1486 = vrcp.pop %v1485
    %v1487 = vmul.f32 1.0, %v1486
    %v1488 = vtanh.pop %v1481
    %v1489 = vmul.f32 %v1487, %v1418
    %1491 = vrot.lane.b32.xlu0 %v1488, 64
    %v1492 = vpop.permute.xlu0 %1491
    %v1494 = vmul.f32 %v1487, %v1492
    %1496 = vrot.lane.b32.xlu0 %v1494, 32
    %v1497 = vpop.permute.xlu0 %1496
    %v1499 = vadd.f32 %v1489, %v1497
    %v1500 = vtanh.pop %v1499
    %1502 = vrot.lane.b32.xlu0 %v1500, 64
    %v1503 = vpop.permute.xlu0 %1502
    %v1505 = vmul.f32 %v1487, %v1503
    %v1506 = vsel %vm128, %v1431, %v1427
    %v1507 = vpack.c.bf16 %v1505, %v1505
    %1509 = vrot.lane.b32.xlu0 %v1507, 32
    %v1510 = vpop.permute.xlu0 %1509
    %v1512 = vsel %vm148, %v1510, 0
    %1514 = vmatprep.subr.bf16.mxu0 0
    %1515 = vmatpush1.bf16.msra.mxu0 0
    %1516 = vmatprep.subr.bf16.mxu0 0
    %1517 = vmatpush1.bf16.msra.mxu0 0
    %1518 = vmatprep.subr.bf16.mxu0 0
    %1519 = vmatpush1.bf16.msra.mxu0 0
    %1520 = vmatprep.subr.bf16.mxu0 0
    %1521 = vmatpush1.bf16.msra.mxu0 0
    %1522 = vmatprep.subr.bf16.mxu0 0
    %1523 = vmatpush1.bf16.msra.mxu0 0
    %1524 = vmatprep.subr.bf16.mxu0 0
    %1525 = vmatpush1.bf16.msra.mxu0 0
    %1526 = vmatprep.subr.bf16.mxu0 0
    %1527 = vmatpush1.bf16.msra.mxu0 %v1138
    %1528 = vmatprep.subr.bf16.mxu0 0
    %1529 = vmatpush1.bf16.msra.mxu0 %v1137
    %1530 = vmatprep.subr.bf16.mxu0 0
    %1531 = vmatpush2.bf16.msra.mxu0 0
    %1532 = vmatprep.subr.bf16.mxu0 0
    %1533 = vmatpush2.bf16.msra.mxu0 0
    %1534 = vmatprep.subr.bf16.mxu0 0
    %1535 = vmatpush2.bf16.msra.mxu0 0
    %1536 = vmatprep.subr.bf16.mxu0 0
    %1537 = vmatpush2.bf16.msra.mxu0 0
    %1538 = vmatprep.subr.bf16.mxu0 0
    %1539 = vmatpush2.bf16.msra.mxu0 0
    %1540 = vmatprep.subr.bf16.mxu0 0
    %1541 = vmatpush2.bf16.msra.mxu0 0
    %1542 = vmatprep.subr.bf16.mxu0 0
    %1543 = vmatpush2.bf16.msra.mxu0 0
    %1544 = vmatprep.subr.bf16.mxu0 0
    %1545 = vmatpush2.bf16.msra.mxu0 0
    %1546 = vmatprep.mubr.bf16.mxu0 0
    %1547 = vmatmul.mubr.bf16.gmra.mxu0 %v1512
    %v1548 = vpop.f32.mrf.mxu0
    %v1549 = vadd.f32 0.0, %v1548
    %v1550 = vpop.f32.mrf.mxu0
    %v1551 = vpop.f32.mrf.mxu0
    %v1552 = vpop.f32.mrf.mxu0
    %1553 = vdwg.mxu0
    %v1554 = vadd.f32 %v1506, %v1549
    %v1555 = vxor.u32 %v1554, 2147483648
    %v1556 = vmul.f32 %v1555, 1.442695
    %v1557 = vpow.pop %v1556
    %v1558 = vadd.f32 %v1557, 1.0
    %v1559 = vrcp.pop %v1558
    %v1560 = vmul.f32 1.0, %v1559
    %v1561 = vtanh.pop %v1554
    %v1562 = vmul.f32 %v1560, %v1499
    %1564 = vrot.lane.b32.xlu0 %v1561, 64
    %v1565 = vpop.permute.xlu0 %1564
    %v1567 = vmul.f32 %v1560, %v1565
    %1569 = vrot.lane.b32.xlu0 %v1567, 32
    %v1570 = vpop.permute.xlu0 %1569
    %v1572 = vadd.f32 %v1562, %v1570
    %v1573 = vtanh.pop %v1572
    %1575 = vrot.lane.b32.xlu0 %v1573, 64
    %v1576 = vpop.permute.xlu0 %1575
    %v1578 = vmul.f32 %v1560, %v1576
    %v1579 = vsel %vm128, %v1350, %v1346
    %v1580 = vpack.c.bf16 %v1578, %v1578
    %1582 = vrot.lane.b32.xlu0 %v1580, 32
    %v1583 = vpop.permute.xlu0 %1582
    %v1585 = vsel %vm148, %v1583, 0
    %1587 = vmatprep.subr.bf16.mxu0 0
    %1588 = vmatpush1.bf16.msra.mxu0 0
    %1589 = vmatprep.subr.bf16.mxu0 0
    %1590 = vmatpush1.bf16.msra.mxu0 0
    %1591 = vmatprep.subr.bf16.mxu0 0
    %1592 = vmatpush1.bf16.msra.mxu0 0
    %1593 = vmatprep.subr.bf16.mxu0 0
    %1594 = vmatpush1.bf16.msra.mxu0 0
    %1595 = vmatprep.subr.bf16.mxu0 0
    %1596 = vmatpush1.bf16.msra.mxu0 0
    %1597 = vmatprep.subr.bf16.mxu0 0
    %1598 = vmatpush1.bf16.msra.mxu0 0
    %1599 = vmatprep.subr.bf16.mxu0 0
    %1600 = vmatpush1.bf16.msra.mxu0 %v1138
    %1601 = vmatprep.subr.bf16.mxu0 0
    %1602 = vmatpush1.bf16.msra.mxu0 %v1137
    %1603 = vmatprep.subr.bf16.mxu0 0
    %1604 = vmatpush2.bf16.msra.mxu0 0
    %1605 = vmatprep.subr.bf16.mxu0 0
    %1606 = vmatpush2.bf16.msra.mxu0 0
    %1607 = vmatprep.subr.bf16.mxu0 0
    %1608 = vmatpush2.bf16.msra.mxu0 0
    %1609 = vmatprep.subr.bf16.mxu0 0
    %1610 = vmatpush2.bf16.msra.mxu0 0
    %1611 = vmatprep.subr.bf16.mxu0 0
    %1612 = vmatpush2.bf16.msra.mxu0 0
    %1613 = vmatprep.subr.bf16.mxu0 0
    %1614 = vmatpush2.bf16.msra.mxu0 0
    %1615 = vmatprep.subr.bf16.mxu0 0
    %1616 = vmatpush2.bf16.msra.mxu0 0
    %1617 = vmatprep.subr.bf16.mxu0 0
    %1618 = vmatpush2.bf16.msra.mxu0 0
    %1619 = vmatprep.mubr.bf16.mxu0 0
    %1620 = vmatmul.mubr.bf16.gmra.mxu0 %v1585
    %v1621 = vpop.f32.mrf.mxu0
    %v1622 = vadd.f32 0.0, %v1621
    %v1623 = vpop.f32.mrf.mxu0
    %v1624 = vpop.f32.mrf.mxu0
    %v1625 = vpop.f32.mrf.mxu0
    %1626 = vdwg.mxu0
    %v1627 = vadd.f32 %v1579, %v1622
    %v1628 = vxor.u32 %v1627, 2147483648
    %v1629 = vmul.f32 %v1628, 1.442695
    %v1630 = vpow.pop %v1629
    %v1631 = vadd.f32 %v1630, 1.0
    %v1632 = vrcp.pop %v1631
    %v1633 = vmul.f32 1.0, %v1632
    %v1634 = vtanh.pop %v1627
    %v1635 = vmul.f32 %v1633, %v1572
    %1637 = vrot.lane.b32.xlu0 %v1634, 64
    %v1638 = vpop.permute.xlu0 %1637
    %v1640 = vmul.f32 %v1633, %v1638
    %1642 = vrot.lane.b32.xlu0 %v1640, 32
    %v1643 = vpop.permute.xlu0 %1642
    %v1645 = vadd.f32 %v1635, %v1643
    %v1646 = vtanh.pop %v1645
    %1648 = vrot.lane.b32.xlu0 %v1646, 64
    %v1649 = vpop.permute.xlu0 %1648
    %v1651 = vmul.f32 %v1633, %v1649
    %v1652 = vsel %vm128, %v1269, %v1265
    %v1653 = vpack.c.bf16 %v1651, %v1651
    %1655 = vrot.lane.b32.xlu0 %v1653, 32
    %v1656 = vpop.permute.xlu0 %1655
    %v1658 = vsel %vm148, %v1656, 0
    %1660 = vmatprep.subr.bf16.mxu0 0
    %1661 = vmatpush1.bf16.msra.mxu0 0
    %1662 = vmatprep.subr.bf16.mxu0 0
    %1663 = vmatpush1.bf16.msra.mxu0 0
    %1664 = vmatprep.subr.bf16.mxu0 0
    %1665 = vmatpush1.bf16.msra.mxu0 0
    %1666 = vmatprep.subr.bf16.mxu0 0
    %1667 = vmatpush1.bf16.msra.mxu0 0
    %1668 = vmatprep.subr.bf16.mxu0 0
    %1669 = vmatpush1.bf16.msra.mxu0 0
    %1670 = vmatprep.subr.bf16.mxu0 0
    %1671 = vmatpush1.bf16.msra.mxu0 0
    %1672 = vmatprep.subr.bf16.mxu0 0
    %1673 = vmatpush1.bf16.msra.mxu0 %v1138
    %1674 = vmatprep.subr.bf16.mxu0 0
    %1675 = vmatpush1.bf16.msra.mxu0 %v1137
    %1676 = vmatprep.subr.bf16.mxu0 0
    %1677 = vmatpush2.bf16.msra.mxu0 0
    %1678 = vmatprep.subr.bf16.mxu0 0
    %1679 = vmatpush2.bf16.msra.mxu0 0
    %1680 = vmatprep.subr.bf16.mxu0 0
    %1681 = vmatpush2.bf16.msra.mxu0 0
    %1682 = vmatprep.subr.bf16.mxu0 0
    %1683 = vmatpush2.bf16.msra.mxu0 0
    %1684 = vmatprep.subr.bf16.mxu0 0
    %1685 = vmatpush2.bf16.msra.mxu0 0
    %1686 = vmatprep.subr.bf16.mxu0 0
    %1687 = vmatpush2.bf16.msra.mxu0 0
    %1688 = vmatprep.subr.bf16.mxu0 0
    %1689 = vmatpush2.bf16.msra.mxu0 0
    %1690 = vmatprep.subr.bf16.mxu0 0
    %1691 = vmatpush2.bf16.msra.mxu0 0
    %1692 = vmatprep.mubr.bf16.mxu0 0
    %1693 = vmatmul.mubr.bf16.gmra.mxu0 %v1658
    %v1694 = vpop.f32.mrf.mxu0
    %v1695 = vadd.f32 0.0, %v1694
    %v1696 = vpop.f32.mrf.mxu0
    %v1697 = vpop.f32.mrf.mxu0
    %v1698 = vpop.f32.mrf.mxu0
    %1699 = vdwg.mxu0
    %v1700 = vadd.f32 %v1652, %v1695
    %v1701 = vxor.u32 %v1700, 2147483648
    %v1702 = vmul.f32 %v1701, 1.442695
    %v1703 = vpow.pop %v1702
    %v1704 = vadd.f32 %v1703, 1.0
    %v1705 = vrcp.pop %v1704
    %v1706 = vmul.f32 1.0, %v1705
    %v1707 = vtanh.pop %v1700
    %v1708 = vmul.f32 %v1706, %v1645
    %1710 = vrot.lane.b32.xlu0 %v1707, 64
    %v1711 = vpop.permute.xlu0 %1710
    %v1713 = vmul.f32 %v1706, %v1711
    %1715 = vrot.lane.b32.xlu0 %v1713, 32
    %v1716 = vpop.permute.xlu0 %1715
    %v1718 = vadd.f32 %v1708, %v1716
    %v1719 = vtanh.pop %v1718
    %1721 = vrot.lane.b32.xlu0 %v1719, 64
    %v1722 = vpop.permute.xlu0 %1721
    %v1724 = vmul.f32 %v1706, %v1722
    %v1725 = vsel %vm128, %v1196, %v1192
    %v1726 = vpack.c.bf16 %v1724, %v1724
    %1728 = vrot.lane.b32.xlu0 %v1726, 32
    %v1729 = vpop.permute.xlu0 %1728
    %v1731 = vsel %vm148, %v1729, 0
    %1733 = vmatprep.subr.bf16.mxu0 0
    %1734 = vmatpush1.bf16.msra.mxu0 0
    %1735 = vmatprep.subr.bf16.mxu0 0
    %1736 = vmatpush1.bf16.msra.mxu0 0
    %1737 = vmatprep.subr.bf16.mxu0 0
    %1738 = vmatpush1.bf16.msra.mxu0 0
    %1739 = vmatprep.subr.bf16.mxu0 0
    %1740 = vmatpush1.bf16.msra.mxu0 0
    %1741 = vmatprep.subr.bf16.mxu0 0
    %1742 = vmatpush1.bf16.msra.mxu0 0
    %1743 = vmatprep.subr.bf16.mxu0 0
    %1744 = vmatpush1.bf16.msra.mxu0 0
    %1745 = vmatprep.subr.bf16.mxu0 0
    %1746 = vmatpush1.bf16.msra.mxu0 %v1138
    %1747 = vmatprep.subr.bf16.mxu0 0
    %1748 = vmatpush1.bf16.msra.mxu0 %v1137
    %1749 = vmatprep.subr.bf16.mxu0 0
    %1750 = vmatpush2.bf16.msra.mxu0 0
    %1751 = vmatprep.subr.bf16.mxu0 0
    %1752 = vmatpush2.bf16.msra.mxu0 0
    %1753 = vmatprep.subr.bf16.mxu0 0
    %1754 = vmatpush2.bf16.msra.mxu0 0
    %1755 = vmatprep.subr.bf16.mxu0 0
    %1756 = vmatpush2.bf16.msra.mxu0 0
    %1757 = vmatprep.subr.bf16.mxu0 0
    %1758 = vmatpush2.bf16.msra.mxu0 0
    %1759 = vmatprep.subr.bf16.mxu0 0
    %1760 = vmatpush2.bf16.msra.mxu0 0
    %1761 = vmatprep.subr.bf16.mxu0 0
    %1762 = vmatpush2.bf16.msra.mxu0 0
    %1763 = vmatprep.subr.bf16.mxu0 0
    %1764 = vmatpush2.bf16.msra.mxu0 0
    %1765 = vmatprep.mubr.bf16.mxu0 0
    %1766 = vmatmul.mubr.bf16.gmra.mxu0 %v1731
    %v1767 = vpop.f32.mrf.mxu0
    %v1768 = vadd.f32 0.0, %v1767
    %v1769 = vpop.f32.mrf.mxu0
    %v1770 = vpop.f32.mrf.mxu0
    %v1771 = vpop.f32.mrf.mxu0
    %1772 = vdwg.mxu0
    %v1773 = vadd.f32 %v1725, %v1768
    %v1774 = vxor.u32 %v1773, 2147483648
    %v1775 = vmul.f32 %v1774, 1.442695
    %v1776 = vpow.pop %v1775
    %v1777 = vadd.f32 %v1776, 1.0
    %v1778 = vrcp.pop %v1777
    %v1779 = vmul.f32 1.0, %v1778
    %v1780 = vtanh.pop %v1773
    %v1781 = vmul.f32 %v1779, %v1718
    %1783 = vrot.lane.b32.xlu0 %v1780, 64
    %v1784 = vpop.permute.xlu0 %1783
    %v1786 = vmul.f32 %v1779, %v1784
    %1788 = vrot.lane.b32.xlu0 %v1786, 32
    %v1789 = vpop.permute.xlu0 %1788
    %v1791 = vadd.f32 %v1781, %v1789
    %v1792 = vtanh.pop %v1791
    %1794 = vrot.lane.b32.xlu0 %v1792, 64
    %v1795 = vpop.permute.xlu0 %1794
    %v1797 = vmul.f32 %v1779, %v1795
    %v1800 = vunpack.c.l.s4 1966171168
    %v1801 = vunpack.c.0.s8 %v1800
    %v1802 = vlaneseq
    %v1803 = vshrl.u32 %v1802, 7
    %v1804 = vsub.s32 %v1801, %v1803
    %v1805 = vrot.slane %v1263, %v1804
    %v1806 = vcombine.high %v1805, %v1805
    %v1808 = vunpack.c.l.s4 1966171168
    %v1809 = vunpack.c.0.s8 %v1808
    %v1810 = vlaneseq
    %v1811 = vshrl.u32 %v1810, 7
    %v1812 = vsub.s32 %v1809, %v1811
    %v1813 = vrot.slane %v1805, %v1812
    %v1815 = vunpack.c.l.s4 1966171168
    %v1816 = vunpack.c.0.s8 %v1815
    %v1817 = vlaneseq
    %v1818 = vshrl.u32 %v1817, 7
    %v1819 = vsub.s32 %v1816, %v1818
    %v1820 = vrot.slane %v1806, %v1819
    %v1825 = vunpack.c.l.s4 1966171168
    %v1826 = vunpack.c.0.s8 %v1825
    %v1827 = vlaneseq
    %v1828 = vshrl.u32 %v1827, 7
    %v1829 = vsub.s32 %v1826, %v1828
    %v1830 = vrot.slane %v1343, %v1829
    %v1831 = vcombine.high %v1830, %v1830
    %v1833 = vunpack.c.l.s4 1966171168
    %v1834 = vunpack.c.0.s8 %v1833
    %v1835 = vlaneseq
    %v1836 = vshrl.u32 %v1835, 7
    %v1837 = vsub.s32 %v1834, %v1836
    %v1838 = vrot.slane %v1830, %v1837
    %v1840 = vunpack.c.l.s4 1966171168
    %v1841 = vunpack.c.0.s8 %v1840
    %v1842 = vlaneseq
    %v1843 = vshrl.u32 %v1842, 7
    %v1844 = vsub.s32 %v1841, %v1843
    %v1845 = vrot.slane %v1831, %v1844
    %v1848 = vunpack.c.l.s4 1966171168
    %v1849 = vunpack.c.0.s8 %v1848
    %v1850 = vlaneseq
    %v1851 = vshrl.u32 %v1850, 7
    %v1852 = vsub.s32 %v1849, %v1851
    %v1853 = vrot.slane %v1424, %v1852
    %v1854 = vcombine.high %v1853, %v1853
    %v1856 = vunpack.c.l.s4 1966171168
    %v1857 = vunpack.c.0.s8 %v1856
    %v1858 = vlaneseq
    %v1859 = vshrl.u32 %v1858, 7
    %v1860 = vsub.s32 %v1857, %v1859
    %v1861 = vrot.slane %v1853, %v1860
    %v1863 = vunpack.c.l.s4 1966171168
    %v1864 = vunpack.c.0.s8 %v1863
    %v1865 = vlaneseq
    %v1866 = vshrl.u32 %v1865, 7
    %v1867 = vsub.s32 %v1864, %v1866
    %v1868 = vrot.slane %v1854, %v1867
    %v1871 = vunpack.c.l.s4 1966171168
    %v1872 = vunpack.c.0.s8 %v1871
    %v1873 = vlaneseq
    %v1874 = vshrl.u32 %v1873, 7
    %v1875 = vsub.s32 %v1872, %v1874
    %v1876 = vrot.slane %v1505, %v1875
    %v1877 = vcombine.high %v1876, %v1876
    %v1879 = vunpack.c.l.s4 1966171168
    %v1880 = vunpack.c.0.s8 %v1879
    %v1881 = vlaneseq
    %v1882 = vshrl.u32 %v1881, 7
    %v1883 = vsub.s32 %v1880, %v1882
    %v1884 = vrot.slane %v1876, %v1883
    %v1886 = vunpack.c.l.s4 1966171168
    %v1887 = vunpack.c.0.s8 %v1886
    %v1888 = vlaneseq
    %v1889 = vshrl.u32 %v1888, 7
    %v1890 = vsub.s32 %v1887, %v1889
    %v1891 = vrot.slane %v1877, %v1890
    %v1894 = vunpack.c.l.s4 1966171168
    %v1895 = vunpack.c.0.s8 %v1894
    %v1896 = vlaneseq
    %v1897 = vshrl.u32 %v1896, 7
    %v1898 = vsub.s32 %v1895, %v1897
    %v1899 = vrot.slane %v1578, %v1898
    %v1900 = vcombine.high %v1899, %v1899
    %v1902 = vunpack.c.l.s4 1966171168
    %v1903 = vunpack.c.0.s8 %v1902
    %v1904 = vlaneseq
    %v1905 = vshrl.u32 %v1904, 7
    %v1906 = vsub.s32 %v1903, %v1905
    %v1907 = vrot.slane %v1899, %v1906
    %v1909 = vunpack.c.l.s4 1966171168
    %v1910 = vunpack.c.0.s8 %v1909
    %v1911 = vlaneseq
    %v1912 = vshrl.u32 %v1911, 7
    %v1913 = vsub.s32 %v1910, %v1912
    %v1914 = vrot.slane %v1900, %v1913
    %v1917 = vunpack.c.l.s4 1966171168
    %v1918 = vunpack.c.0.s8 %v1917
    %v1919 = vlaneseq
    %v1920 = vshrl.u32 %v1919, 7
    %v1921 = vsub.s32 %v1918, %v1920
    %v1922 = vrot.slane %v1651, %v1921
    %v1923 = vcombine.high %v1922, %v1922
    %v1925 = vunpack.c.l.s4 1966171168
    %v1926 = vunpack.c.0.s8 %v1925
    %v1927 = vlaneseq
    %v1928 = vshrl.u32 %v1927, 7
    %v1929 = vsub.s32 %v1926, %v1928
    %v1930 = vrot.slane %v1922, %v1929
    %v1932 = vunpack.c.l.s4 1966171168
    %v1933 = vunpack.c.0.s8 %v1932
    %v1934 = vlaneseq
    %v1935 = vshrl.u32 %v1934, 7
    %v1936 = vsub.s32 %v1933, %v1935
    %v1937 = vrot.slane %v1923, %v1936
    %v1940 = vunpack.c.l.s4 1966171168
    %v1941 = vunpack.c.0.s8 %v1940
    %v1942 = vlaneseq
    %v1943 = vshrl.u32 %v1942, 7
    %v1944 = vsub.s32 %v1941, %v1943
    %v1945 = vrot.slane %v1724, %v1944
    %v1946 = vcombine.high %v1945, %v1945
    %v1948 = vunpack.c.l.s4 1966171168
    %v1949 = vunpack.c.0.s8 %v1948
    %v1950 = vlaneseq
    %v1951 = vshrl.u32 %v1950, 7
    %v1952 = vsub.s32 %v1949, %v1951
    %v1953 = vrot.slane %v1945, %v1952
    %v1955 = vunpack.c.l.s4 1966171168
    %v1956 = vunpack.c.0.s8 %v1955
    %v1957 = vlaneseq
    %v1958 = vshrl.u32 %v1957, 7
    %v1959 = vsub.s32 %v1956, %v1958
    %v1960 = vrot.slane %v1946, %v1959
    %v1963 = vunpack.c.l.s4 1966171168
    %v1964 = vunpack.c.0.s8 %v1963
    %v1965 = vlaneseq
    %v1966 = vshrl.u32 %v1965, 7
    %v1967 = vsub.s32 %v1964, %v1966
    %v1968 = vrot.slane %v1797, %v1967
    %v1969 = vcombine.high %v1968, %v1968
    %v1971 = vunpack.c.l.s4 1966171168
    %v1972 = vunpack.c.0.s8 %v1971
    %v1973 = vlaneseq
    %v1974 = vshrl.u32 %v1973, 7
    %v1975 = vsub.s32 %v1972, %v1974
    %v1976 = vrot.slane %v1968, %v1975
    %v1978 = vunpack.c.l.s4 1966171168
    %v1979 = vunpack.c.0.s8 %v1978
    %v1980 = vlaneseq
    %v1981 = vshrl.u32 %v1980, 7
    %v1982 = vsub.s32 %v1979, %v1981
    %v1983 = vrot.slane %v1969, %v1982
    %v1986 = vlaneseq
    %v1987 = vshrl.u32 %v1986, 7
    %v1988 = vsub.s32 0, %v1987
    %v1989 = vrot.slane %v1838, %v1988
    %v1990 = vlaneseq
    %v1991 = vshrl.u32 %v1990, 7
    %v1992 = vsub.s32 0, %v1991
    %v1993 = vrot.slane %v1845, %v1992
    %v1996 = vlaneseq
    %v1997 = vshrl.u32 %v1996, 7
    %v1998 = vsub.s32 0, %v1997
    %v1999 = vrot.slane %v1861, %v1998
    %v2000 = vlaneseq
    %v2001 = vshrl.u32 %v2000, 7
    %v2002 = vsub.s32 0, %v2001
    %v2003 = vrot.slane %v1868, %v2002
    %v2006 = vlaneseq
    %v2007 = vshrl.u32 %v2006, 7
    %v2008 = vsub.s32 0, %v2007
    %v2009 = vrot.slane %v1884, %v2008
    %v2010 = vlaneseq
    %v2011 = vshrl.u32 %v2010, 7
    %v2012 = vsub.s32 0, %v2011
    %v2013 = vrot.slane %v1891, %v2012
    %v2016 = vlaneseq
    %v2017 = vshrl.u32 %v2016, 7
    %v2018 = vsub.s32 0, %v2017
    %v2019 = vrot.slane %v1907, %v2018
    %v2020 = vlaneseq
    %v2021 = vshrl.u32 %v2020, 7
    %v2022 = vsub.s32 0, %v2021
    %v2023 = vrot.slane %v1914, %v2022
    %v2026 = vlaneseq
    %v2027 = vshrl.u32 %v2026, 7
    %v2028 = vsub.s32 0, %v2027
    %v2029 = vrot.slane %v1930, %v2028
    %v2030 = vlaneseq
    %v2031 = vshrl.u32 %v2030, 7
    %v2032 = vsub.s32 0, %v2031
    %v2033 = vrot.slane %v1937, %v2032
    %v2036 = vlaneseq
    %v2037 = vshrl.u32 %v2036, 7
    %v2038 = vsub.s32 0, %v2037
    %v2039 = vrot.slane %v1953, %v2038
    %v2040 = vlaneseq
    %v2041 = vshrl.u32 %v2040, 7
    %v2042 = vsub.s32 0, %v2041
    %v2043 = vrot.slane %v1960, %v2042
    %v2046 = vlaneseq
    %v2047 = vshrl.u32 %v2046, 7
    %v2048 = vsub.s32 0, %v2047
    %v2049 = vrot.slane %v1976, %v2048
    %v2050 = vlaneseq
    %v2051 = vshrl.u32 %v2050, 7
    %v2052 = vsub.s32 0, %v2051
    %v2053 = vrot.slane %v1983, %v2052
    %v2056 = vsel %vm1064, %v1813, %v1989
    %v2057 = vsel %vm1064, %v1820, %v1993
    %v2058 = vsel %vm1067, %v2056, %v1999
    %v2059 = vsel %vm1067, %v2057, %v2003
    %v2060 = vsel %vm1070, %v2058, %v2009
    %v2061 = vsel %vm1070, %v2059, %v2013
    %v2062 = vsel %vm1073, %v2060, %v2019
    %v2063 = vsel %vm1073, %v2061, %v2023
    %v2064 = vsel %vm1076, %v2062, %v2029
    %v2065 = vsel %vm1076, %v2063, %v2033
    %v2066 = vsel %vm1079, %v2064, %v2039
    %v2067 = vsel %vm1079, %v2065, %v2043
    %v2068 = vsel %vm1082, %v2066, %v2049
    %v2069 = vsel %vm1082, %v2067, %v2053
    %v2070 = vlaneseq
    %v2071 = vshrl.u32 %v2070, 7
    %v2072 = vsub.s32 0, %v2071
    %v2073 = vrot.slane %v1813, %v2072
    %v2074 = vlaneseq
    %v2075 = vshrl.u32 %v2074, 7
    %v2076 = vsub.s32 0, %v2075
    %v2077 = vrot.slane %v1820, %v2076
    %v2080 = vsel %vm1064, %v1976, %v2039
    %v2081 = vsel %vm1064, %v1983, %v2043
    %v2082 = vsel %vm1067, %v2080, %v2029
    %v2083 = vsel %vm1067, %v2081, %v2033
    %v2084 = vsel %vm1070, %v2082, %v2019
    %v2085 = vsel %vm1070, %v2083, %v2023
    %v2086 = vsel %vm1073, %v2084, %v2009
    %v2087 = vsel %vm1073, %v2085, %v2013
    %v2088 = vsel %vm1076, %v2086, %v1999
    %v2089 = vsel %vm1076, %v2087, %v2003
    %v2090 = vsel %vm1079, %v2088, %v1989
    %v2091 = vsel %vm1079, %v2089, %v1993
    %v2092 = vsel %vm1082, %v2090, %v2073
    %v2093 = vsel %vm1082, %v2091, %v2077
    %2096 = vrot.lane.b32.xlu0 %v2068, 32
    %v2097 = vpop.permute.xlu0 %2096
    %2098 = vrot.lane.b32.xlu0 %v2069, 32
    %v2099 = vpop.permute.xlu0 %2098
    %2104 = vrot.lane.b32.xlu0 %v2092, 32
    %v2105 = vpop.permute.xlu0 %2104
    %2106 = vrot.lane.b32.xlu0 %v2093, 32
    %v2107 = vpop.permute.xlu0 %2106
    %v2110 = vsel %vm129, %v2097, %v2105
    %v2111 = vsel %vm129, %v2099, %v2107
    %v2112 = vadd.f32 %v2110, %v108
    %v2113 = vadd.f32 %v2111, %v111
    %v2114 = vsel %vm148, %v2112, 0.0
    %v2115 = vsel %vm148, %v2113, 0.0
    %v2116 = vadd.f32 %v2114, %v2115
    %2117 = vadd.xlane.f32.xlu0 %v2116
    %v2118 = vpop.xlane.xlu0 %2117
    %v2119 = vrcp.pop 64.0
    %v2120 = vmul.f32 %v2118, %v2119
    %v2121 = vsub.f32 %v2112, %v2120
    %v2122 = vsub.f32 %v2113, %v2120
    %v2123 = vmul.f32 %v2121, %v2121
    %v2124 = vmul.f32 %v2122, %v2122
    %v2125 = vsel %vm148, %v2123, 0.0
    %v2126 = vsel %vm148, %v2124, 0.0
    %v2127 = vadd.f32 %v2125, %v2126
    %2128 = vadd.xlane.f32.xlu0 %v2127
    %v2129 = vpop.xlane.xlu0 %2128
    %v2130 = vmul.f32 %v2129, %v2119
    %v2131 = vadd.f32 %v2130, 1e-05
    %v2132 = vrsqrt.pop %v2131
    %v2133 = vmul.f32 %v2121, %v2132
    %v2134 = vmul.f32 %v2122, %v2132
    %v2135 = vld [vmem:[%s1 + $0x158] sm:$0xff]
    %v2136 = vpack.c.bf16 %v2135, %v2135
    %v2137 = vld [vmem:[%s1 + $0x160] sm:$0x1]
    %v2138 = vld [vmem:[%s1 + $0x168] sm:$0xff]
    %v2139 = vpack.c.bf16 %v2138, %v2138
    %v2140 = vld [vmem:[%s1 + $0x170] sm:$0x1]
    %v2141 = vld [vmem:[%s1 + $0x178] sm:$0xff]
    %v2142 = vld [vmem:[%s1 + $0x180] sm:$0xff]
    %v2143 = vld [vmem:[%s1 + $0x188] sm:$0xff]
    %v2144 = vld [vmem:[%s1 + $0x190] sm:$0xff]
    %v2145 = vpack.c.bf16 %v2142, %v2141
    %v2146 = vpack.c.bf16 %v2144, %v2143
    %v2147 = vld [vmem:[%s1 + $0x198] sm:$0x1]
    %v2148 = vld [vmem:[%s1 + $0x1a0] sm:$0xff]
    %v2149 = vld [vmem:[%s1 + $0x1a8] sm:$0xff]
    %v2150 = vld [vmem:[%s1 + $0x1b0] sm:$0xff]
    %v2151 = vld [vmem:[%s1 + $0x1b8] sm:$0xff]
    %v2152 = vpack.c.bf16 %v2149, %v2148
    %v2153 = vpack.c.bf16 %v2151, %v2150
    %v2154 = vld [vmem:[%s1 + $0x1c0] sm:$0xff]
    %v2155 = vpack.c.bf16 %v2154, %v2154
    %v2156 = vld [vmem:[%s1 + $0x1c8] sm:$0x1]
    %v2157 = vld [vmem:[%s1 + $0x1d0] sm:$0xff]
    %v2158 = vld [vmem:[%s1 + $0x1d8] sm:$0xff]
    %v2159 = vld [vmem:[%s1 + $0x1e0] sm:$0xff]
    %v2160 = vld [vmem:[%s1 + $0x1e8] sm:$0xff]
    %v2161 = vpack.c.bf16 %v2158, %v2157
    %v2162 = vpack.c.bf16 %v2160, %v2159
    %v2163 = vld [vmem:[%s1 + $0x1f0] sm:$0x1]
    %v2164 = vld [vmem:[%s3] sm:$0xff]
    %v2165 = vld [vmem:[%s3 + $0x8] sm:$0xff]
    %v2166 = vpack.c.bf16 %v2165, %v2164
    %v2167 = vld [vmem:[%s2] sm:$0x3]
    %v2168 = vpack.c.bf16 %v2167, %v2167
    %v2169 = vlaneseq
    %v2170 = vshrl.u32 %v2169, 7
    %v2171 = vsub.s32 0, %v2170
    %v2172 = vrot.slane %v2137, %v2171
    %vm2173 = vcmask 64512
    %v2175 = vsel %vm2173, %v2168, 0
    %v2178 = vsel %vm1073, %v2136, 0
    %2180 = vmatprep.subr.bf16.mxu0 0
    %2181 = vmatpush1.bf16.msra.mxu0 0
    %2182 = vmatprep.subr.bf16.mxu0 0
    %2183 = vmatpush1.bf16.msra.mxu0 0
    %2184 = vmatprep.subr.bf16.mxu0 0
    %2185 = vmatpush1.bf16.msra.mxu0 0
    %2186 = vmatprep.subr.bf16.mxu0 0
    %2187 = vmatpush1.bf16.msra.mxu0 0
    %2188 = vmatprep.subr.bf16.mxu0 0
    %2189 = vmatpush1.bf16.msra.mxu0 0
    %2190 = vmatprep.subr.bf16.mxu0 0
    %2191 = vmatpush1.bf16.msra.mxu0 0
    %2192 = vmatprep.subr.bf16.mxu0 0
    %2193 = vmatpush1.bf16.msra.mxu0 0
    %2194 = vmatprep.subr.bf16.mxu0 0
    %2195 = vmatpush1.bf16.msra.mxu0 %v2178
    %2196 = vmatprep.subr.bf16.mxu0 0
    %2197 = vmatpush2.bf16.msra.mxu0 0
    %2198 = vmatprep.subr.bf16.mxu0 0
    %2199 = vmatpush2.bf16.msra.mxu0 0
    %2200 = vmatprep.subr.bf16.mxu0 0
    %2201 = vmatpush2.bf16.msra.mxu0 0
    %2202 = vmatprep.subr.bf16.mxu0 0
    %2203 = vmatpush2.bf16.msra.mxu0 0
    %2204 = vmatprep.subr.bf16.mxu0 0
    %2205 = vmatpush2.bf16.msra.mxu0 0
    %2206 = vmatprep.subr.bf16.mxu0 0
    %2207 = vmatpush2.bf16.msra.mxu0 0
    %2208 = vmatprep.subr.bf16.mxu0 0
    %2209 = vmatpush2.bf16.msra.mxu0 0
    %2210 = vmatprep.subr.bf16.mxu0 0
    %2211 = vmatpush2.bf16.msra.mxu0 0
    %2212 = vmatprep.mubr.bf16.mxu0 0
    %2213 = vmatmul.mubr.bf16.gmra.mxu0 %v2175
    %v2214 = vpop.f32.mrf.mxu0
    %v2215 = vadd.f32 %v2172, %v2214
    %v2216 = vpop.f32.mrf.mxu0
    %v2217 = vpop.f32.mrf.mxu0
    %v2218 = vpop.f32.mrf.mxu0
    %2219 = vdwg.mxu0
    %v2220 = vtanh.pop %v2215
    %v2221 = vlaneseq
    %v2222 = vshrl.u32 %v2221, 7
    %v2223 = vsub.s32 0, %v2222
    %v2224 = vrot.slane %v2140, %v2223
    %v2226 = vsel %vm2173, %v2166, 0
    %v2229 = vsel %vm1073, %v2139, 0
    %2231 = vmatprep.subr.bf16.mxu0 0
    %2232 = vmatpush1.bf16.msra.mxu0 0
    %2233 = vmatprep.subr.bf16.mxu0 0
    %2234 = vmatpush1.bf16.msra.mxu0 0
    %2235 = vmatprep.subr.bf16.mxu0 0
    %2236 = vmatpush1.bf16.msra.mxu0 0
    %2237 = vmatprep.subr.bf16.mxu0 0
    %2238 = vmatpush1.bf16.msra.mxu0 0
    %2239 = vmatprep.subr.bf16.mxu0 0
    %2240 = vmatpush1.bf16.msra.mxu0 0
    %2241 = vmatprep.subr.bf16.mxu0 0
    %2242 = vmatpush1.bf16.msra.mxu0 0
    %2243 = vmatprep.subr.bf16.mxu0 0
    %2244 = vmatpush1.bf16.msra.mxu0 0
    %2245 = vmatprep.subr.bf16.mxu0 0
    %2246 = vmatpush1.bf16.msra.mxu0 %v2229
    %2247 = vmatprep.subr.bf16.mxu0 0
    %2248 = vmatpush2.bf16.msra.mxu0 0
    %2249 = vmatprep.subr.bf16.mxu0 0
    %2250 = vmatpush2.bf16.msra.mxu0 0
    %2251 = vmatprep.subr.bf16.mxu0 0
    %2252 = vmatpush2.bf16.msra.mxu0 0
    %2253 = vmatprep.subr.bf16.mxu0 0
    %2254 = vmatpush2.bf16.msra.mxu0 0
    %2255 = vmatprep.subr.bf16.mxu0 0
    %2256 = vmatpush2.bf16.msra.mxu0 0
    %2257 = vmatprep.subr.bf16.mxu0 0
    %2258 = vmatpush2.bf16.msra.mxu0 0
    %2259 = vmatprep.subr.bf16.mxu0 0
    %2260 = vmatpush2.bf16.msra.mxu0 0
    %2261 = vmatprep.subr.bf16.mxu0 0
    %2262 = vmatpush2.bf16.msra.mxu0 0
    %2263 = vmatprep.mubr.bf16.mxu0 0
    %2264 = vmatmul.mubr.bf16.gmra.mxu0 %v2226
    %v2265 = vpop.f32.mrf.mxu0
    %v2266 = vadd.f32 %v2224, %v2265
    %v2267 = vpop.f32.mrf.mxu0
    %v2268 = vpop.f32.mrf.mxu0
    %v2269 = vadd.f32 %v2224, %v2268
    %v2270 = vpop.f32.mrf.mxu0
    %2271 = vdwg.mxu0
    %v2272 = vtanh.pop %v2266
    %v2273 = vtanh.pop %v2269
    %v2274 = vpack.c.bf16 %v2134, %v2133
    %v2275 = vlaneseq
    %v2276 = vshrl.u32 %v2275, 7
    %v2277 = vsub.s32 0, %v2276
    %v2278 = vrot.slane %v2147, %v2277
    %v2280 = vsel %vm148, %v2274, 0
    %2282 = vmatprep.subr.bf16.mxu0 0
    %2283 = vmatpush1.bf16.msra.mxu0 0
    %2284 = vmatprep.subr.bf16.mxu0 0
    %2285 = vmatpush1.bf16.msra.mxu0 0
    %2286 = vmatprep.subr.bf16.mxu0 0
    %2287 = vmatpush1.bf16.msra.mxu0 0
    %2288 = vmatprep.subr.bf16.mxu0 0
    %2289 = vmatpush1.bf16.msra.mxu0 0
    %2290 = vmatprep.subr.bf16.mxu0 0
    %2291 = vmatpush1.bf16.msra.mxu0 0
    %2292 = vmatprep.subr.bf16.mxu0 0
    %2293 = vmatpush1.bf16.msra.mxu0 0
    %2294 = vmatprep.subr.bf16.mxu0 0
    %2295 = vmatpush1.bf16.msra.mxu0 %v2146
    %2296 = vmatprep.subr.bf16.mxu0 0
    %2297 = vmatpush1.bf16.msra.mxu0 %v2145
    %2298 = vmatprep.subr.bf16.mxu0 0
    %2299 = vmatpush2.bf16.msra.mxu0 0
    %2300 = vmatprep.subr.bf16.mxu0 0
    %2301 = vmatpush2.bf16.msra.mxu0 0
    %2302 = vmatprep.subr.bf16.mxu0 0
    %2303 = vmatpush2.bf16.msra.mxu0 0
    %2304 = vmatprep.subr.bf16.mxu0 0
    %2305 = vmatpush2.bf16.msra.mxu0 0
    %2306 = vmatprep.subr.bf16.mxu0 0
    %2307 = vmatpush2.bf16.msra.mxu0 0
    %2308 = vmatprep.subr.bf16.mxu0 0
    %2309 = vmatpush2.bf16.msra.mxu0 0
    %2310 = vmatprep.subr.bf16.mxu0 0
    %2311 = vmatpush2.bf16.msra.mxu0 0
    %2312 = vmatprep.subr.bf16.mxu0 0
    %2313 = vmatpush2.bf16.msra.mxu0 0
    %2314 = vmatprep.mubr.bf16.mxu0 0
    %2315 = vmatmul.mubr.bf16.gmra.mxu0 %v2280
    %v2316 = vpop.f32.mrf.mxu0
    %v2317 = vadd.f32 %v2278, %v2316
    %v2318 = vpop.f32.mrf.mxu0
    %v2319 = vpop.f32.mrf.mxu0
    %v2320 = vadd.f32 %v2278, %v2319
    %v2321 = vpop.f32.mrf.mxu0
    %2322 = vdwg.mxu0
    %v2323 = vpack.c.bf16 %v2320, %v2317
    %v2325 = vsel %vm1073, %v2155, 0
    %2327 = vmatprep.subr.bf16.mxu0 0
    %2328 = vmatpush1.bf16.msra.mxu0 0
    %2329 = vmatprep.subr.bf16.mxu0 0
    %2330 = vmatpush1.bf16.msra.mxu0 0
    %2331 = vmatprep.subr.bf16.mxu0 0
    %2332 = vmatpush1.bf16.msra.mxu0 0
    %2333 = vmatprep.subr.bf16.mxu0 0
    %2334 = vmatpush1.bf16.msra.mxu0 0
    %2335 = vmatprep.subr.bf16.mxu0 0
    %2336 = vmatpush1.bf16.msra.mxu0 0
    %2337 = vmatprep.subr.bf16.mxu0 0
    %2338 = vmatpush1.bf16.msra.mxu0 0
    %2339 = vmatprep.subr.bf16.mxu0 0
    %2340 = vmatpush1.bf16.msra.mxu0 0
    %2341 = vmatprep.subr.bf16.mxu0 0
    %2342 = vmatpush1.bf16.msra.mxu0 %v2325
    %2343 = vmatprep.subr.bf16.mxu0 0
    %2344 = vmatpush2.bf16.msra.mxu0 0
    %2345 = vmatprep.subr.bf16.mxu0 0
    %2346 = vmatpush2.bf16.msra.mxu0 0
    %2347 = vmatprep.subr.bf16.mxu0 0
    %2348 = vmatpush2.bf16.msra.mxu0 0
    %2349 = vmatprep.subr.bf16.mxu0 0
    %2350 = vmatpush2.bf16.msra.mxu0 0
    %2351 = vmatprep.subr.bf16.mxu0 0
    %2352 = vmatpush2.bf16.msra.mxu0 0
    %2353 = vmatprep.subr.bf16.mxu0 0
    %2354 = vmatpush2.bf16.msra.mxu0 0
    %2355 = vmatprep.subr.bf16.mxu0 0
    %2356 = vmatpush2.bf16.msra.mxu0 0
    %2357 = vmatprep.subr.bf16.mxu0 0
    %2358 = vmatpush2.bf16.msra.mxu0 0
    %2359 = vmatprep.mubr.bf16.mxu0 0
    %2360 = vmatmul.mubr.bf16.gmra.mxu0 %v2226
    %v2361 = vpop.f32.mrf.mxu0
    %v2362 = vadd.f32 0.0, %v2361
    %v2363 = vpop.f32.mrf.mxu0
    %v2364 = vpop.f32.mrf.mxu0
    %v2365 = vadd.f32 0.0, %v2364
    %v2366 = vpop.f32.mrf.mxu0
    %2367 = vdwg.mxu0
    %v2369 = vsel %vm148, %v2323, 0
    %2371 = vmatprep.subr.bf16.mxu0 0
    %2372 = vmatpush1.bf16.msra.mxu0 0
    %2373 = vmatprep.subr.bf16.mxu0 0
    %2374 = vmatpush1.bf16.msra.mxu0 0
    %2375 = vmatprep.subr.bf16.mxu0 0
    %2376 = vmatpush1.bf16.msra.mxu0 0
    %2377 = vmatprep.subr.bf16.mxu0 0
    %2378 = vmatpush1.bf16.msra.mxu0 0
    %2379 = vmatprep.subr.bf16.mxu0 0
    %2380 = vmatpush1.bf16.msra.mxu0 0
    %2381 = vmatprep.subr.bf16.mxu0 0
    %2382 = vmatpush1.bf16.msra.mxu0 0
    %2383 = vmatprep.subr.bf16.mxu0 0
    %2384 = vmatpush1.bf16.msra.mxu0 %v2153
    %2385 = vmatprep.subr.bf16.mxu0 0
    %2386 = vmatpush1.bf16.msra.mxu0 %v2152
    %2387 = vmatprep.subr.bf16.mxu0 0
    %2388 = vmatpush2.bf16.msra.mxu0 0
    %2389 = vmatprep.subr.bf16.mxu0 0
    %2390 = vmatpush2.bf16.msra.mxu0 0
    %2391 = vmatprep.subr.bf16.mxu0 0
    %2392 = vmatpush2.bf16.msra.mxu0 0
    %2393 = vmatprep.subr.bf16.mxu0 0
    %2394 = vmatpush2.bf16.msra.mxu0 0
    %2395 = vmatprep.subr.bf16.mxu0 0
    %2396 = vmatpush2.bf16.msra.mxu0 0
    %2397 = vmatprep.subr.bf16.mxu0 0
    %2398 = vmatpush2.bf16.msra.mxu0 0
    %2399 = vmatprep.subr.bf16.mxu0 0
    %2400 = vmatpush2.bf16.msra.mxu0 0
    %2401 = vmatprep.subr.bf16.mxu0 0
    %2402 = vmatpush2.bf16.msra.mxu0 0
    %2403 = vmatprep.mubr.bf16.mxu0 0
    %2404 = vmatmul.mubr.bf16.gmra.mxu0 %v2369
    %v2405 = vpop.f32.mrf.mxu0
    %v2406 = vadd.f32 %v2362, %v2405
    %v2407 = vpop.f32.mrf.mxu0
    %v2408 = vpop.f32.mrf.mxu0
    %v2409 = vadd.f32 %v2365, %v2408
    %v2410 = vpop.f32.mrf.mxu0
    %2411 = vdwg.mxu0
    %v2412 = vlaneseq
    %v2413 = vshrl.u32 %v2412, 7
    %v2414 = vsub.s32 0, %v2413
    %v2415 = vrot.slane %v2156, %v2414
    %v2416 = vadd.f32 %v2406, %v2415
    %v2417 = vadd.f32 %v2409, %v2415
    %v2420 = vunpack.c.l.s4 1966171168
    %v2421 = vunpack.c.0.s8 %v2420
    %v2422 = vlaneseq
    %v2423 = vshrl.u32 %v2422, 7
    %v2424 = vsub.s32 %v2421, %v2423
    %v2425 = vrot.slane %v2220, %v2424
    %v2426 = vcombine.high %v2425, %v2425
    %v2428 = vunpack.c.l.s4 1966171168
    %v2429 = vunpack.c.0.s8 %v2428
    %v2430 = vlaneseq
    %v2431 = vshrl.u32 %v2430, 7
    %v2432 = vsub.s32 %v2429, %v2431
    %v2433 = vrot.slane %v2425, %v2432
    %v2435 = vunpack.c.l.s4 1966171168
    %v2436 = vunpack.c.0.s8 %v2435
    %v2437 = vlaneseq
    %v2438 = vshrl.u32 %v2437, 7
    %v2439 = vsub.s32 %v2436, %v2438
    %v2440 = vrot.slane %v2426, %v2439
    %v2441 = vlaneseq
    %v2442 = vshrl.u32 %v2441, 7
    %v2443 = vsub.s32 0, %v2442
    %v2444 = vrot.slane %v2433, %v2443
    %v2445 = vlaneseq
    %v2446 = vshrl.u32 %v2445, 7
    %v2447 = vsub.s32 0, %v2446
    %v2448 = vrot.slane %v2440, %v2447
    %v2451 = vmul.f32 %v2444, %v2272
    %v2452 = vmul.f32 %v2448, %v2273
    %vm2453 = vcmask 130048
    %v2454 = vsel %vm2453, %v2451, 0.0
    %2455 = vadd.xlane.f32.xlu0 %v2454
    %v2456 = vpop.xlane.xlu0 %2455
    %v2457 = vsel %vm2453, %v2452, 0.0
    %2458 = vadd.xlane.f32.xlu0 %v2457
    %v2459 = vpop.xlane.xlu0 %2458
    %v2460 = vld [vmem:[%s4] sm:$0x3]
    %v2462 = vlaneseq
    %v2463 = vshrl.u32 %v2462, 7
    %v2464 = vsub.s32 0, %v2463
    %v2465 = vrot.slane %v2460, %v2464
    %2467 = vbcast.lane.b32.xlu0 %v2465, 256
    %v2468 = vpop.permute.xlu0 %2467
    %v2469 = vlaneseq
    %v2470 = vshrl.u32 %v2469, 7
    %v2471 = vsub.s32 1, %v2470
    %v2472 = vrot.slane %v2460, %v2471
    %2474 = vbcast.lane.b32.xlu0 %v2472, 256
    %v2475 = vpop.permute.xlu0 %2474
    %v2478 = vadd.f32 %v2456, %v2468
    %v2479 = vadd.f32 %v2459, %v2475
    %2482 = vset.pattern.permute.xlu0 0
    %2483 = vperm.xlu0 %2482, %v2478
    %v2484 = vpop.permute.xlu0 %2483
    %2485 = vset.pattern.permute.xlu0 0
    %2486 = vperm.xlu0 %2485, %v2479
    %v2487 = vpop.permute.xlu0 %2486
    %v2488 = vlaneseq
    %v2489 = vshrl.u32 %v2488, 7
    %v2490 = vsub.s32 %v115, %v2489
    %v2491 = vrot.slane %v2484, %v2490
    %v2492 = vlaneseq
    %v2493 = vshrl.u32 %v2492, 7
    %v2494 = vsub.s32 %v115, %v2493
    %v2495 = vrot.slane %v2487, %v2494
    %v2496 = vsel %vm196, %v2495, %v2491
    %vm2498 = vcmask 58368
    %v2499 = vsel %vm2498, %v2496, -inf
    %2500 = vmax.xlane.f32.xlu0 %v2499
    %v2501 = vpop.xlane.xlu0 %2500
    %v2503 = vlaneseq
    %v2504 = vshrl.u32 %v2503, 7
    %v2505 = vsub.s32 0, %v2504
    %v2506 = vrot.slane %v2501, %v2505
    %v2507 = vlaneseq
    %v2508 = vshrl.u32 %v2507, 7
    %v2509 = vsub.s32 1, %v2508
    %v2510 = vrot.slane %v2501, %v2509
    %v2513 = vsub.f32 %v2478, %v2506
    %v2514 = vsub.f32 %v2479, %v2510
    %v2515 = vmul.f32 %v2513, 1.442695
    %v2516 = vpow.pop %v2515
    %v2517 = vmul.f32 %v2514, 1.442695
    %v2518 = vpow.pop %v2517
    %2521 = vset.pattern.permute.xlu0 0
    %2522 = vperm.xlu0 %2521, %v2516
    %v2523 = vpop.permute.xlu0 %2522
    %2524 = vset.pattern.permute.xlu0 0
    %2525 = vperm.xlu0 %2524, %v2518
    %v2526 = vpop.permute.xlu0 %2525
    %v2527 = vlaneseq
    %v2528 = vshrl.u32 %v2527, 7
    %v2529 = vsub.s32 %v115, %v2528
    %v2530 = vrot.slane %v2523, %v2529
    %v2531 = vlaneseq
    %v2532 = vshrl.u32 %v2531, 7
    %v2533 = vsub.s32 %v115, %v2532
    %v2534 = vrot.slane %v2526, %v2533
    %v2535 = vsel %vm196, %v2534, %v2530
    %v2537 = vsel %vm2498, %v2535, 0.0
    %2538 = vadd.xlane.f32.xlu0 %v2537
    %v2539 = vpop.xlane.xlu0 %2538
    %v2540 = vrcp.pop %v2539
    %v2542 = vlaneseq
    %v2543 = vshrl.u32 %v2542, 7
    %v2544 = vsub.s32 0, %v2543
    %v2545 = vrot.slane %v2540, %v2544
    %v2546 = vlaneseq
    %v2547 = vshrl.u32 %v2546, 7
    %v2548 = vsub.s32 1, %v2547
    %v2549 = vrot.slane %v2540, %v2548
    %v2552 = vmul.f32 %v2516, %v2545
    %v2553 = vmul.f32 %v2518, %v2549
    %2555 = vset.pattern.permute.xlu0 0
    %2556 = vperm.xlu0 %2555, %v2552
    %v2557 = vpop.permute.xlu0 %2556
    %2560 = vset.pattern.permute.xlu0 0
    %2561 = vperm.xlu0 %2560, %v2553
    %v2562 = vpop.permute.xlu0 %2561
    %v2564 = vmul.f32 %v2557, %v2416
    %v2565 = vmul.f32 %v2562, %v2417
    %v2566 = vsel %vm148, %v2564, 0.0
    %v2567 = vrot.slane %v2566, 4
    %v2568 = vadd.f32 %v2566, %v2567
    %v2569 = vrot.slane %v2568, 2
    %v2570 = vadd.f32 %v2568, %v2569
    %v2571 = vrot.slane %v2570, 1
    %v2572 = vadd.f32 %v2570, %v2571
    %v2573 = vsel %vm148, %v2565, 0.0
    %v2574 = vrot.slane %v2573, 4
    %v2575 = vadd.f32 %v2573, %v2574
    %v2576 = vrot.slane %v2575, 2
    %v2577 = vadd.f32 %v2575, %v2576
    %v2578 = vrot.slane %v2577, 1
    %v2579 = vadd.f32 %v2577, %v2578
    %v2580 = vpack.c.bf16 %v2572, %v2572
    %v2581 = vpack.c.bf16 %v2579, %v2579
    %v2582 = vlaneseq
    %v2583 = vshrl.u32 %v2582, 7
    %v2584 = vsub.s32 0, %v2583
    %v2585 = vrot.slane %v2163, %v2584
    %v2588 = vunpack.c.l.b16 %v2580
    %v2589 = vunpack.c.l.b16 %v2581
    %v2590 = vsel %vm196, %v2589, %v2588
    %v2591 = vpack.c.b16 %v2590, %v2590
    %v2593 = vsel %vm148, %v2591, 0
    %2595 = vmatprep.subr.bf16.mxu0 0
    %2596 = vmatpush1.bf16.msra.mxu0 0
    %2597 = vmatprep.subr.bf16.mxu0 0
    %2598 = vmatpush1.bf16.msra.mxu0 0
    %2599 = vmatprep.subr.bf16.mxu0 0
    %2600 = vmatpush1.bf16.msra.mxu0 0
    %2601 = vmatprep.subr.bf16.mxu0 0
    %2602 = vmatpush1.bf16.msra.mxu0 0
    %2603 = vmatprep.subr.bf16.mxu0 0
    %2604 = vmatpush1.bf16.msra.mxu0 0
    %2605 = vmatprep.subr.bf16.mxu0 0
    %2606 = vmatpush1.bf16.msra.mxu0 0
    %2607 = vmatprep.subr.bf16.mxu0 0
    %2608 = vmatpush1.bf16.msra.mxu0 %v2162
    %2609 = vmatprep.subr.bf16.mxu0 0
    %2610 = vmatpush1.bf16.msra.mxu0 %v2161
    %2611 = vmatprep.subr.bf16.mxu0 0
    %2612 = vmatpush2.bf16.msra.mxu0 0
    %2613 = vmatprep.subr.bf16.mxu0 0
    %2614 = vmatpush2.bf16.msra.mxu0 0
    %2615 = vmatprep.subr.bf16.mxu0 0
    %2616 = vmatpush2.bf16.msra.mxu0 0
    %2617 = vmatprep.subr.bf16.mxu0 0
    %2618 = vmatpush2.bf16.msra.mxu0 0
    %2619 = vmatprep.subr.bf16.mxu0 0
    %2620 = vmatpush2.bf16.msra.mxu0 0
    %2621 = vmatprep.subr.bf16.mxu0 0
    %2622 = vmatpush2.bf16.msra.mxu0 0
    %2623 = vmatprep.subr.bf16.mxu0 0
    %2624 = vmatpush2.bf16.msra.mxu0 0
    %2625 = vmatprep.subr.bf16.mxu0 0
    %2626 = vmatpush2.bf16.msra.mxu0 0
    %2627 = vmatprep.mubr.bf16.mxu0 0
    %2628 = vmatmul.mubr.bf16.gmra.mxu0 %v2593
    %v2629 = vpop.f32.mrf.mxu0
    %v2630 = vadd.f32 %v2585, %v2629
    %v2631 = vpop.f32.mrf.mxu0
    %v2632 = vpop.f32.mrf.mxu0
    %v2633 = vpop.f32.mrf.mxu0
    %2634 = vdwg.mxu0
    %vm2635 = vcmask 25600
    %v2636 = vsel %vm2635, %v2630, -inf
    %2637 = vmax.xlane.f32.xlu0 %v2636
    %v2638 = vpop.xlane.xlu0 %2637
    %v2639 = vsub.f32 %v2630, %v2638
    %v2640 = vmul.f32 %v2639, 1.442695
    %v2641 = vpow.pop %v2640
    %v2642 = vsel %vm2635, %v2641, 0.0
    %2643 = vadd.xlane.f32.xlu0 %v2642
    %v2644 = vpop.xlane.xlu0 %2643
    %v2645 = vlog2.pop %v2644
    %v2646 = vmul.f32 %v2645, 0.6931472
    %v2647 = vsub.f32 %v2639, %v2646
    %2648 = vst.msk [vmem:[#allocation2] sm:$0x3] %vm2635, %v2647
    // Predicated region
    $region22: #{forward.1} parent=1 // pred_check
      _
    $region23: #{forward.1} parent=1 // pred_check_branch
      %2650 = sbr.rel (0) target = $region25
    $region24: #{forward.1} parent=1 // pred_region
      %s2652 = ssub.s32 32, 32
      %2653 = vsyncadd [#allocation3], %s2652
      %s2655 = sshll.u32 [#allocation2], 4
      %s2656 = int_to_ptr.vmem [resolvable:$true] %s2655
      %2658 = dma.vmem_to_hbm [thread:$0]  %s2656, 32, %s5, [#allocation3]
    $region25: #{forward.1} parent=1 // pred_fallthru
      _
    // Predicated region
    $region26: #{forward.1} parent=1 // pred_check
      _
    $region27: #{forward.1} parent=1 // pred_check_branch
      %2660 = sbr.rel (0) target = $region29
    $region28: #{forward.1} parent=1 // pred_region
      %2661 = dma.done [#allocation3], 32
    $region29: #{forward.1} parent=1 // pred_fallthru
      _
    %2662 = vsyncpa [#allocation3], 1

</llo_original>
